<compile_context>
chip_gen: v7x
topology: tpu7x:2x2x1
jax: 0.10.0
libtpu: 0.0.40
codegen_flags: <defaults>
</compile_context>

<pallas_src>
import functools

import jax
import jax.numpy as jnp
from jax.experimental import pallas as pl
from jax.experimental.pallas import tpu as pltpu


def _round_up(x, m):
    return ((x + m - 1) // m) * m


# ---------------------------------------------------------------------------
# Fused ConvLSTM-cell kernel
# ---------------------------------------------------------------------------
def _convlstm_kernel(xh_ref, c_ref, w_ref, b_ref, m_ref,
                     hn_ref, cn_ref, buf_ref,
                     *, K, P, H, W, Ct, Ch, M):
    HW = H * W
    C4 = 4 * Ch

    # Stage cat([x, h], channel-last) into a zero-margined f32 VMEM buffer.
    # Only the 2*M halo rows are zeroed (interior is overwritten right after);
    # zeroing is unconditional: with dimension_semantics=("parallel",) each
    # TensorCore owns a private scratch whose margins must be initialized.
    margin = jnp.zeros((M, Ct), dtype=buf_ref.dtype)
    buf_ref[0:M, :] = margin
    buf_ref[M + HW:M + HW + M, :] = margin
    buf_ref[M:M + HW, :] = xh_ref[0].astype(buf_ref.dtype)

    masks = m_ref[...]                                      # (HW, K) f32

    # KxK "same" conv = one accumulating MXU matmul per tap over a shifted row
    # view of the staged buffer.  Accumulation is value-level (kept in vregs,
    # f32) seeded with the bias; the horizontal halo mask is applied once per
    # tap AFTER the matmul (skipped for the always-valid centre column); the
    # vertical halo is provided by the zero margin rows.
    acc = jnp.broadcast_to(b_ref[...], (HW, C4))            # f32
    for kh in range(K):
        for kw in range(K):
            t = kh * K + kw
            shift = (kh - P) * W + (kw - P)
            v = buf_ref[M + shift:M + shift + HW, :]        # (HW, Ct) f32
            d = jnp.dot(v, w_ref[t].astype(jnp.float32),
                        preferred_element_type=jnp.float32)
            if kw == P:
                acc = acc + d
            else:
                acc = acc + d * masks[:, kw:kw + 1]

    # Gates + cell update, all f32 on VMEM/vreg-resident data.
    def _sig(z):                                            # sigmoid on the EUP
        return 0.5 * (jnp.tanh(0.5 * z) + 1.0)

    i_g = _sig(acc[:, 0 * Ch:1 * Ch])
    f_g = _sig(acc[:, 1 * Ch:2 * Ch])
    o_g = _sig(acc[:, 2 * Ch:3 * Ch])
    g_g = jnp.tanh(acc[:, 3 * Ch:4 * Ch])

    c_cur = c_ref[0].astype(jnp.float32)
    c_next = f_g * c_cur + i_g * g_g
    h_next = o_g * jnp.tanh(c_next)

    hn_ref[0] = h_next.astype(hn_ref.dtype)
    cn_ref[0] = c_next.astype(cn_ref.dtype)


# ---------------------------------------------------------------------------
# Wrapper: ConvLSTMCell.forward
# ---------------------------------------------------------------------------
def conv_lstm_cell(x, h_cur, c_cur, weight, bias):
    """Fused ConvLSTMCell forward.

    x:      (N, H, W, Cin)          NHWC
    h_cur:  (N, H, W, Ch)
    c_cur:  (N, H, W, Ch)
    weight: (4*Ch, Cin+Ch, K, K)    PyTorch Conv2d layout
    bias:   (4*Ch,)
    returns (h_next, c_next), each (N, H, W, Ch)
    """
    N, H, W, Cin = x.shape
    Ch = h_cur.shape[-1]
    C4, Ct, K, K2 = weight.shape
    assert C4 == 4 * Ch and Ct == Cin + Ch and K == K2
    P = K // 2
    HW = H * W
    M = _round_up(P * W + P, 8)       # zero-margin rows around the staged input

    # torch.cat([x, h], dim=1) folded into one wrapper-side concat; activations
    # go over HBM as bf16 (halved DMA).  c keeps the caller's dtype (only used
    # in the f32 cell update).
    xh = jnp.concatenate(
        [x.reshape(N, HW, Cin).astype(jnp.bfloat16),
         h_cur.reshape(N, HW, Ch).astype(jnp.bfloat16)], axis=-1)  # (N, HW, Ct)
    c_f = c_cur.reshape(N, HW, Ch)

    # (Cout, Cin+Ch, K, K) -> (K*K, Cin+Ch, Cout) per-tap matmul operands, bf16.
    w_taps = jnp.transpose(weight, (2, 3, 1, 0)).reshape(K * K, Ct, C4)
    w_taps = w_taps.astype(jnp.bfloat16)
    b2 = bias.reshape(1, C4).astype(jnp.float32)

    # Per-tap column-validity masks for the horizontal conv halo (tiny, f32).
    w_coord = jnp.arange(HW, dtype=jnp.int32) % W
    col_mask = jnp.stack(
        [((w_coord + (kw - P) >= 0) & (w_coord + (kw - P) < W))
         .astype(jnp.float32) for kw in range(K)], axis=-1)         # (HW, K)

    kernel = functools.partial(_convlstm_kernel, K=K, P=P, H=H, W=W,
                               Ct=Ct, Ch=Ch, M=M)

    h_next, c_next = pl.pallas_call(
        kernel,
        out_shape=(jax.ShapeDtypeStruct((N, HW, Ch), h_cur.dtype),
                   jax.ShapeDtypeStruct((N, HW, Ch), c_cur.dtype)),
        grid=(N,),
        in_specs=[
            pl.BlockSpec((1, HW, Ct), lambda n: (n, 0, 0)),         # cat(x, h)
            pl.BlockSpec((1, HW, Ch), lambda n: (n, 0, 0)),         # c_cur
            pl.BlockSpec((K * K, Ct, C4), lambda n: (0, 0, 0)),     # weight taps
            pl.BlockSpec((1, C4), lambda n: (0, 0)),                # bias
            pl.BlockSpec((HW, K), lambda n: (0, 0)),                # column masks
        ],
        out_specs=(
            pl.BlockSpec((1, HW, Ch), lambda n: (n, 0, 0)),         # h_next
            pl.BlockSpec((1, HW, Ch), lambda n: (n, 0, 0)),         # c_next
        ),
        scratch_shapes=[
            pltpu.VMEM((HW + 2 * M, Ct), jnp.float32),              # staged cat(x,h)
        ],
        compiler_params=pltpu.CompilerParams(
            dimension_semantics=("parallel",)),
    )(xh, c_f, w_taps, b2, col_mask)

    return (h_next.reshape(N, H, W, Ch), c_next.reshape(N, H, W, Ch))


# ---------------------------------------------------------------------------
# Plain-JAX reference (mirrors the PyTorch forward, NHWC)
# ---------------------------------------------------------------------------
def _reference(x, h_cur, c_cur, weight, bias):
    Ch = h_cur.shape[-1]
    K = weight.shape[-1]
    P = K // 2
    comb = jnp.concatenate([x, h_cur], axis=-1)
    w_hwio = jnp.transpose(weight, (2, 3, 1, 0))
    z = jax.lax.conv_general_dilated(
        comb, w_hwio, window_strides=(1, 1), padding=((P, P), (P, P)),
        dimension_numbers=("NHWC", "HWIO", "NHWC")) + bias
    i = jax.nn.sigmoid(z[..., 0 * Ch:1 * Ch])
    f = jax.nn.sigmoid(z[..., 1 * Ch:2 * Ch])
    o = jax.nn.sigmoid(z[..., 2 * Ch:3 * Ch])
    g = jnp.tanh(z[..., 3 * Ch:4 * Ch])
    c_next = f * c_cur + i * g
    h_next = o * jnp.tanh(c_next)
    return h_next, c_next


if __name__ == "__main__":
    key = jax.random.PRNGKey(0)
    N, H, W = 2, 16, 16            # batch, spatial
    Cin, Ch, K = 4, 32, 3          # input channels, hidden channels, kernel size

    kx, kh, kc, kw_, kb = jax.random.split(key, 5)
    x = jax.random.normal(kx, (N, H, W, Cin), jnp.float32)
    h0 = jax.random.normal(kh, (N, H, W, Ch), jnp.float32)
    c0 = jax.random.normal(kc, (N, H, W, Ch), jnp.float32)
    weight = 0.05 * jax.random.normal(kw_, (4 * Ch, Cin + Ch, K, K), jnp.float32)
    bias = 0.05 * jax.random.normal(kb, (4 * Ch,), jnp.float32)

    fwd = jax.jit(conv_lstm_cell)
    h1, c1 = fwd(x, h0, c0, weight, bias)
    h1 = jax.block_until_ready(h1)
    c1 = jax.block_until_ready(c1)

    assert h1.shape == (N, H, W, Ch) and c1.shape == (N, H, W, Ch)
    assert h1.dtype == jnp.float32 and c1.dtype == jnp.float32

    # Numerical sanity check vs plain XLA (bf16-class matmul operands).
    h_exp, c_exp = _reference(x, h0, c0, weight, bias)
    assert jnp.allclose(h1, h_exp, atol=5e-2), float(jnp.max(jnp.abs(h1 - h_exp)))
    assert jnp.allclose(c1, c_exp, atol=5e-2), float(jnp.max(jnp.abs(c1 - c_exp)))

    print("KERNEL_OK")
</pallas_src>

<mosaic_0001>
module attributes {stable_mosaic.version = 11 : i64} {
  func.func @_convlstm_kernel(%arg0: i32, %arg1: memref<1x256x36xbf16, #tpu.memory_space<vmem>>, %arg2: memref<1x256x32xf32, #tpu.memory_space<vmem>>, %arg3: memref<9x36x128xbf16, #tpu.memory_space<vmem>>, %arg4: memref<1x128xf32, #tpu.memory_space<vmem>>, %arg5: memref<256x3xf32, #tpu.memory_space<vmem>>, %arg6: memref<1x256x32xf32, #tpu.memory_space<vmem>>, %arg7: memref<1x256x32xf32, #tpu.memory_space<vmem>>, %arg8: memref<304x36xf32, #tpu.memory_space<vmem>>) attributes {dimension_semantics = [#tpu.dimension_semantics<parallel>], iteration_bounds = array<i64: 2>, scalar_prefetch = 0 : i64, scratch_operands = 1 : i64, tpu.core_type = #tpu.core_type<tc>, window_params = [{transform_indices = @transform_0, window_bounds = array<i64: 1, 256, 36>}, {transform_indices = @transform_1, window_bounds = array<i64: 1, 256, 32>}, {pipeline_mode = #tpu.pipeline_mode<synchronous>, transform_indices = @transform_2, window_bounds = array<i64: 9, 36, 128>}, {pipeline_mode = #tpu.pipeline_mode<synchronous>, transform_indices = @transform_3, window_bounds = array<i64: 1, 128>}, {pipeline_mode = #tpu.pipeline_mode<synchronous>, transform_indices = @transform_4, window_bounds = array<i64: 256, 3>}, {transform_indices = @transform_5, window_bounds = array<i64: 1, 256, 32>}, {transform_indices = @transform_6, window_bounds = array<i64: 1, 256, 32>}]} {
    %cst = arith.constant 0.000000e+00 : f32
    %0 = vector.broadcast %cst : f32 to vector<24x36xf32>
    %c0 = arith.constant 0 : index
    %c0_0 = arith.constant 0 : index
    %1 = vector.load %arg8[%c0, %c0_0] : memref<304x36xf32, #tpu.memory_space<vmem>>, vector<24x36xf32>
    tpu.vector_store %arg8[%c0, %c0_0], %0 {strides = array<i32>} : memref<304x36xf32, #tpu.memory_space<vmem>>, vector<24x36xf32>,
    %c280 = arith.constant 280 : index
    %c0_1 = arith.constant 0 : index
    %2 = vector.load %arg8[%c280, %c0_1] : memref<304x36xf32, #tpu.memory_space<vmem>>, vector<24x36xf32>
    tpu.vector_store %arg8[%c280, %c0_1], %0 {strides = array<i32>} : memref<304x36xf32, #tpu.memory_space<vmem>>, vector<24x36xf32>,
    %c0_2 = arith.constant 0 : index
    %c0_3 = arith.constant 0 : index
    %c0_4 = arith.constant 0 : index
    %3 = vector.load %arg1[%c0_2, %c0_3, %c0_4] : memref<1x256x36xbf16, #tpu.memory_space<vmem>>, vector<1x256x36xbf16>
    %4 = vector.shape_cast %3 : vector<1x256x36xbf16> to vector<256x36xbf16>
    %5 = arith.extf %4 : vector<256x36xbf16> to vector<256x36xf32>
    %c24 = arith.constant 24 : index
    %c0_5 = arith.constant 0 : index
    %6 = vector.load %arg8[%c24, %c0_5] : memref<304x36xf32, #tpu.memory_space<vmem>>, vector<256x36xf32>
    tpu.vector_store %arg8[%c24, %c0_5], %5 {strides = array<i32>} : memref<304x36xf32, #tpu.memory_space<vmem>>, vector<256x36xf32>,
    %c0_6 = arith.constant 0 : index
    %c0_7 = arith.constant 0 : index
    %7 = vector.load %arg5[%c0_6, %c0_7] : memref<256x3xf32, #tpu.memory_space<vmem>>, vector<256x3xf32>
    %c0_8 = arith.constant 0 : index
    %c0_9 = arith.constant 0 : index
    %8 = vector.load %arg4[%c0_8, %c0_9] : memref<1x128xf32, #tpu.memory_space<vmem>>, vector<1x128xf32>
    %9 = vector.shape_cast %8 : vector<1x128xf32> to vector<1x128xf32>
    %10 = vector.broadcast %9 : vector<1x128xf32> to vector<256x128xf32>
    %c7 = arith.constant 7 : index
    %c0_10 = arith.constant 0 : index
    %11 = vector.load %arg8[%c7, %c0_10] : memref<304x36xf32, #tpu.memory_space<vmem>>, vector<256x36xf32>
    %c0_11 = arith.constant 0 : index
    %c0_12 = arith.constant 0 : index
    %c0_13 = arith.constant 0 : index
    %12 = vector.load %arg3[%c0_11, %c0_12, %c0_13] : memref<9x36x128xbf16, #tpu.memory_space<vmem>>, vector<1x36x128xbf16>
    %13 = vector.shape_cast %12 : vector<1x36x128xbf16> to vector<36x128xbf16>
    %14 = arith.extf %13 : vector<36x128xbf16> to vector<36x128xf32>
    %cst_14 = arith.constant dense<0.000000e+00> : vector<256x128xf32>
    %15 = tpu.matmul %11, %14, %cst_14 {dimension_numbers = #tpu.dot_dimension_numbers<[1], [0], [0], [1], [0, 0, 1, 1], [], []>} : vector<256x36xf32>, vector<36x128xf32>, vector<256x128xf32> -> vector<256x128xf32>
    %16 = vector.extract_strided_slice %7 {offsets = [0, 0], sizes = [256, 1], strides = [1, 1]} : vector<256x3xf32> to vector<256x1xf32>
    %17 = vector.broadcast %16 : vector<256x1xf32> to vector<256x128xf32>
    %18 = arith.mulf %15, %17 : vector<256x128xf32>
    %19 = arith.addf %10, %18 : vector<256x128xf32>
    %c8 = arith.constant 8 : index
    %c0_15 = arith.constant 0 : index
    %20 = vector.load %arg8[%c8, %c0_15] : memref<304x36xf32, #tpu.memory_space<vmem>>, vector<256x36xf32>
    %c1 = arith.constant 1 : index
    %c0_16 = arith.constant 0 : index
    %c0_17 = arith.constant 0 : index
    %21 = vector.load %arg3[%c1, %c0_16, %c0_17] : memref<9x36x128xbf16, #tpu.memory_space<vmem>>, vector<1x36x128xbf16>
    %22 = vector.shape_cast %21 : vector<1x36x128xbf16> to vector<36x128xbf16>
    %23 = arith.extf %22 : vector<36x128xbf16> to vector<36x128xf32>
    %cst_18 = arith.constant dense<0.000000e+00> : vector<256x128xf32>
    %24 = tpu.matmul %20, %23, %cst_18 {dimension_numbers = #tpu.dot_dimension_numbers<[1], [0], [0], [1], [0, 0, 1, 1], [], []>} : vector<256x36xf32>, vector<36x128xf32>, vector<256x128xf32> -> vector<256x128xf32>
    %25 = arith.addf %19, %24 : vector<256x128xf32>
    %c9 = arith.constant 9 : index
    %c0_19 = arith.constant 0 : index
    %26 = vector.load %arg8[%c9, %c0_19] : memref<304x36xf32, #tpu.memory_space<vmem>>, vector<256x36xf32>
    %c2 = arith.constant 2 : index
    %c0_20 = arith.constant 0 : index
    %c0_21 = arith.constant 0 : index
    %27 = vector.load %arg3[%c2, %c0_20, %c0_21] : memref<9x36x128xbf16, #tpu.memory_space<vmem>>, vector<1x36x128xbf16>
    %28 = vector.shape_cast %27 : vector<1x36x128xbf16> to vector<36x128xbf16>
    %29 = arith.extf %28 : vector<36x128xbf16> to vector<36x128xf32>
    %cst_22 = arith.constant dense<0.000000e+00> : vector<256x128xf32>
    %30 = tpu.matmul %26, %29, %cst_22 {dimension_numbers = #tpu.dot_dimension_numbers<[1], [0], [0], [1], [0, 0, 1, 1], [], []>} : vector<256x36xf32>, vector<36x128xf32>, vector<256x128xf32> -> vector<256x128xf32>
    %31 = vector.extract_strided_slice %7 {offsets = [0, 2], sizes = [256, 1], strides = [1, 1]} : vector<256x3xf32> to vector<256x1xf32>
    %32 = vector.broadcast %31 : vector<256x1xf32> to vector<256x128xf32>
    %33 = arith.mulf %30, %32 : vector<256x128xf32>
    %34 = arith.addf %25, %33 : vector<256x128xf32>
    %c23 = arith.constant 23 : index
    %c0_23 = arith.constant 0 : index
    %35 = vector.load %arg8[%c23, %c0_23] : memref<304x36xf32, #tpu.memory_space<vmem>>, vector<256x36xf32>
    %c3 = arith.constant 3 : index
    %c0_24 = arith.constant 0 : index
    %c0_25 = arith.constant 0 : index
    %36 = vector.load %arg3[%c3, %c0_24, %c0_25] : memref<9x36x128xbf16, #tpu.memory_space<vmem>>, vector<1x36x128xbf16>
    %37 = vector.shape_cast %36 : vector<1x36x128xbf16> to vector<36x128xbf16>
    %38 = arith.extf %37 : vector<36x128xbf16> to vector<36x128xf32>
    %cst_26 = arith.constant dense<0.000000e+00> : vector<256x128xf32>
    %39 = tpu.matmul %35, %38, %cst_26 {dimension_numbers = #tpu.dot_dimension_numbers<[1], [0], [0], [1], [0, 0, 1, 1], [], []>} : vector<256x36xf32>, vector<36x128xf32>, vector<256x128xf32> -> vector<256x128xf32>
    %40 = vector.extract_strided_slice %7 {offsets = [0, 0], sizes = [256, 1], strides = [1, 1]} : vector<256x3xf32> to vector<256x1xf32>
    %41 = vector.broadcast %40 : vector<256x1xf32> to vector<256x128xf32>
    %42 = arith.mulf %39, %41 : vector<256x128xf32>
    %43 = arith.addf %34, %42 : vector<256x128xf32>
    %c24_27 = arith.constant 24 : index
    %c0_28 = arith.constant 0 : index
    %44 = vector.load %arg8[%c24_27, %c0_28] : memref<304x36xf32, #tpu.memory_space<vmem>>, vector<256x36xf32>
    %c4 = arith.constant 4 : index
    %c0_29 = arith.constant 0 : index
    %c0_30 = arith.constant 0 : index
    %45 = vector.load %arg3[%c4, %c0_29, %c0_30] : memref<9x36x128xbf16, #tpu.memory_space<vmem>>, vector<1x36x128xbf16>
    %46 = vector.shape_cast %45 : vector<1x36x128xbf16> to vector<36x128xbf16>
    %47 = arith.extf %46 : vector<36x128xbf16> to vector<36x128xf32>
    %cst_31 = arith.constant dense<0.000000e+00> : vector<256x128xf32>
    %48 = tpu.matmul %44, %47, %cst_31 {dimension_numbers = #tpu.dot_dimension_numbers<[1], [0], [0], [1], [0, 0, 1, 1], [], []>} : vector<256x36xf32>, vector<36x128xf32>, vector<256x128xf32> -> vector<256x128xf32>
    %49 = arith.addf %43, %48 : vector<256x128xf32>
    %c25 = arith.constant 25 : index
    %c0_32 = arith.constant 0 : index
    %50 = vector.load %arg8[%c25, %c0_32] : memref<304x36xf32, #tpu.memory_space<vmem>>, vector<256x36xf32>
    %c5 = arith.constant 5 : index
    %c0_33 = arith.constant 0 : index
    %c0_34 = arith.constant 0 : index
    %51 = vector.load %arg3[%c5, %c0_33, %c0_34] : memref<9x36x128xbf16, #tpu.memory_space<vmem>>, vector<1x36x128xbf16>
    %52 = vector.shape_cast %51 : vector<1x36x128xbf16> to vector<36x128xbf16>
    %53 = arith.extf %52 : vector<36x128xbf16> to vector<36x128xf32>
    %cst_35 = arith.constant dense<0.000000e+00> : vector<256x128xf32>
    %54 = tpu.matmul %50, %53, %cst_35 {dimension_numbers = #tpu.dot_dimension_numbers<[1], [0], [0], [1], [0, 0, 1, 1], [], []>} : vector<256x36xf32>, vector<36x128xf32>, vector<256x128xf32> -> vector<256x128xf32>
    %55 = vector.extract_strided_slice %7 {offsets = [0, 2], sizes = [256, 1], strides = [1, 1]} : vector<256x3xf32> to vector<256x1xf32>
    %56 = vector.broadcast %55 : vector<256x1xf32> to vector<256x128xf32>
    %57 = arith.mulf %54, %56 : vector<256x128xf32>
    %58 = arith.addf %49, %57 : vector<256x128xf32>
    %c39 = arith.constant 39 : index
    %c0_36 = arith.constant 0 : index
    %59 = vector.load %arg8[%c39, %c0_36] : memref<304x36xf32, #tpu.memory_space<vmem>>, vector<256x36xf32>
    %c6 = arith.constant 6 : index
    %c0_37 = arith.constant 0 : index
    %c0_38 = arith.constant 0 : index
    %60 = vector.load %arg3[%c6, %c0_37, %c0_38] : memref<9x36x128xbf16, #tpu.memory_space<vmem>>, vector<1x36x128xbf16>
    %61 = vector.shape_cast %60 : vector<1x36x128xbf16> to vector<36x128xbf16>
    %62 = arith.extf %61 : vector<36x128xbf16> to vector<36x128xf32>
    %cst_39 = arith.constant dense<0.000000e+00> : vector<256x128xf32>
    %63 = tpu.matmul %59, %62, %cst_39 {dimension_numbers = #tpu.dot_dimension_numbers<[1], [0], [0], [1], [0, 0, 1, 1], [], []>} : vector<256x36xf32>, vector<36x128xf32>, vector<256x128xf32> -> vector<256x128xf32>
    %64 = vector.extract_strided_slice %7 {offsets = [0, 0], sizes = [256, 1], strides = [1, 1]} : vector<256x3xf32> to vector<256x1xf32>
    %65 = vector.broadcast %64 : vector<256x1xf32> to vector<256x128xf32>
    %66 = arith.mulf %63, %65 : vector<256x128xf32>
    %67 = arith.addf %58, %66 : vector<256x128xf32>
    %c40 = arith.constant 40 : index
    %c0_40 = arith.constant 0 : index
    %68 = vector.load %arg8[%c40, %c0_40] : memref<304x36xf32, #tpu.memory_space<vmem>>, vector<256x36xf32>
    %c7_41 = arith.constant 7 : index
    %c0_42 = arith.constant 0 : index
    %c0_43 = arith.constant 0 : index
    %69 = vector.load %arg3[%c7_41, %c0_42, %c0_43] : memref<9x36x128xbf16, #tpu.memory_space<vmem>>, vector<1x36x128xbf16>
    %70 = vector.shape_cast %69 : vector<1x36x128xbf16> to vector<36x128xbf16>
    %71 = arith.extf %70 : vector<36x128xbf16> to vector<36x128xf32>
    %cst_44 = arith.constant dense<0.000000e+00> : vector<256x128xf32>
    %72 = tpu.matmul %68, %71, %cst_44 {dimension_numbers = #tpu.dot_dimension_numbers<[1], [0], [0], [1], [0, 0, 1, 1], [], []>} : vector<256x36xf32>, vector<36x128xf32>, vector<256x128xf32> -> vector<256x128xf32>
    %73 = arith.addf %67, %72 : vector<256x128xf32>
    %c41 = arith.constant 41 : index
    %c0_45 = arith.constant 0 : index
    %74 = vector.load %arg8[%c41, %c0_45] : memref<304x36xf32, #tpu.memory_space<vmem>>, vector<256x36xf32>
    %c8_46 = arith.constant 8 : index
    %c0_47 = arith.constant 0 : index
    %c0_48 = arith.constant 0 : index
    %75 = vector.load %arg3[%c8_46, %c0_47, %c0_48] : memref<9x36x128xbf16, #tpu.memory_space<vmem>>, vector<1x36x128xbf16>
    %76 = vector.shape_cast %75 : vector<1x36x128xbf16> to vector<36x128xbf16>
    %77 = arith.extf %76 : vector<36x128xbf16> to vector<36x128xf32>
    %cst_49 = arith.constant dense<0.000000e+00> : vector<256x128xf32>
    %78 = tpu.matmul %74, %77, %cst_49 {dimension_numbers = #tpu.dot_dimension_numbers<[1], [0], [0], [1], [0, 0, 1, 1], [], []>} : vector<256x36xf32>, vector<36x128xf32>, vector<256x128xf32> -> vector<256x128xf32>
    %79 = vector.extract_strided_slice %7 {offsets = [0, 2], sizes = [256, 1], strides = [1, 1]} : vector<256x3xf32> to vector<256x1xf32>
    %80 = vector.broadcast %79 : vector<256x1xf32> to vector<256x128xf32>
    %81 = arith.mulf %78, %80 : vector<256x128xf32>
    %82 = arith.addf %73, %81 : vector<256x128xf32>
    %83 = vector.extract_strided_slice %82 {offsets = [0, 0], sizes = [256, 32], strides = [1, 1]} : vector<256x128xf32> to vector<256x32xf32>
    %cst_50 = arith.constant 5.000000e-01 : f32
    %84 = vector.broadcast %cst_50 : f32 to vector<256x32xf32>
    %85 = arith.mulf %84, %83 : vector<256x32xf32>
    %86 = math.tanh %85 : vector<256x32xf32>
    %cst_51 = arith.constant 1.000000e+00 : f32
    %87 = vector.broadcast %cst_51 : f32 to vector<256x32xf32>
    %88 = arith.addf %86, %87 : vector<256x32xf32>
    %cst_52 = arith.constant 5.000000e-01 : f32
    %89 = vector.broadcast %cst_52 : f32 to vector<256x32xf32>
    %90 = arith.mulf %89, %88 : vector<256x32xf32>
    %91 = vector.extract_strided_slice %82 {offsets = [0, 32], sizes = [256, 32], strides = [1, 1]} : vector<256x128xf32> to vector<256x32xf32>
    %cst_53 = arith.constant 5.000000e-01 : f32
    %92 = vector.broadcast %cst_53 : f32 to vector<256x32xf32>
    %93 = arith.mulf %92, %91 : vector<256x32xf32>
    %94 = math.tanh %93 : vector<256x32xf32>
    %cst_54 = arith.constant 1.000000e+00 : f32
    %95 = vector.broadcast %cst_54 : f32 to vector<256x32xf32>
    %96 = arith.addf %94, %95 : vector<256x32xf32>
    %cst_55 = arith.constant 5.000000e-01 : f32
    %97 = vector.broadcast %cst_55 : f32 to vector<256x32xf32>
    %98 = arith.mulf %97, %96 : vector<256x32xf32>
    %99 = vector.extract_strided_slice %82 {offsets = [0, 64], sizes = [256, 32], strides = [1, 1]} : vector<256x128xf32> to vector<256x32xf32>
    %cst_56 = arith.constant 5.000000e-01 : f32
    %100 = vector.broadcast %cst_56 : f32 to vector<256x32xf32>
    %101 = arith.mulf %100, %99 : vector<256x32xf32>
    %102 = math.tanh %101 : vector<256x32xf32>
    %cst_57 = arith.constant 1.000000e+00 : f32
    %103 = vector.broadcast %cst_57 : f32 to vector<256x32xf32>
    %104 = arith.addf %102, %103 : vector<256x32xf32>
    %cst_58 = arith.constant 5.000000e-01 : f32
    %105 = vector.broadcast %cst_58 : f32 to vector<256x32xf32>
    %106 = arith.mulf %105, %104 : vector<256x32xf32>
    %107 = vector.extract_strided_slice %82 {offsets = [0, 96], sizes = [256, 32], strides = [1, 1]} : vector<256x128xf32> to vector<256x32xf32>
    %108 = math.tanh %107 : vector<256x32xf32>
    %c0_59 = arith.constant 0 : index
    %c0_60 = arith.constant 0 : index
    %c0_61 = arith.constant 0 : index
    %109 = vector.load %arg2[%c0_59, %c0_60, %c0_61] : memref<1x256x32xf32, #tpu.memory_space<vmem>>, vector<1x256x32xf32>
    %110 = vector.shape_cast %109 : vector<1x256x32xf32> to vector<256x32xf32>
    %111 = arith.mulf %98, %110 : vector<256x32xf32>
    %112 = arith.mulf %90, %108 : vector<256x32xf32>
    %113 = arith.addf %111, %112 : vector<256x32xf32>
    %114 = math.tanh %113 : vector<256x32xf32>
    %115 = arith.mulf %106, %114 : vector<256x32xf32>
    %c0_62 = arith.constant 0 : index
    %c0_63 = arith.constant 0 : index
    %c0_64 = arith.constant 0 : index
    %116 = vector.load %arg6[%c0_62, %c0_63, %c0_64] : memref<1x256x32xf32, #tpu.memory_space<vmem>>, vector<1x256x32xf32>
    %117 = vector.shape_cast %116 : vector<1x256x32xf32> to vector<256x32xf32>
    %118 = vector.shape_cast %115 : vector<256x32xf32> to vector<1x256x32xf32>
    tpu.vector_store %arg6[%c0_62, %c0_63, %c0_64], %118 {strides = array<i32>} : memref<1x256x32xf32, #tpu.memory_space<vmem>>, vector<1x256x32xf32>,
    %c0_65 = arith.constant 0 : index
    %c0_66 = arith.constant 0 : index
    %c0_67 = arith.constant 0 : index
    %119 = vector.load %arg7[%c0_65, %c0_66, %c0_67] : memref<1x256x32xf32, #tpu.memory_space<vmem>>, vector<1x256x32xf32>
    %120 = vector.shape_cast %119 : vector<1x256x32xf32> to vector<256x32xf32>
    %121 = vector.shape_cast %113 : vector<256x32xf32> to vector<1x256x32xf32>
    tpu.vector_store %arg7[%c0_65, %c0_66, %c0_67], %121 {strides = array<i32>} : memref<1x256x32xf32, #tpu.memory_space<vmem>>, vector<1x256x32xf32>,
    return
  }
  func.func @transform_0(%arg0: i32) -> (i32, i32, i32) {
    %c0_i32 = arith.constant 0 : i32
    %c0_i32_0 = arith.constant 0 : i32
    %c0_i32_1 = arith.constant 0 : i32
    return %arg0, %c0_i32, %c0_i32_0 : i32, i32, i32
  }
  func.func @transform_1(%arg0: i32) -> (i32, i32, i32) {
    %c0_i32 = arith.constant 0 : i32
    %c0_i32_0 = arith.constant 0 : i32
    %c0_i32_1 = arith.constant 0 : i32
    return %arg0, %c0_i32, %c0_i32_0 : i32, i32, i32
  }
  func.func @transform_2(%arg0: i32) -> (i32, i32, i32) {
    %c0_i32 = arith.constant 0 : i32
    %c0_i32_0 = arith.constant 0 : i32
    %c0_i32_1 = arith.constant 0 : i32
    %c0_i32_2 = arith.constant 0 : i32
    return %c0_i32, %c0_i32_0, %c0_i32_1 : i32, i32, i32
  }
  func.func @transform_3(%arg0: i32) -> (i32, i32) {
    %c0_i32 = arith.constant 0 : i32
    %c0_i32_0 = arith.constant 0 : i32
    %c0_i32_1 = arith.constant 0 : i32
    return %c0_i32, %c0_i32_0 : i32, i32
  }
  func.func @transform_4(%arg0: i32) -> (i32, i32) {
    %c0_i32 = arith.constant 0 : i32
    %c0_i32_0 = arith.constant 0 : i32
    %c0_i32_1 = arith.constant 0 : i32
    return %c0_i32, %c0_i32_0 : i32, i32
  }
  func.func @transform_5(%arg0: i32) -> (i32, i32, i32) {
    %c0_i32 = arith.constant 0 : i32
    %c0_i32_0 = arith.constant 0 : i32
    %c0_i32_1 = arith.constant 0 : i32
    return %arg0, %c0_i32, %c0_i32_0 : i32, i32, i32
  }
  func.func @transform_6(%arg0: i32) -> (i32, i32, i32) {
    %c0_i32 = arith.constant 0 : i32
    %c0_i32_0 = arith.constant 0 : i32
    %c0_i32_1 = arith.constant 0 : i32
    return %arg0, %c0_i32, %c0_i32_0 : i32, i32, i32
  }
}

</mosaic_0001>

<llo_original>
// kernel: conv_lstm_cell.1
$region0: #{conv_lstm_cell.1}
  #allocation0 [shape = 'u32[]', space=smem, size = 0x4, offset = 0x4, fixed_abs, tag = 'smem constant byte address 0x4 - core index']
  #allocation1 [shape = 'u32[144,128]{1,0:T(1,128)}', space=vmem, size = 0x12000, scoped, tag = 'internal scratch']
  #allocation2 [shape = 'f32[304,36]{1,0:T(8,128)}', space=vmem, size = 0x26000, scoped, tag = 'scratch operand']
  %s0 = inlined_call_operand.vmem [shape: bf16[2,256,36], index: 0, kind: input, shape index: {}]
  %s1 = inlined_call_operand.vmem [shape: f32[2,256,32], index: 1, kind: input, shape index: {}]
  %s2 = inlined_call_operand.vmem [shape: bf16[9,36,128], index: 2, kind: input, shape index: {}]
  %s3 = inlined_call_operand.vmem [shape: f32[1,128], index: 3, kind: input, shape index: {}]
  %s4 = inlined_call_operand.vmem [shape: f32[256,3], index: 4, kind: input, shape index: {}]
  %s5 = inlined_call_operand.hbm [shape: f32[2,256,32], index: 5, kind: output, shape index: {0}]
  %s6 = inlined_call_operand.hbm [shape: f32[2,256,32], index: 6, kind: output, shape index: {1}]
  %7 = xla_tuple %s5, %s6
  %s8 = sld [smem:[#allocation0]]
  $region61: #{conv_lstm_cell.1} parent=0
    _
  %s10 = ssub.s32 1, %s8
  %s11 = scalar_select 0, %s10, %s8
  $region1: #{conv_lstm_cell.1} parent=0
    #allocation3 [shape = 'u8[262144]{0}', space=vmem, size = 0x40000, scoped, tag = 'output window, operand 0']
    #allocation4 [shape = 's32[2]{0}', space=sflag, size = 0x8, scoped, tag = 'scoped memory for conv_lstm_cell.1']
    #allocation5 [shape = 'u8[262144]{0}', space=vmem, size = 0x40000, scoped, tag = 'output window, operand 1']
    #allocation6 [shape = 's32[2]{0}', space=sflag, size = 0x8, scoped, tag = 'scoped memory for conv_lstm_cell.1']
    %12 = vsyncpa [#allocation4], 0
    %s13 = scalar_lea.sflag [#allocation4], 1
    %14 = vsyncpa %s13, 0
    %15 = vsyncpa [#allocation6], 0
    %s16 = scalar_lea.sflag [#allocation6], 1
    %17 = vsyncpa %s16, 0
    loop: start=0, step=1, limit=4
    $region2: #{conv_lstm_cell.1} parent=1 // loop_pre_header
      _
    $region3: #{conv_lstm_cell.1} parent=1 // loop_header
      %s19 = sphi 0, %s23
      %p20 = scmp.ge.s32.totalorder %s19, 4
      %s29 = sphi 0, %s31
      %s32 = sphi 0, %s29
      %s33 = sphi 0, %s32
      %s49 = sphi 0, %s33
      %s55 = sphi 0, %s57
      %s58 = sphi 0, %s55
      %s59 = sphi 0, %s58
      %s75 = sphi 0, %s59
      %s79 = sphi 0, %s79
      %s81 = sphi 0, %s79
      %s82 = sphi 0, %s81
      %s96 = sphi 0, %s82
      %s100 = sphi 0, %s100
      %s102 = sphi 0, %s100
      %s103 = sphi 0, %s102
      %s117 = sphi 0, %s103
      %s121 = sphi 0, %s121
      %s123 = sphi 0, %s121
      %s124 = sphi 0, %s123
      %s138 = sphi 0, %s124
      %s144 = sphi 0, %s146
      %s147 = sphi 0, %s144
      %s148 = sphi 0, %s147
      %s164 = sphi 0, %s148
      %s170 = sphi 0, %s172
      %s173 = sphi 0, %s170
      %s174 = sphi 0, %s173
      %s190 = sphi 0, %s174
    $region4: #{conv_lstm_cell.1} parent=1 // loop_header_branch
      %22 = sbr.rel (%p20) target = $region8
    $region5: #{conv_lstm_cell.1} parent=1 // loop_body
      %s24 = ssub.s32 %s19, 1
      %s25 = ssub.s32 %s19, 2
      %s26 = sadd.s32 %s19, 1
      %s27 = ssub.s32 %s19, %s26
      %p28 = scmp.eq.s32.totalorder %s27, 0
      %s30 = sadd.s32 %s29, 1
      %s31 = scalar_select %p28, %s29, %s30
      %p34 = pneg %p28
      %p35 = scmp.eq.s32.totalorder %s19, 1
      %p36 = por %p34, %p35
      %p37 = scmp.ne.s32.totalorder %s29, %s32
      %p38 = scmp.eq.s32.totalorder %s19, 0
      %p39 = por %p37, %p38
      %p40 = scmp.ne.s32.totalorder %s29, %s32
      %p41 = scmp.eq.s32.totalorder %s24, 1
      %p42 = por %p40, %p41
      %p43 = scmp.ne.s32.totalorder %s32, %s33
      %p44 = scmp.eq.s32.totalorder %s24, 0
      %p45 = por %p43, %p44
      %p46 = scmp.ne.s32.totalorder %s32, %s33
      %p47 = scmp.eq.s32.totalorder %s25, 1
      %p48 = por %p46, %p47
      %p50 = scmp.ne.s32.totalorder %s33, %s49
      %p51 = scmp.eq.s32.totalorder %s25, 0
      %p52 = por %p50, %p51
      %s53 = ssub.s32 %s19, %s26
      %p54 = scmp.eq.s32.totalorder %s53, 0
      %s56 = sadd.s32 %s55, 1
      %s57 = scalar_select %p54, %s55, %s56
      %p60 = pneg %p54
      %p61 = scmp.eq.s32.totalorder %s19, 1
      %p62 = por %p60, %p61
      %p63 = scmp.ne.s32.totalorder %s55, %s58
      %p64 = scmp.eq.s32.totalorder %s19, 0
      %p65 = por %p63, %p64
      %p66 = scmp.ne.s32.totalorder %s55, %s58
      %p67 = scmp.eq.s32.totalorder %s24, 1
      %p68 = por %p66, %p67
      %p69 = scmp.ne.s32.totalorder %s58, %s59
      %p70 = scmp.eq.s32.totalorder %s24, 0
      %p71 = por %p69, %p70
      %p72 = scmp.ne.s32.totalorder %s58, %s59
      %p73 = scmp.eq.s32.totalorder %s25, 1
      %p74 = por %p72, %p73
      %p76 = scmp.ne.s32.totalorder %s59, %s75
      %p77 = scmp.eq.s32.totalorder %s25, 0
      %p78 = por %p76, %p77
      %s80 = sadd.s32 %s79, 1
      %p83 = scmp.eq.s32.totalorder %s19, 1
      %p84 = scmp.ne.s32.totalorder %s79, %s81
      %p85 = scmp.eq.s32.totalorder %s19, 0
      %p86 = por %p84, %p85
      %p87 = scmp.ne.s32.totalorder %s79, %s81
      %p88 = scmp.eq.s32.totalorder %s24, 1
      %p89 = por %p87, %p88
      %p90 = scmp.ne.s32.totalorder %s81, %s82
      %p91 = scmp.eq.s32.totalorder %s24, 0
      %p92 = por %p90, %p91
      %p93 = scmp.ne.s32.totalorder %s81, %s82
      %p94 = scmp.eq.s32.totalorder %s25, 1
      %p95 = por %p93, %p94
      %p97 = scmp.ne.s32.totalorder %s82, %s96
      %p98 = scmp.eq.s32.totalorder %s25, 0
      %p99 = por %p97, %p98
      %s101 = sadd.s32 %s100, 1
      %p104 = scmp.eq.s32.totalorder %s19, 1
      %p105 = scmp.ne.s32.totalorder %s100, %s102
      %p106 = scmp.eq.s32.totalorder %s19, 0
      %p107 = por %p105, %p106
      %p108 = scmp.ne.s32.totalorder %s100, %s102
      %p109 = scmp.eq.s32.totalorder %s24, 1
      %p110 = por %p108, %p109
      %p111 = scmp.ne.s32.totalorder %s102, %s103
      %p112 = scmp.eq.s32.totalorder %s24, 0
      %p113 = por %p111, %p112
      %p114 = scmp.ne.s32.totalorder %s102, %s103
      %p115 = scmp.eq.s32.totalorder %s25, 1
      %p116 = por %p114, %p115
      %p118 = scmp.ne.s32.totalorder %s103, %s117
      %p119 = scmp.eq.s32.totalorder %s25, 0
      %p120 = por %p118, %p119
      %s122 = sadd.s32 %s121, 1
      %p125 = scmp.eq.s32.totalorder %s19, 1
      %p126 = scmp.ne.s32.totalorder %s121, %s123
      %p127 = scmp.eq.s32.totalorder %s19, 0
      %p128 = por %p126, %p127
      %p129 = scmp.ne.s32.totalorder %s121, %s123
      %p130 = scmp.eq.s32.totalorder %s24, 1
      %p131 = por %p129, %p130
      %p132 = scmp.ne.s32.totalorder %s123, %s124
      %p133 = scmp.eq.s32.totalorder %s24, 0
      %p134 = por %p132, %p133
      %p135 = scmp.ne.s32.totalorder %s123, %s124
      %p136 = scmp.eq.s32.totalorder %s25, 1
      %p137 = por %p135, %p136
      %p139 = scmp.ne.s32.totalorder %s124, %s138
      %p140 = scmp.eq.s32.totalorder %s25, 0
      %p141 = por %p139, %p140
      %s142 = ssub.s32 %s19, %s26
      %p143 = scmp.eq.s32.totalorder %s142, 0
      %s145 = sadd.s32 %s144, 1
      %s146 = scalar_select %p143, %s144, %s145
      %p149 = pneg %p143
      %p150 = scmp.eq.s32.totalorder %s19, 1
      %p151 = por %p149, %p150
      %p152 = scmp.ne.s32.totalorder %s144, %s147
      %p153 = scmp.eq.s32.totalorder %s19, 0
      %p154 = por %p152, %p153
      %p155 = scmp.ne.s32.totalorder %s144, %s147
      %p156 = scmp.eq.s32.totalorder %s24, 1
      %p157 = por %p155, %p156
      %p158 = scmp.ne.s32.totalorder %s147, %s148
      %p159 = scmp.eq.s32.totalorder %s24, 0
      %p160 = por %p158, %p159
      %p161 = scmp.ne.s32.totalorder %s147, %s148
      %p162 = scmp.eq.s32.totalorder %s25, 1
      %p163 = por %p161, %p162
      %p165 = scmp.ne.s32.totalorder %s148, %s164
      %p166 = scmp.eq.s32.totalorder %s25, 0
      %p167 = por %p165, %p166
      %s168 = ssub.s32 %s19, %s26
      %p169 = scmp.eq.s32.totalorder %s168, 0
      %s171 = sadd.s32 %s170, 1
      %s172 = scalar_select %p169, %s170, %s171
      %p175 = pneg %p169
      %p176 = scmp.eq.s32.totalorder %s19, 1
      %p177 = por %p175, %p176
      %p178 = scmp.ne.s32.totalorder %s170, %s173
      %p179 = scmp.eq.s32.totalorder %s19, 0
      %p180 = por %p178, %p179
      %p181 = scmp.ne.s32.totalorder %s170, %s173
      %p182 = scmp.eq.s32.totalorder %s24, 1
      %p183 = por %p181, %p182
      %p184 = scmp.ne.s32.totalorder %s173, %s174
      %p185 = scmp.eq.s32.totalorder %s24, 0
      %p186 = por %p184, %p185
      %p187 = scmp.ne.s32.totalorder %s173, %s174
      %p188 = scmp.eq.s32.totalorder %s25, 1
      %p189 = por %p187, %p188
      %p191 = scmp.ne.s32.totalorder %s174, %s190
      %p192 = scmp.eq.s32.totalorder %s25, 0
      %p193 = por %p191, %p192
      %p194 = scmp.le.s32.totalorder 1, %s19
      %p195 = scmp.lt.s32.totalorder %s19, 3
      %p196 = pnand %p194, %p195
      %p197 = pneg %p196
      // Predicated region
      $region9: #{conv_lstm_cell.1} parent=5 // pred_check
        _
      $region10: #{conv_lstm_cell.1} parent=5 // pred_check_branch
        %199 = sbr.rel (%p196) target = $region12
      $region11: #{conv_lstm_cell.1} parent=5 // pred_region
        %s200 = ssub.s32 %s19, 1
        // Predicated region
        $region13: #{conv_lstm_cell.1} parent=11 // pred_check
          %p201 = pneg %p92
        $region14: #{conv_lstm_cell.1} parent=11 // pred_check_branch
          %203 = sbr.rel (%p201) target = $region16
        $region15: #{conv_lstm_cell.1} parent=11 // pred_region
          _
        $region16: #{conv_lstm_cell.1} parent=11 // pred_fallthru
          _
        // Predicated region
        $region17: #{conv_lstm_cell.1} parent=11 // pred_check
          %p204 = pneg %p113
        $region18: #{conv_lstm_cell.1} parent=11 // pred_check_branch
          %206 = sbr.rel (%p204) target = $region20
        $region19: #{conv_lstm_cell.1} parent=11 // pred_region
          _
        $region20: #{conv_lstm_cell.1} parent=11 // pred_fallthru
          _
        // Predicated region
        $region21: #{conv_lstm_cell.1} parent=11 // pred_check
          %p207 = pneg %p134
        $region22: #{conv_lstm_cell.1} parent=11 // pred_check_branch
          %209 = sbr.rel (%p207) target = $region24
        $region23: #{conv_lstm_cell.1} parent=11 // pred_region
          _
        $region24: #{conv_lstm_cell.1} parent=11 // pred_fallthru
          _
      $region12: #{conv_lstm_cell.1} parent=5 // pred_fallthru
        _
      %p210 = scmp.lt.s32.totalorder %s19, 2
      // Predicated region
      $region25: #{conv_lstm_cell.1} parent=5 // pred_check
        %p211 = pneg %p210
      $region26: #{conv_lstm_cell.1} parent=5 // pred_check_branch
        %213 = sbr.rel (%p211) target = $region28
      $region27: #{conv_lstm_cell.1} parent=5 // pred_region
        // Predicated region
        $region29: #{conv_lstm_cell.1} parent=27 // pred_check
          %p214 = pneg %p39
        $region30: #{conv_lstm_cell.1} parent=27 // pred_check_branch
          %216 = sbr.rel (%p214) target = $region32
        $region31: #{conv_lstm_cell.1} parent=27 // pred_region
          %p217 = scmp.lt.s32.totalorder %s19, 1
          %s218 = scalar_select %p217, %s19, 1
          %s219 = smul.addr %s218, 32
          %s220 = smul.addr %s219, 4
          %s221 = scalar_lea.vmem %s0, %s220
        $region32: #{conv_lstm_cell.1} parent=27 // pred_fallthru
          _
        // Predicated region
        $region33: #{conv_lstm_cell.1} parent=27 // pred_check
          %p222 = pneg %p65
        $region34: #{conv_lstm_cell.1} parent=27 // pred_check_branch
          %224 = sbr.rel (%p222) target = $region36
        $region35: #{conv_lstm_cell.1} parent=27 // pred_region
          %p225 = scmp.lt.s32.totalorder %s19, 1
          %s226 = scalar_select %p225, %s19, 1
          %s227 = smul.addr %s226, 32
          %s228 = smul.addr %s227, 8
          %s229 = scalar_lea.vmem %s1, %s228
        $region36: #{conv_lstm_cell.1} parent=27 // pred_fallthru
          _
      $region28: #{conv_lstm_cell.1} parent=5 // pred_fallthru
        _
      %p230 = scmp.le.s32.totalorder 1, %s19
      %p231 = scmp.lt.s32.totalorder %s19, 3
      %p232 = pnand %p230, %p231
      %p233 = pneg %p232
      // Predicated region
      $region37: #{conv_lstm_cell.1} parent=5 // pred_check
        _
      $region38: #{conv_lstm_cell.1} parent=5 // pred_check_branch
        %235 = sbr.rel (%p232) target = $region40
      $region39: #{conv_lstm_cell.1} parent=5 // pred_region
        %s236 = ssub.s32 %s19, 1
        %p237 = scmp.lt.s32.totalorder %s24, 1
        %s238 = scalar_select %p237, %s24, 1
        %s239 = smul.addr %s238, 32
        %s240 = smul.addr %s239, 4
        %s241 = scalar_lea.vmem %s0, %s240
        %p242 = pneg %p45
        %p243 = pneg %p42
        %p244 = scmp.lt.s32.totalorder %s24, 1
        %s245 = scalar_select %p244, %s24, 1
        %s246 = smul.addr %s245, 32
        %s247 = smul.addr %s246, 8
        %s248 = scalar_lea.vmem %s1, %s247
        %p249 = pneg %p71
        %p250 = pneg %p68
        %p251 = pneg %p92
        %p252 = pneg %p89
        %p253 = pneg %p113
        %p254 = pneg %p110
        %p255 = pneg %p134
        %p256 = pneg %p131
        %p257 = pneg %p160
        %p258 = pneg %p157
        %s259 = sand.u32 %s147, 1
        %s260 = scalar_lea.sflag [#allocation4], %s259
        %s261 = sand.u32 %s147, 1
        %s262 = smul.addr %s261, 256
        %s263 = scalar_lea.vmem [#allocation3], %s262
        %p264 = pneg %p186
        %p265 = pneg %p183
        %s266 = sand.u32 %s173, 1
        %s267 = scalar_lea.sflag [#allocation6], %s266
        %s268 = sand.u32 %s173, 1
        %s269 = smul.addr %s268, 256
        %s270 = scalar_lea.vmem [#allocation5], %s269
        %p271 = scmp.lt.s32.totalorder %s24, 1
        %s272 = scalar_select %p271, %s24, 1
        %s273 = smul.addr %s272, 32
        %s274 = smul.addr %s273, 4
        %s275 = scalar_lea.vmem %s0, %s274
        %p276 = scmp.lt.s32.totalorder %s24, 1
        %s277 = scalar_select %p276, %s24, 1
        %s278 = smul.addr %s277, 32
        %s279 = smul.addr %s278, 8
        %s280 = scalar_lea.vmem %s1, %s279
        %vm281 = vcmask 293888
        %282 = vst.msk [vmem:[#allocation2] sm:$0xff] %vm281, 0.0
        %283 = vst.msk [vmem:[#allocation2 + $0x8] sm:$0xff] %vm281, 0.0
        %284 = vst.msk [vmem:[#allocation2 + $0x10] sm:$0xff] %vm281, 0.0
        %285 = vst.msk [vmem:[#allocation2 + $0x118] sm:$0xff] %vm281, 0.0
        %286 = vst.msk [vmem:[#allocation2 + $0x120] sm:$0xff] %vm281, 0.0
        %287 = vst.msk [vmem:[#allocation2 + $0x128] sm:$0xff] %vm281, 0.0
        %v288 = vld [vmem:[%s275] sm:$0xf]
        %v289 = vld [vmem:[%s275 + $0x4] sm:$0xf]
        %v290 = vld [vmem:[%s275 + $0x8] sm:$0xf]
        %v291 = vld [vmem:[%s275 + $0xc] sm:$0xf]
        %v292 = vld [vmem:[%s275 + $0x10] sm:$0xf]
        %v293 = vld [vmem:[%s275 + $0x14] sm:$0xf]
        %v294 = vld [vmem:[%s275 + $0x18] sm:$0xf]
        %v295 = vld [vmem:[%s275 + $0x1c] sm:$0xf]
        %v296 = vld [vmem:[%s275 + $0x20] sm:$0xf]
        %v297 = vld [vmem:[%s275 + $0x24] sm:$0xf]
        %v298 = vld [vmem:[%s275 + $0x28] sm:$0xf]
        %v299 = vld [vmem:[%s275 + $0x2c] sm:$0xf]
        %v300 = vld [vmem:[%s275 + $0x30] sm:$0xf]
        %v301 = vld [vmem:[%s275 + $0x34] sm:$0xf]
        %v302 = vld [vmem:[%s275 + $0x38] sm:$0xf]
        %v303 = vld [vmem:[%s275 + $0x3c] sm:$0xf]
        %v304 = vld [vmem:[%s275 + $0x40] sm:$0xf]
        %v305 = vld [vmem:[%s275 + $0x44] sm:$0xf]
        %v306 = vld [vmem:[%s275 + $0x48] sm:$0xf]
        %v307 = vld [vmem:[%s275 + $0x4c] sm:$0xf]
        %v308 = vld [vmem:[%s275 + $0x50] sm:$0xf]
        %v309 = vld [vmem:[%s275 + $0x54] sm:$0xf]
        %v310 = vld [vmem:[%s275 + $0x58] sm:$0xf]
        %v311 = vld [vmem:[%s275 + $0x5c] sm:$0xf]
        %v312 = vld [vmem:[%s275 + $0x60] sm:$0xf]
        %v313 = vld [vmem:[%s275 + $0x64] sm:$0xf]
        %v314 = vld [vmem:[%s275 + $0x68] sm:$0xf]
        %v315 = vld [vmem:[%s275 + $0x6c] sm:$0xf]
        %v316 = vld [vmem:[%s275 + $0x70] sm:$0xf]
        %v317 = vld [vmem:[%s275 + $0x74] sm:$0xf]
        %v318 = vld [vmem:[%s275 + $0x78] sm:$0xf]
        %v319 = vld [vmem:[%s275 + $0x7c] sm:$0xf]
        %v320 = vunpack.c.l.bf16 %v288
        %v321 = vunpack.c.l.bf16 %v289
        %v322 = vunpack.c.l.bf16 %v290
        %v323 = vunpack.c.l.bf16 %v291
        %v324 = vunpack.c.l.bf16 %v292
        %v325 = vunpack.c.l.bf16 %v293
        %v326 = vunpack.c.l.bf16 %v294
        %v327 = vunpack.c.l.bf16 %v295
        %v328 = vunpack.c.l.bf16 %v296
        %v329 = vunpack.c.l.bf16 %v297
        %v330 = vunpack.c.l.bf16 %v298
        %v331 = vunpack.c.l.bf16 %v299
        %v332 = vunpack.c.l.bf16 %v300
        %v333 = vunpack.c.l.bf16 %v301
        %v334 = vunpack.c.l.bf16 %v302
        %v335 = vunpack.c.l.bf16 %v303
        %v336 = vunpack.c.l.bf16 %v304
        %v337 = vunpack.c.l.bf16 %v305
        %v338 = vunpack.c.l.bf16 %v306
        %v339 = vunpack.c.l.bf16 %v307
        %v340 = vunpack.c.l.bf16 %v308
        %v341 = vunpack.c.l.bf16 %v309
        %v342 = vunpack.c.l.bf16 %v310
        %v343 = vunpack.c.l.bf16 %v311
        %v344 = vunpack.c.l.bf16 %v312
        %v345 = vunpack.c.l.bf16 %v313
        %v346 = vunpack.c.l.bf16 %v314
        %v347 = vunpack.c.l.bf16 %v315
        %v348 = vunpack.c.l.bf16 %v316
        %v349 = vunpack.c.l.bf16 %v317
        %v350 = vunpack.c.l.bf16 %v318
        %v351 = vunpack.c.l.bf16 %v319
        %352 = vst.msk [vmem:[#allocation2 + $0x18] sm:$0xff] %vm281, %v320
        %353 = vst.msk [vmem:[#allocation2 + $0x20] sm:$0xff] %vm281, %v321
        %354 = vst.msk [vmem:[#allocation2 + $0x28] sm:$0xff] %vm281, %v322
        %355 = vst.msk [vmem:[#allocation2 + $0x30] sm:$0xff] %vm281, %v323
        %356 = vst.msk [vmem:[#allocation2 + $0x38] sm:$0xff] %vm281, %v324
        %357 = vst.msk [vmem:[#allocation2 + $0x40] sm:$0xff] %vm281, %v325
        %358 = vst.msk [vmem:[#allocation2 + $0x48] sm:$0xff] %vm281, %v326
        %359 = vst.msk [vmem:[#allocation2 + $0x50] sm:$0xff] %vm281, %v327
        %360 = vst.msk [vmem:[#allocation2 + $0x58] sm:$0xff] %vm281, %v328
        %361 = vst.msk [vmem:[#allocation2 + $0x60] sm:$0xff] %vm281, %v329
        %362 = vst.msk [vmem:[#allocation2 + $0x68] sm:$0xff] %vm281, %v330
        %363 = vst.msk [vmem:[#allocation2 + $0x70] sm:$0xff] %vm281, %v331
        %364 = vst.msk [vmem:[#allocation2 + $0x78] sm:$0xff] %vm281, %v332
        %365 = vst.msk [vmem:[#allocation2 + $0x80] sm:$0xff] %vm281, %v333
        %366 = vst.msk [vmem:[#allocation2 + $0x88] sm:$0xff] %vm281, %v334
        %367 = vst.msk [vmem:[#allocation2 + $0x90] sm:$0xff] %vm281, %v335
        %368 = vst.msk [vmem:[#allocation2 + $0x98] sm:$0xff] %vm281, %v336
        %369 = vst.msk [vmem:[#allocation2 + $0xa0] sm:$0xff] %vm281, %v337
        %370 = vst.msk [vmem:[#allocation2 + $0xa8] sm:$0xff] %vm281, %v338
        %371 = vst.msk [vmem:[#allocation2 + $0xb0] sm:$0xff] %vm281, %v339
        %372 = vst.msk [vmem:[#allocation2 + $0xb8] sm:$0xff] %vm281, %v340
        %373 = vst.msk [vmem:[#allocation2 + $0xc0] sm:$0xff] %vm281, %v341
        %374 = vst.msk [vmem:[#allocation2 + $0xc8] sm:$0xff] %vm281, %v342
        %375 = vst.msk [vmem:[#allocation2 + $0xd0] sm:$0xff] %vm281, %v343
        %376 = vst.msk [vmem:[#allocation2 + $0xd8] sm:$0xff] %vm281, %v344
        %377 = vst.msk [vmem:[#allocation2 + $0xe0] sm:$0xff] %vm281, %v345
        %378 = vst.msk [vmem:[#allocation2 + $0xe8] sm:$0xff] %vm281, %v346
        %379 = vst.msk [vmem:[#allocation2 + $0xf0] sm:$0xff] %vm281, %v347
        %380 = vst.msk [vmem:[#allocation2 + $0xf8] sm:$0xff] %vm281, %v348
        %381 = vst.msk [vmem:[#allocation2 + $0x100] sm:$0xff] %vm281, %v349
        %382 = vst.msk [vmem:[#allocation2 + $0x108] sm:$0xff] %vm281, %v350
        %383 = vst.msk [vmem:[#allocation2 + $0x110] sm:$0xff] %vm281, %v351
        %v384 = vld [vmem:[%s4] sm:$0xff]
        %v385 = vld [vmem:[%s4 + $0x8] sm:$0xff]
        %v386 = vld [vmem:[%s4 + $0x10] sm:$0xff]
        %v387 = vld [vmem:[%s4 + $0x18] sm:$0xff]
        %v388 = vld [vmem:[%s4 + $0x20] sm:$0xff]
        %v389 = vld [vmem:[%s4 + $0x28] sm:$0xff]
        %v390 = vld [vmem:[%s4 + $0x30] sm:$0xff]
        %v391 = vld [vmem:[%s4 + $0x38] sm:$0xff]
        %v392 = vld [vmem:[%s4 + $0x40] sm:$0xff]
        %v393 = vld [vmem:[%s4 + $0x48] sm:$0xff]
        %v394 = vld [vmem:[%s4 + $0x50] sm:$0xff]
        %v395 = vld [vmem:[%s4 + $0x58] sm:$0xff]
        %v396 = vld [vmem:[%s4 + $0x60] sm:$0xff]
        %v397 = vld [vmem:[%s4 + $0x68] sm:$0xff]
        %v398 = vld [vmem:[%s4 + $0x70] sm:$0xff]
        %v399 = vld [vmem:[%s4 + $0x78] sm:$0xff]
        %v400 = vld [vmem:[%s4 + $0x80] sm:$0xff]
        %v401 = vld [vmem:[%s4 + $0x88] sm:$0xff]
        %v402 = vld [vmem:[%s4 + $0x90] sm:$0xff]
        %v403 = vld [vmem:[%s4 + $0x98] sm:$0xff]
        %v404 = vld [vmem:[%s4 + $0xa0] sm:$0xff]
        %v405 = vld [vmem:[%s4 + $0xa8] sm:$0xff]
        %v406 = vld [vmem:[%s4 + $0xb0] sm:$0xff]
        %v407 = vld [vmem:[%s4 + $0xb8] sm:$0xff]
        %v408 = vld [vmem:[%s4 + $0xc0] sm:$0xff]
        %v409 = vld [vmem:[%s4 + $0xc8] sm:$0xff]
        %v410 = vld [vmem:[%s4 + $0xd0] sm:$0xff]
        %v411 = vld [vmem:[%s4 + $0xd8] sm:$0xff]
        %v412 = vld [vmem:[%s4 + $0xe0] sm:$0xff]
        %v413 = vld [vmem:[%s4 + $0xe8] sm:$0xff]
        %v414 = vld [vmem:[%s4 + $0xf0] sm:$0xff]
        %v415 = vld [vmem:[%s4 + $0xf8] sm:$0xff]
        %v416 = vld [vmem:[%s3] sm:$0x1]
        %v418 = vlaneseq
        %v419 = vshrl.u32 %v418, 7
        %v420 = vsub.s32 0, %v419
        %v421 = vrot.slane %v416, %v420
        %v423 = vld [vmem:[#allocation2 + $0x7] sm:$0xff]
        %v424 = vld [vmem:[#allocation2 + $0xf] sm:$0xff]
        %v425 = vld [vmem:[#allocation2 + $0x17] sm:$0xff]
        %v426 = vld [vmem:[#allocation2 + $0x1f] sm:$0xff]
        %v427 = vld [vmem:[#allocation2 + $0x27] sm:$0xff]
        %v428 = vld [vmem:[#allocation2 + $0x2f] sm:$0xff]
        %v429 = vld [vmem:[#allocation2 + $0x37] sm:$0xff]
        %v430 = vld [vmem:[#allocation2 + $0x3f] sm:$0xff]
        %v431 = vld [vmem:[#allocation2 + $0x47] sm:$0xff]
        %v432 = vld [vmem:[#allocation2 + $0x4f] sm:$0xff]
        %v433 = vld [vmem:[#allocation2 + $0x57] sm:$0xff]
        %v434 = vld [vmem:[#allocation2 + $0x5f] sm:$0xff]
        %v435 = vld [vmem:[#allocation2 + $0x67] sm:$0xff]
        %v436 = vld [vmem:[#allocation2 + $0x6f] sm:$0xff]
        %v437 = vld [vmem:[#allocation2 + $0x77] sm:$0xff]
        %v438 = vld [vmem:[#allocation2 + $0x7f] sm:$0xff]
        %v439 = vld [vmem:[#allocation2 + $0x87] sm:$0xff]
        %v440 = vld [vmem:[#allocation2 + $0x8f] sm:$0xff]
        %v441 = vld [vmem:[#allocation2 + $0x97] sm:$0xff]
        %v442 = vld [vmem:[#allocation2 + $0x9f] sm:$0xff]
        %v443 = vld [vmem:[#allocation2 + $0xa7] sm:$0xff]
        %v444 = vld [vmem:[#allocation2 + $0xaf] sm:$0xff]
        %v445 = vld [vmem:[#allocation2 + $0xb7] sm:$0xff]
        %v446 = vld [vmem:[#allocation2 + $0xbf] sm:$0xff]
        %v447 = vld [vmem:[#allocation2 + $0xc7] sm:$0xff]
        %v448 = vld [vmem:[#allocation2 + $0xcf] sm:$0xff]
        %v449 = vld [vmem:[#allocation2 + $0xd7] sm:$0xff]
        %v450 = vld [vmem:[#allocation2 + $0xdf] sm:$0xff]
        %v451 = vld [vmem:[#allocation2 + $0xe7] sm:$0xff]
        %v452 = vld [vmem:[#allocation2 + $0xef] sm:$0xff]
        %v453 = vld [vmem:[#allocation2 + $0xf7] sm:$0xff]
        %v454 = vld [vmem:[#allocation2 + $0xff] sm:$0xff]
        %v455 = vld [vmem:[%s2] sm:$0xf]
        %v456 = vld [vmem:[%s2 + $0x4] sm:$0xf]
        %v457 = vld [vmem:[%s2 + $0x8] sm:$0xf]
        %v458 = vld [vmem:[%s2 + $0xc] sm:$0xf]
        %v459 = vld [vmem:[%s2 + $0x10] sm:$0x3]
        %v460 = vunpack.c.l.bf16 %v455
        %v461 = vunpack.c.l.bf16 %v456
        %v462 = vunpack.c.l.bf16 %v457
        %v463 = vunpack.c.l.bf16 %v458
        %v464 = vunpack.c.l.bf16 %v459
        %v466 = vsel %vm281, %v423, 0
        %v469 = vsel %vm281, %v424, 0
        %v472 = vsel %vm281, %v425, 0
        %v475 = vsel %vm281, %v426, 0
        %v478 = vsel %vm281, %v427, 0
        %v481 = vsel %vm281, %v428, 0
        %v484 = vsel %vm281, %v429, 0
        %v487 = vsel %vm281, %v430, 0
        %v490 = vsel %vm281, %v431, 0
        %v493 = vsel %vm281, %v432, 0
        %v496 = vsel %vm281, %v433, 0
        %v499 = vsel %vm281, %v434, 0
        %v502 = vsel %vm281, %v435, 0
        %v505 = vsel %vm281, %v436, 0
        %v508 = vsel %vm281, %v437, 0
        %v511 = vsel %vm281, %v438, 0
        %v514 = vsel %vm281, %v439, 0
        %v517 = vsel %vm281, %v440, 0
        %v520 = vsel %vm281, %v441, 0
        %v523 = vsel %vm281, %v442, 0
        %v526 = vsel %vm281, %v443, 0
        %v529 = vsel %vm281, %v444, 0
        %v532 = vsel %vm281, %v445, 0
        %v535 = vsel %vm281, %v446, 0
        %v538 = vsel %vm281, %v447, 0
        %v541 = vsel %vm281, %v448, 0
        %v544 = vsel %vm281, %v449, 0
        %v547 = vsel %vm281, %v450, 0
        %v550 = vsel %vm281, %v451, 0
        %v553 = vsel %vm281, %v452, 0
        %v556 = vsel %vm281, %v453, 0
        %v559 = vsel %vm281, %v454, 0
        %vm561 = vcmask 1043456
        %v563 = vsel %vm561, %v464, 0
        %565 = vmatprep.subr.mxu0 0.0
        %566 = vmatpush1.msra.mxu0 %v460
        %567 = vmatprep.subr.mxu0 0.0
        %568 = vmatpush1.msra.mxu0 %v461
        %569 = vmatprep.subr.mxu0 0.0
        %570 = vmatpush1.msra.mxu0 %v462
        %571 = vmatprep.subr.mxu0 0.0
        %572 = vmatpush1.msra.mxu0 %v463
        %573 = vmatprep.subr.mxu0 0.0
        %574 = vmatpush1.msra.mxu0 %v563
        %575 = vmatprep.subr.mxu0 0.0
        %576 = vmatpush1.msra.mxu0 0.0
        %577 = vmatprep.subr.mxu0 0.0
        %578 = vmatpush1.msra.mxu0 0.0
        %579 = vmatprep.subr.mxu0 0.0
        %580 = vmatpush1.msra.mxu0 0.0
        %581 = vmatprep.subr.mxu0 0.0
        %582 = vmatpush1.msra.mxu0 0.0
        %583 = vmatprep.subr.mxu0 0.0
        %584 = vmatpush1.msra.mxu0 0.0
        %585 = vmatprep.subr.mxu0 0.0
        %586 = vmatpush1.msra.mxu0 0.0
        %587 = vmatprep.subr.mxu0 0.0
        %588 = vmatpush1.msra.mxu0 0.0
        %589 = vmatprep.subr.mxu0 0.0
        %590 = vmatpush1.msra.mxu0 0.0
        %591 = vmatprep.subr.mxu0 0.0
        %592 = vmatpush1.msra.mxu0 0.0
        %593 = vmatprep.subr.mxu0 0.0
        %594 = vmatpush1.msra.mxu0 0.0
        %595 = vmatprep.subr.mxu0 0.0
        %596 = vmatpush1.msra.mxu0 0.0
        %597 = vmatprep.subr.mxu0 0.0
        %598 = vmatpush1.msra.mxu0 0.0
        %599 = vmatprep.subr.mxu0 0.0
        %600 = vmatpush1.msra.mxu0 0.0
        %601 = vmatprep.subr.mxu0 0.0
        %602 = vmatpush1.msra.mxu0 0.0
        %603 = vmatprep.subr.mxu0 0.0
        %604 = vmatpush1.msra.mxu0 0.0
        %605 = vmatprep.subr.mxu0 0.0
        %606 = vmatpush1.msra.mxu0 0.0
        %607 = vmatprep.subr.mxu0 0.0
        %608 = vmatpush1.msra.mxu0 0.0
        %609 = vmatprep.subr.mxu0 0.0
        %610 = vmatpush1.msra.mxu0 0.0
        %611 = vmatprep.subr.mxu0 0.0
        %612 = vmatpush1.msra.mxu0 0.0
        %613 = vmatprep.subr.mxu0 0.0
        %614 = vmatpush1.msra.mxu0 0.0
        %615 = vmatprep.subr.mxu0 0.0
        %616 = vmatpush1.msra.mxu0 0.0
        %617 = vmatprep.subr.mxu0 0.0
        %618 = vmatpush1.msra.mxu0 0.0
        %619 = vmatprep.subr.mxu0 0.0
        %620 = vmatpush1.msra.mxu0 0.0
        %621 = vmatprep.subr.mxu0 0.0
        %622 = vmatpush1.msra.mxu0 0.0
        %623 = vmatprep.subr.mxu0 0.0
        %624 = vmatpush1.msra.mxu0 0.0
        %625 = vmatprep.subr.mxu0 0.0
        %626 = vmatpush1.msra.mxu0 0.0
        %627 = vmatprep.subr.mxu0 0.0
        %628 = vmatpush1.msra.mxu0 0.0
        %629 = vmatprep.mubr.f32.mxu0 0.0
        %630 = vmatmul.mubr.f32.gmra.mrb[0].mxu0 %v466
        %v631 = vpop.f32.mrb[0].mxu0
        %v632 = vadd.f32 0.0, %v631
        %v633 = vpop.f32.mrb[0].mxu0
        %634 = vmatprep.mubr.f32.mxu0 0.0
        %635 = vmatmul.mubr.f32.gmra.mrb[0].mxu0 %v469
        %v636 = vpop.f32.mrb[0].mxu0
        %v637 = vadd.f32 0.0, %v636
        %v638 = vpop.f32.mrb[0].mxu0
        %639 = vmatprep.mubr.f32.mxu0 0.0
        %640 = vmatmul.mubr.f32.gmra.mrb[0].mxu0 %v472
        %v641 = vpop.f32.mrb[0].mxu0
        %v642 = vadd.f32 0.0, %v641
        %v643 = vpop.f32.mrb[0].mxu0
        %644 = vmatprep.mubr.f32.mxu0 0.0
        %645 = vmatmul.mubr.f32.gmra.mrb[0].mxu0 %v475
        %v646 = vpop.f32.mrb[0].mxu0
        %v647 = vadd.f32 0.0, %v646
        %v648 = vpop.f32.mrb[0].mxu0
        %649 = vmatprep.mubr.f32.mxu0 0.0
        %650 = vmatmul.mubr.f32.gmra.mrb[0].mxu0 %v478
        %v651 = vpop.f32.mrb[0].mxu0
        %v652 = vadd.f32 0.0, %v651
        %v653 = vpop.f32.mrb[0].mxu0
        %654 = vmatprep.mubr.f32.mxu0 0.0
        %655 = vmatmul.mubr.f32.gmra.mrb[0].mxu0 %v481
        %v656 = vpop.f32.mrb[0].mxu0
        %v657 = vadd.f32 0.0, %v656
        %v658 = vpop.f32.mrb[0].mxu0
        %659 = vmatprep.mubr.f32.mxu0 0.0
        %660 = vmatmul.mubr.f32.gmra.mrb[0].mxu0 %v484
        %v661 = vpop.f32.mrb[0].mxu0
        %v662 = vadd.f32 0.0, %v661
        %v663 = vpop.f32.mrb[0].mxu0
        %664 = vmatprep.mubr.f32.mxu0 0.0
        %665 = vmatmul.mubr.f32.gmra.mrb[0].mxu0 %v487
        %v666 = vpop.f32.mrb[0].mxu0
        %v667 = vadd.f32 0.0, %v666
        %v668 = vpop.f32.mrb[0].mxu0
        %669 = vmatprep.mubr.f32.mxu0 0.0
        %670 = vmatmul.mubr.f32.gmra.mrb[0].mxu0 %v490
        %v671 = vpop.f32.mrb[0].mxu0
        %v672 = vadd.f32 0.0, %v671
        %v673 = vpop.f32.mrb[0].mxu0
        %674 = vmatprep.mubr.f32.mxu0 0.0
        %675 = vmatmul.mubr.f32.gmra.mrb[0].mxu0 %v493
        %v676 = vpop.f32.mrb[0].mxu0
        %v677 = vadd.f32 0.0, %v676
        %v678 = vpop.f32.mrb[0].mxu0
        %679 = vmatprep.mubr.f32.mxu0 0.0
        %680 = vmatmul.mubr.f32.gmra.mrb[0].mxu0 %v496
        %v681 = vpop.f32.mrb[0].mxu0
        %v682 = vadd.f32 0.0, %v681
        %v683 = vpop.f32.mrb[0].mxu0
        %684 = vmatprep.mubr.f32.mxu0 0.0
        %685 = vmatmul.mubr.f32.gmra.mrb[0].mxu0 %v499
        %v686 = vpop.f32.mrb[0].mxu0
        %v687 = vadd.f32 0.0, %v686
        %v688 = vpop.f32.mrb[0].mxu0
        %689 = vmatprep.mubr.f32.mxu0 0.0
        %690 = vmatmul.mubr.f32.gmra.mrb[0].mxu0 %v502
        %v691 = vpop.f32.mrb[0].mxu0
        %v692 = vadd.f32 0.0, %v691
        %v693 = vpop.f32.mrb[0].mxu0
        %694 = vmatprep.mubr.f32.mxu0 0.0
        %695 = vmatmul.mubr.f32.gmra.mrb[0].mxu0 %v505
        %v696 = vpop.f32.mrb[0].mxu0
        %v697 = vadd.f32 0.0, %v696
        %v698 = vpop.f32.mrb[0].mxu0
        %699 = vmatprep.mubr.f32.mxu0 0.0
        %700 = vmatmul.mubr.f32.gmra.mrb[0].mxu0 %v508
        %v701 = vpop.f32.mrb[0].mxu0
        %v702 = vadd.f32 0.0, %v701
        %v703 = vpop.f32.mrb[0].mxu0
        %704 = vmatprep.mubr.f32.mxu0 0.0
        %705 = vmatmul.mubr.f32.gmra.mrb[0].mxu0 %v511
        %v706 = vpop.f32.mrb[0].mxu0
        %v707 = vadd.f32 0.0, %v706
        %v708 = vpop.f32.mrb[0].mxu0
        %709 = vmatprep.mubr.f32.mxu0 0.0
        %710 = vmatmul.mubr.f32.gmra.mrb[0].mxu0 %v514
        %v711 = vpop.f32.mrb[0].mxu0
        %v712 = vadd.f32 0.0, %v711
        %v713 = vpop.f32.mrb[0].mxu0
        %714 = vmatprep.mubr.f32.mxu0 0.0
        %715 = vmatmul.mubr.f32.gmra.mrb[0].mxu0 %v517
        %v716 = vpop.f32.mrb[0].mxu0
        %v717 = vadd.f32 0.0, %v716
        %v718 = vpop.f32.mrb[0].mxu0
        %719 = vmatprep.mubr.f32.mxu0 0.0
        %720 = vmatmul.mubr.f32.gmra.mrb[0].mxu0 %v520
        %v721 = vpop.f32.mrb[0].mxu0
        %v722 = vadd.f32 0.0, %v721
        %v723 = vpop.f32.mrb[0].mxu0
        %724 = vmatprep.mubr.f32.mxu0 0.0
        %725 = vmatmul.mubr.f32.gmra.mrb[0].mxu0 %v523
        %v726 = vpop.f32.mrb[0].mxu0
        %v727 = vadd.f32 0.0, %v726
        %v728 = vpop.f32.mrb[0].mxu0
        %729 = vmatprep.mubr.f32.mxu0 0.0
        %730 = vmatmul.mubr.f32.gmra.mrb[0].mxu0 %v526
        %v731 = vpop.f32.mrb[0].mxu0
        %v732 = vadd.f32 0.0, %v731
        %v733 = vpop.f32.mrb[0].mxu0
        %734 = vmatprep.mubr.f32.mxu0 0.0
        %735 = vmatmul.mubr.f32.gmra.mrb[0].mxu0 %v529
        %v736 = vpop.f32.mrb[0].mxu0
        %v737 = vadd.f32 0.0, %v736
        %v738 = vpop.f32.mrb[0].mxu0
        %739 = vmatprep.mubr.f32.mxu0 0.0
        %740 = vmatmul.mubr.f32.gmra.mrb[0].mxu0 %v532
        %v741 = vpop.f32.mrb[0].mxu0
        %v742 = vadd.f32 0.0, %v741
        %v743 = vpop.f32.mrb[0].mxu0
        %744 = vmatprep.mubr.f32.mxu0 0.0
        %745 = vmatmul.mubr.f32.gmra.mrb[0].mxu0 %v535
        %v746 = vpop.f32.mrb[0].mxu0
        %v747 = vadd.f32 0.0, %v746
        %v748 = vpop.f32.mrb[0].mxu0
        %749 = vmatprep.mubr.f32.mxu0 0.0
        %750 = vmatmul.mubr.f32.gmra.mrb[0].mxu0 %v538
        %v751 = vpop.f32.mrb[0].mxu0
        %v752 = vadd.f32 0.0, %v751
        %v753 = vpop.f32.mrb[0].mxu0
        %754 = vmatprep.mubr.f32.mxu0 0.0
        %755 = vmatmul.mubr.f32.gmra.mrb[0].mxu0 %v541
        %v756 = vpop.f32.mrb[0].mxu0
        %v757 = vadd.f32 0.0, %v756
        %v758 = vpop.f32.mrb[0].mxu0
        %759 = vmatprep.mubr.f32.mxu0 0.0
        %760 = vmatmul.mubr.f32.gmra.mrb[0].mxu0 %v544
        %v761 = vpop.f32.mrb[0].mxu0
        %v762 = vadd.f32 0.0, %v761
        %v763 = vpop.f32.mrb[0].mxu0
        %764 = vmatprep.mubr.f32.mxu0 0.0
        %765 = vmatmul.mubr.f32.gmra.mrb[0].mxu0 %v547
        %v766 = vpop.f32.mrb[0].mxu0
        %v767 = vadd.f32 0.0, %v766
        %v768 = vpop.f32.mrb[0].mxu0
        %769 = vmatprep.mubr.f32.mxu0 0.0
        %770 = vmatmul.mubr.f32.gmra.mrb[0].mxu0 %v550
        %v771 = vpop.f32.mrb[0].mxu0
        %v772 = vadd.f32 0.0, %v771
        %v773 = vpop.f32.mrb[0].mxu0
        %774 = vmatprep.mubr.f32.mxu0 0.0
        %775 = vmatmul.mubr.f32.gmra.mrb[0].mxu0 %v553
        %v776 = vpop.f32.mrb[0].mxu0
        %v777 = vadd.f32 0.0, %v776
        %v778 = vpop.f32.mrb[0].mxu0
        %779 = vmatprep.mubr.f32.mxu0 0.0
        %780 = vmatmul.mubr.f32.gmra.mrb[0].mxu0 %v556
        %v781 = vpop.f32.mrb[0].mxu0
        %v782 = vadd.f32 0.0, %v781
        %v783 = vpop.f32.mrb[0].mxu0
        %784 = vmatprep.mubr.f32.mxu0 0.0
        %785 = vmatmul.mubr.f32.gmra.mrb[0].mxu0 %v559
        %v786 = vpop.f32.mrb[0].mxu0
        %v787 = vadd.f32 0.0, %v786
        %v788 = vpop.f32.mrb[0].mxu0
        %789 = vdwg.mxu0
        %791 = vset.pattern.permute.xlu0 0
        %792 = vperm.xlu0 %791, %v384
        %v793 = vpop.permute.xlu0 %792
        %796 = vset.pattern.permute.xlu0 0
        %797 = vperm.xlu0 %796, %v385
        %v798 = vpop.permute.xlu0 %797
        %801 = vset.pattern.permute.xlu0 0
        %802 = vperm.xlu0 %801, %v386
        %v803 = vpop.permute.xlu0 %802
        %806 = vset.pattern.permute.xlu0 0
        %807 = vperm.xlu0 %806, %v387
        %v808 = vpop.permute.xlu0 %807
        %811 = vset.pattern.permute.xlu0 0
        %812 = vperm.xlu0 %811, %v388
        %v813 = vpop.permute.xlu0 %812
        %816 = vset.pattern.permute.xlu0 0
        %817 = vperm.xlu0 %816, %v389
        %v818 = vpop.permute.xlu0 %817
        %821 = vset.pattern.permute.xlu0 0
        %822 = vperm.xlu0 %821, %v390
        %v823 = vpop.permute.xlu0 %822
        %826 = vset.pattern.permute.xlu0 0
        %827 = vperm.xlu0 %826, %v391
        %v828 = vpop.permute.xlu0 %827
        %831 = vset.pattern.permute.xlu0 0
        %832 = vperm.xlu0 %831, %v392
        %v833 = vpop.permute.xlu0 %832
        %836 = vset.pattern.permute.xlu0 0
        %837 = vperm.xlu0 %836, %v393
        %v838 = vpop.permute.xlu0 %837
        %841 = vset.pattern.permute.xlu0 0
        %842 = vperm.xlu0 %841, %v394
        %v843 = vpop.permute.xlu0 %842
        %846 = vset.pattern.permute.xlu0 0
        %847 = vperm.xlu0 %846, %v395
        %v848 = vpop.permute.xlu0 %847
        %851 = vset.pattern.permute.xlu0 0
        %852 = vperm.xlu0 %851, %v396
        %v853 = vpop.permute.xlu0 %852
        %856 = vset.pattern.permute.xlu0 0
        %857 = vperm.xlu0 %856, %v397
        %v858 = vpop.permute.xlu0 %857
        %861 = vset.pattern.permute.xlu0 0
        %862 = vperm.xlu0 %861, %v398
        %v863 = vpop.permute.xlu0 %862
        %866 = vset.pattern.permute.xlu0 0
        %867 = vperm.xlu0 %866, %v399
        %v868 = vpop.permute.xlu0 %867
        %871 = vset.pattern.permute.xlu0 0
        %872 = vperm.xlu0 %871, %v400
        %v873 = vpop.permute.xlu0 %872
        %876 = vset.pattern.permute.xlu0 0
        %877 = vperm.xlu0 %876, %v401
        %v878 = vpop.permute.xlu0 %877
        %881 = vset.pattern.permute.xlu0 0
        %882 = vperm.xlu0 %881, %v402
        %v883 = vpop.permute.xlu0 %882
        %886 = vset.pattern.permute.xlu0 0
        %887 = vperm.xlu0 %886, %v403
        %v888 = vpop.permute.xlu0 %887
        %891 = vset.pattern.permute.xlu0 0
        %892 = vperm.xlu0 %891, %v404
        %v893 = vpop.permute.xlu0 %892
        %896 = vset.pattern.permute.xlu0 0
        %897 = vperm.xlu0 %896, %v405
        %v898 = vpop.permute.xlu0 %897
        %901 = vset.pattern.permute.xlu0 0
        %902 = vperm.xlu0 %901, %v406
        %v903 = vpop.permute.xlu0 %902
        %906 = vset.pattern.permute.xlu0 0
        %907 = vperm.xlu0 %906, %v407
        %v908 = vpop.permute.xlu0 %907
        %911 = vset.pattern.permute.xlu0 0
        %912 = vperm.xlu0 %911, %v408
        %v913 = vpop.permute.xlu0 %912
        %916 = vset.pattern.permute.xlu0 0
        %917 = vperm.xlu0 %916, %v409
        %v918 = vpop.permute.xlu0 %917
        %921 = vset.pattern.permute.xlu0 0
        %922 = vperm.xlu0 %921, %v410
        %v923 = vpop.permute.xlu0 %922
        %926 = vset.pattern.permute.xlu0 0
        %927 = vperm.xlu0 %926, %v411
        %v928 = vpop.permute.xlu0 %927
        %931 = vset.pattern.permute.xlu0 0
        %932 = vperm.xlu0 %931, %v412
        %v933 = vpop.permute.xlu0 %932
        %936 = vset.pattern.permute.xlu0 0
        %937 = vperm.xlu0 %936, %v413
        %v938 = vpop.permute.xlu0 %937
        %941 = vset.pattern.permute.xlu0 0
        %942 = vperm.xlu0 %941, %v414
        %v943 = vpop.permute.xlu0 %942
        %946 = vset.pattern.permute.xlu0 0
        %947 = vperm.xlu0 %946, %v415
        %v948 = vpop.permute.xlu0 %947
        %v950 = vmul.f32 %v632, %v793
        %v951 = vmul.f32 %v637, %v798
        %v952 = vmul.f32 %v642, %v803
        %v953 = vmul.f32 %v647, %v808
        %v954 = vmul.f32 %v652, %v813
        %v955 = vmul.f32 %v657, %v818
        %v956 = vmul.f32 %v662, %v823
        %v957 = vmul.f32 %v667, %v828
        %v958 = vmul.f32 %v672, %v833
        %v959 = vmul.f32 %v677, %v838
        %v960 = vmul.f32 %v682, %v843
        %v961 = vmul.f32 %v687, %v848
        %v962 = vmul.f32 %v692, %v853
        %v963 = vmul.f32 %v697, %v858
        %v964 = vmul.f32 %v702, %v863
        %v965 = vmul.f32 %v707, %v868
        %v966 = vmul.f32 %v712, %v873
        %v967 = vmul.f32 %v717, %v878
        %v968 = vmul.f32 %v722, %v883
        %v969 = vmul.f32 %v727, %v888
        %v970 = vmul.f32 %v732, %v893
        %v971 = vmul.f32 %v737, %v898
        %v972 = vmul.f32 %v742, %v903
        %v973 = vmul.f32 %v747, %v908
        %v974 = vmul.f32 %v752, %v913
        %v975 = vmul.f32 %v757, %v918
        %v976 = vmul.f32 %v762, %v923
        %v977 = vmul.f32 %v767, %v928
        %v978 = vmul.f32 %v772, %v933
        %v979 = vmul.f32 %v777, %v938
        %v980 = vmul.f32 %v782, %v943
        %v981 = vmul.f32 %v787, %v948
        %v982 = vadd.f32 %v421, %v950
        %v983 = vadd.f32 %v421, %v951
        %v984 = vadd.f32 %v421, %v952
        %v985 = vadd.f32 %v421, %v953
        %v986 = vadd.f32 %v421, %v954
        %v987 = vadd.f32 %v421, %v955
        %v988 = vadd.f32 %v421, %v956
        %v989 = vadd.f32 %v421, %v957
        %v990 = vadd.f32 %v421, %v958
        %v991 = vadd.f32 %v421, %v959
        %v992 = vadd.f32 %v421, %v960
        %v993 = vadd.f32 %v421, %v961
        %v994 = vadd.f32 %v421, %v962
        %v995 = vadd.f32 %v421, %v963
        %v996 = vadd.f32 %v421, %v964
        %v997 = vadd.f32 %v421, %v965
        %v998 = vadd.f32 %v421, %v966
        %v999 = vadd.f32 %v421, %v967
        %v1000 = vadd.f32 %v421, %v968
        %v1001 = vadd.f32 %v421, %v969
        %v1002 = vadd.f32 %v421, %v970
        %v1003 = vadd.f32 %v421, %v971
        %v1004 = vadd.f32 %v421, %v972
        %v1005 = vadd.f32 %v421, %v973
        %v1006 = vadd.f32 %v421, %v974
        %v1007 = vadd.f32 %v421, %v975
        %v1008 = vadd.f32 %v421, %v976
        %v1009 = vadd.f32 %v421, %v977
        %v1010 = vadd.f32 %v421, %v978
        %v1011 = vadd.f32 %v421, %v979
        %v1012 = vadd.f32 %v421, %v980
        %v1013 = vadd.f32 %v421, %v981
        %v1014 = vld [vmem:[#allocation2 + $0x8] sm:$0xff]
        %v1015 = vld [vmem:[#allocation2 + $0x10] sm:$0xff]
        %v1016 = vld [vmem:[#allocation2 + $0x18] sm:$0xff]
        %v1017 = vld [vmem:[#allocation2 + $0x20] sm:$0xff]
        %v1018 = vld [vmem:[#allocation2 + $0x28] sm:$0xff]
        %v1019 = vld [vmem:[#allocation2 + $0x30] sm:$0xff]
        %v1020 = vld [vmem:[#allocation2 + $0x38] sm:$0xff]
        %v1021 = vld [vmem:[#allocation2 + $0x40] sm:$0xff]
        %v1022 = vld [vmem:[#allocation2 + $0x48] sm:$0xff]
        %v1023 = vld [vmem:[#allocation2 + $0x50] sm:$0xff]
        %v1024 = vld [vmem:[#allocation2 + $0x58] sm:$0xff]
        %v1025 = vld [vmem:[#allocation2 + $0x60] sm:$0xff]
        %v1026 = vld [vmem:[#allocation2 + $0x68] sm:$0xff]
        %v1027 = vld [vmem:[#allocation2 + $0x70] sm:$0xff]
        %v1028 = vld [vmem:[#allocation2 + $0x78] sm:$0xff]
        %v1029 = vld [vmem:[#allocation2 + $0x80] sm:$0xff]
        %v1030 = vld [vmem:[#allocation2 + $0x88] sm:$0xff]
        %v1031 = vld [vmem:[#allocation2 + $0x90] sm:$0xff]
        %v1032 = vld [vmem:[#allocation2 + $0x98] sm:$0xff]
        %v1033 = vld [vmem:[#allocation2 + $0xa0] sm:$0xff]
        %v1034 = vld [vmem:[#allocation2 + $0xa8] sm:$0xff]
        %v1035 = vld [vmem:[#allocation2 + $0xb0] sm:$0xff]
        %v1036 = vld [vmem:[#allocation2 + $0xb8] sm:$0xff]
        %v1037 = vld [vmem:[#allocation2 + $0xc0] sm:$0xff]
        %v1038 = vld [vmem:[#allocation2 + $0xc8] sm:$0xff]
        %v1039 = vld [vmem:[#allocation2 + $0xd0] sm:$0xff]
        %v1040 = vld [vmem:[#allocation2 + $0xd8] sm:$0xff]
        %v1041 = vld [vmem:[#allocation2 + $0xe0] sm:$0xff]
        %v1042 = vld [vmem:[#allocation2 + $0xe8] sm:$0xff]
        %v1043 = vld [vmem:[#allocation2 + $0xf0] sm:$0xff]
        %v1044 = vld [vmem:[#allocation2 + $0xf8] sm:$0xff]
        %v1045 = vld [vmem:[#allocation2 + $0x100] sm:$0xff]
        %s1046 = scalar_lea.vmem %s2, 20
        %v1047 = vld [vmem:[%s1046] sm:$0xf]
        %v1048 = vld [vmem:[%s1046 + $0x4] sm:$0xf]
        %v1049 = vld [vmem:[%s1046 + $0x8] sm:$0xf]
        %v1050 = vld [vmem:[%s1046 + $0xc] sm:$0xf]
        %v1051 = vld [vmem:[%s1046 + $0x10] sm:$0x3]
        %v1052 = vunpack.c.l.bf16 %v1047
        %v1053 = vunpack.c.l.bf16 %v1048
        %v1054 = vunpack.c.l.bf16 %v1049
        %v1055 = vunpack.c.l.bf16 %v1050
        %v1056 = vunpack.c.l.bf16 %v1051
        %v1058 = vsel %vm281, %v1014, 0
        %v1061 = vsel %vm281, %v1015, 0
        %v1064 = vsel %vm281, %v1016, 0
        %v1067 = vsel %vm281, %v1017, 0
        %v1070 = vsel %vm281, %v1018, 0
        %v1073 = vsel %vm281, %v1019, 0
        %v1076 = vsel %vm281, %v1020, 0
        %v1079 = vsel %vm281, %v1021, 0
        %v1082 = vsel %vm281, %v1022, 0
        %v1085 = vsel %vm281, %v1023, 0
        %v1088 = vsel %vm281, %v1024, 0
        %v1091 = vsel %vm281, %v1025, 0
        %v1094 = vsel %vm281, %v1026, 0
        %v1097 = vsel %vm281, %v1027, 0
        %v1100 = vsel %vm281, %v1028, 0
        %v1103 = vsel %vm281, %v1029, 0
        %v1106 = vsel %vm281, %v1030, 0
        %v1109 = vsel %vm281, %v1031, 0
        %v1112 = vsel %vm281, %v1032, 0
        %v1115 = vsel %vm281, %v1033, 0
        %v1118 = vsel %vm281, %v1034, 0
        %v1121 = vsel %vm281, %v1035, 0
        %v1124 = vsel %vm281, %v1036, 0
        %v1127 = vsel %vm281, %v1037, 0
        %v1130 = vsel %vm281, %v1038, 0
        %v1133 = vsel %vm281, %v1039, 0
        %v1136 = vsel %vm281, %v1040, 0
        %v1139 = vsel %vm281, %v1041, 0
        %v1142 = vsel %vm281, %v1042, 0
        %v1145 = vsel %vm281, %v1043, 0
        %v1148 = vsel %vm281, %v1044, 0
        %v1151 = vsel %vm281, %v1045, 0
        %v1154 = vsel %vm561, %v1056, 0
        %1156 = vmatprep.subr.mxu0 0.0
        %1157 = vmatpush1.msra.mxu0 %v1052
        %1158 = vmatprep.subr.mxu0 0.0
        %1159 = vmatpush1.msra.mxu0 %v1053
        %1160 = vmatprep.subr.mxu0 0.0
        %1161 = vmatpush1.msra.mxu0 %v1054
        %1162 = vmatprep.subr.mxu0 0.0
        %1163 = vmatpush1.msra.mxu0 %v1055
        %1164 = vmatprep.subr.mxu0 0.0
        %1165 = vmatpush1.msra.mxu0 %v1154
        %1166 = vmatprep.subr.mxu0 0.0
        %1167 = vmatpush1.msra.mxu0 0.0
        %1168 = vmatprep.subr.mxu0 0.0
        %1169 = vmatpush1.msra.mxu0 0.0
        %1170 = vmatprep.subr.mxu0 0.0
        %1171 = vmatpush1.msra.mxu0 0.0
        %1172 = vmatprep.subr.mxu0 0.0
        %1173 = vmatpush1.msra.mxu0 0.0
        %1174 = vmatprep.subr.mxu0 0.0
        %1175 = vmatpush1.msra.mxu0 0.0
        %1176 = vmatprep.subr.mxu0 0.0
        %1177 = vmatpush1.msra.mxu0 0.0
        %1178 = vmatprep.subr.mxu0 0.0
        %1179 = vmatpush1.msra.mxu0 0.0
        %1180 = vmatprep.subr.mxu0 0.0
        %1181 = vmatpush1.msra.mxu0 0.0
        %1182 = vmatprep.subr.mxu0 0.0
        %1183 = vmatpush1.msra.mxu0 0.0
        %1184 = vmatprep.subr.mxu0 0.0
        %1185 = vmatpush1.msra.mxu0 0.0
        %1186 = vmatprep.subr.mxu0 0.0
        %1187 = vmatpush1.msra.mxu0 0.0
        %1188 = vmatprep.subr.mxu0 0.0
        %1189 = vmatpush1.msra.mxu0 0.0
        %1190 = vmatprep.subr.mxu0 0.0
        %1191 = vmatpush1.msra.mxu0 0.0
        %1192 = vmatprep.subr.mxu0 0.0
        %1193 = vmatpush1.msra.mxu0 0.0
        %1194 = vmatprep.subr.mxu0 0.0
        %1195 = vmatpush1.msra.mxu0 0.0
        %1196 = vmatprep.subr.mxu0 0.0
        %1197 = vmatpush1.msra.mxu0 0.0
        %1198 = vmatprep.subr.mxu0 0.0
        %1199 = vmatpush1.msra.mxu0 0.0
        %1200 = vmatprep.subr.mxu0 0.0
        %1201 = vmatpush1.msra.mxu0 0.0
        %1202 = vmatprep.subr.mxu0 0.0
        %1203 = vmatpush1.msra.mxu0 0.0
        %1204 = vmatprep.subr.mxu0 0.0
        %1205 = vmatpush1.msra.mxu0 0.0
        %1206 = vmatprep.subr.mxu0 0.0
        %1207 = vmatpush1.msra.mxu0 0.0
        %1208 = vmatprep.subr.mxu0 0.0
        %1209 = vmatpush1.msra.mxu0 0.0
        %1210 = vmatprep.subr.mxu0 0.0
        %1211 = vmatpush1.msra.mxu0 0.0
        %1212 = vmatprep.subr.mxu0 0.0
        %1213 = vmatpush1.msra.mxu0 0.0
        %1214 = vmatprep.subr.mxu0 0.0
        %1215 = vmatpush1.msra.mxu0 0.0
        %1216 = vmatprep.subr.mxu0 0.0
        %1217 = vmatpush1.msra.mxu0 0.0
        %1218 = vmatprep.subr.mxu0 0.0
        %1219 = vmatpush1.msra.mxu0 0.0
        %1220 = vmatprep.mubr.f32.mxu0 0.0
        %1221 = vmatmul.mubr.f32.gmra.mrb[0].mxu0 %v1058
        %v1222 = vpop.f32.mrb[0].mxu0
        %v1223 = vadd.f32 0.0, %v1222
        %v1224 = vpop.f32.mrb[0].mxu0
        %1225 = vmatprep.mubr.f32.mxu0 0.0
        %1226 = vmatmul.mubr.f32.gmra.mrb[0].mxu0 %v1061
        %v1227 = vpop.f32.mrb[0].mxu0
        %v1228 = vadd.f32 0.0, %v1227
        %v1229 = vpop.f32.mrb[0].mxu0
        %1230 = vmatprep.mubr.f32.mxu0 0.0
        %1231 = vmatmul.mubr.f32.gmra.mrb[0].mxu0 %v1064
        %v1232 = vpop.f32.mrb[0].mxu0
        %v1233 = vadd.f32 0.0, %v1232
        %v1234 = vpop.f32.mrb[0].mxu0
        %1235 = vmatprep.mubr.f32.mxu0 0.0
        %1236 = vmatmul.mubr.f32.gmra.mrb[0].mxu0 %v1067
        %v1237 = vpop.f32.mrb[0].mxu0
        %v1238 = vadd.f32 0.0, %v1237
        %v1239 = vpop.f32.mrb[0].mxu0
        %1240 = vmatprep.mubr.f32.mxu0 0.0
        %1241 = vmatmul.mubr.f32.gmra.mrb[0].mxu0 %v1070
        %v1242 = vpop.f32.mrb[0].mxu0
        %v1243 = vadd.f32 0.0, %v1242
        %v1244 = vpop.f32.mrb[0].mxu0
        %1245 = vmatprep.mubr.f32.mxu0 0.0
        %1246 = vmatmul.mubr.f32.gmra.mrb[0].mxu0 %v1073
        %v1247 = vpop.f32.mrb[0].mxu0
        %v1248 = vadd.f32 0.0, %v1247
        %v1249 = vpop.f32.mrb[0].mxu0
        %1250 = vmatprep.mubr.f32.mxu0 0.0
        %1251 = vmatmul.mubr.f32.gmra.mrb[0].mxu0 %v1076
        %v1252 = vpop.f32.mrb[0].mxu0
        %v1253 = vadd.f32 0.0, %v1252
        %v1254 = vpop.f32.mrb[0].mxu0
        %1255 = vmatprep.mubr.f32.mxu0 0.0
        %1256 = vmatmul.mubr.f32.gmra.mrb[0].mxu0 %v1079
        %v1257 = vpop.f32.mrb[0].mxu0
        %v1258 = vadd.f32 0.0, %v1257
        %v1259 = vpop.f32.mrb[0].mxu0
        %1260 = vmatprep.mubr.f32.mxu0 0.0
        %1261 = vmatmul.mubr.f32.gmra.mrb[0].mxu0 %v1082
        %v1262 = vpop.f32.mrb[0].mxu0
        %v1263 = vadd.f32 0.0, %v1262
        %v1264 = vpop.f32.mrb[0].mxu0
        %1265 = vmatprep.mubr.f32.mxu0 0.0
        %1266 = vmatmul.mubr.f32.gmra.mrb[0].mxu0 %v1085
        %v1267 = vpop.f32.mrb[0].mxu0
        %v1268 = vadd.f32 0.0, %v1267
        %v1269 = vpop.f32.mrb[0].mxu0
        %1270 = vmatprep.mubr.f32.mxu0 0.0
        %1271 = vmatmul.mubr.f32.gmra.mrb[0].mxu0 %v1088
        %v1272 = vpop.f32.mrb[0].mxu0
        %v1273 = vadd.f32 0.0, %v1272
        %v1274 = vpop.f32.mrb[0].mxu0
        %1275 = vmatprep.mubr.f32.mxu0 0.0
        %1276 = vmatmul.mubr.f32.gmra.mrb[0].mxu0 %v1091
        %v1277 = vpop.f32.mrb[0].mxu0
        %v1278 = vadd.f32 0.0, %v1277
        %v1279 = vpop.f32.mrb[0].mxu0
        %1280 = vmatprep.mubr.f32.mxu0 0.0
        %1281 = vmatmul.mubr.f32.gmra.mrb[0].mxu0 %v1094
        %v1282 = vpop.f32.mrb[0].mxu0
        %v1283 = vadd.f32 0.0, %v1282
        %v1284 = vpop.f32.mrb[0].mxu0
        %1285 = vmatprep.mubr.f32.mxu0 0.0
        %1286 = vmatmul.mubr.f32.gmra.mrb[0].mxu0 %v1097
        %v1287 = vpop.f32.mrb[0].mxu0
        %v1288 = vadd.f32 0.0, %v1287
        %v1289 = vpop.f32.mrb[0].mxu0
        %1290 = vmatprep.mubr.f32.mxu0 0.0
        %1291 = vmatmul.mubr.f32.gmra.mrb[0].mxu0 %v1100
        %v1292 = vpop.f32.mrb[0].mxu0
        %v1293 = vadd.f32 0.0, %v1292
        %v1294 = vpop.f32.mrb[0].mxu0
        %1295 = vmatprep.mubr.f32.mxu0 0.0
        %1296 = vmatmul.mubr.f32.gmra.mrb[0].mxu0 %v1103
        %v1297 = vpop.f32.mrb[0].mxu0
        %v1298 = vadd.f32 0.0, %v1297
        %v1299 = vpop.f32.mrb[0].mxu0
        %1300 = vmatprep.mubr.f32.mxu0 0.0
        %1301 = vmatmul.mubr.f32.gmra.mrb[0].mxu0 %v1106
        %v1302 = vpop.f32.mrb[0].mxu0
        %v1303 = vadd.f32 0.0, %v1302
        %v1304 = vpop.f32.mrb[0].mxu0
        %1305 = vmatprep.mubr.f32.mxu0 0.0
        %1306 = vmatmul.mubr.f32.gmra.mrb[0].mxu0 %v1109
        %v1307 = vpop.f32.mrb[0].mxu0
        %v1308 = vadd.f32 0.0, %v1307
        %v1309 = vpop.f32.mrb[0].mxu0
        %1310 = vmatprep.mubr.f32.mxu0 0.0
        %1311 = vmatmul.mubr.f32.gmra.mrb[0].mxu0 %v1112
        %v1312 = vpop.f32.mrb[0].mxu0
        %v1313 = vadd.f32 0.0, %v1312
        %v1314 = vpop.f32.mrb[0].mxu0
        %1315 = vmatprep.mubr.f32.mxu0 0.0
        %1316 = vmatmul.mubr.f32.gmra.mrb[0].mxu0 %v1115
        %v1317 = vpop.f32.mrb[0].mxu0
        %v1318 = vadd.f32 0.0, %v1317
        %v1319 = vpop.f32.mrb[0].mxu0
        %1320 = vmatprep.mubr.f32.mxu0 0.0
        %1321 = vmatmul.mubr.f32.gmra.mrb[0].mxu0 %v1118
        %v1322 = vpop.f32.mrb[0].mxu0
        %v1323 = vadd.f32 0.0, %v1322
        %v1324 = vpop.f32.mrb[0].mxu0
        %1325 = vmatprep.mubr.f32.mxu0 0.0
        %1326 = vmatmul.mubr.f32.gmra.mrb[0].mxu0 %v1121
        %v1327 = vpop.f32.mrb[0].mxu0
        %v1328 = vadd.f32 0.0, %v1327
        %v1329 = vpop.f32.mrb[0].mxu0
        %1330 = vmatprep.mubr.f32.mxu0 0.0
        %1331 = vmatmul.mubr.f32.gmra.mrb[0].mxu0 %v1124
        %v1332 = vpop.f32.mrb[0].mxu0
        %v1333 = vadd.f32 0.0, %v1332
        %v1334 = vpop.f32.mrb[0].mxu0
        %1335 = vmatprep.mubr.f32.mxu0 0.0
        %1336 = vmatmul.mubr.f32.gmra.mrb[0].mxu0 %v1127
        %v1337 = vpop.f32.mrb[0].mxu0
        %v1338 = vadd.f32 0.0, %v1337
        %v1339 = vpop.f32.mrb[0].mxu0
        %1340 = vmatprep.mubr.f32.mxu0 0.0
        %1341 = vmatmul.mubr.f32.gmra.mrb[0].mxu0 %v1130
        %v1342 = vpop.f32.mrb[0].mxu0
        %v1343 = vadd.f32 0.0, %v1342
        %v1344 = vpop.f32.mrb[0].mxu0
        %1345 = vmatprep.mubr.f32.mxu0 0.0
        %1346 = vmatmul.mubr.f32.gmra.mrb[0].mxu0 %v1133
        %v1347 = vpop.f32.mrb[0].mxu0
        %v1348 = vadd.f32 0.0, %v1347
        %v1349 = vpop.f32.mrb[0].mxu0
        %1350 = vmatprep.mubr.f32.mxu0 0.0
        %1351 = vmatmul.mubr.f32.gmra.mrb[0].mxu0 %v1136
        %v1352 = vpop.f32.mrb[0].mxu0
        %v1353 = vadd.f32 0.0, %v1352
        %v1354 = vpop.f32.mrb[0].mxu0
        %1355 = vmatprep.mubr.f32.mxu0 0.0
        %1356 = vmatmul.mubr.f32.gmra.mrb[0].mxu0 %v1139
        %v1357 = vpop.f32.mrb[0].mxu0
        %v1358 = vadd.f32 0.0, %v1357
        %v1359 = vpop.f32.mrb[0].mxu0
        %1360 = vmatprep.mubr.f32.mxu0 0.0
        %1361 = vmatmul.mubr.f32.gmra.mrb[0].mxu0 %v1142
        %v1362 = vpop.f32.mrb[0].mxu0
        %v1363 = vadd.f32 0.0, %v1362
        %v1364 = vpop.f32.mrb[0].mxu0
        %1365 = vmatprep.mubr.f32.mxu0 0.0
        %1366 = vmatmul.mubr.f32.gmra.mrb[0].mxu0 %v1145
        %v1367 = vpop.f32.mrb[0].mxu0
        %v1368 = vadd.f32 0.0, %v1367
        %v1369 = vpop.f32.mrb[0].mxu0
        %1370 = vmatprep.mubr.f32.mxu0 0.0
        %1371 = vmatmul.mubr.f32.gmra.mrb[0].mxu0 %v1148
        %v1372 = vpop.f32.mrb[0].mxu0
        %v1373 = vadd.f32 0.0, %v1372
        %v1374 = vpop.f32.mrb[0].mxu0
        %1375 = vmatprep.mubr.f32.mxu0 0.0
        %1376 = vmatmul.mubr.f32.gmra.mrb[0].mxu0 %v1151
        %v1377 = vpop.f32.mrb[0].mxu0
        %v1378 = vadd.f32 0.0, %v1377
        %v1379 = vpop.f32.mrb[0].mxu0
        %1380 = vdwg.mxu0
        %v1381 = vadd.f32 %v982, %v1223
        %v1382 = vadd.f32 %v983, %v1228
        %v1383 = vadd.f32 %v984, %v1233
        %v1384 = vadd.f32 %v985, %v1238
        %v1385 = vadd.f32 %v986, %v1243
        %v1386 = vadd.f32 %v987, %v1248
        %v1387 = vadd.f32 %v988, %v1253
        %v1388 = vadd.f32 %v989, %v1258
        %v1389 = vadd.f32 %v990, %v1263
        %v1390 = vadd.f32 %v991, %v1268
        %v1391 = vadd.f32 %v992, %v1273
        %v1392 = vadd.f32 %v993, %v1278
        %v1393 = vadd.f32 %v994, %v1283
        %v1394 = vadd.f32 %v995, %v1288
        %v1395 = vadd.f32 %v996, %v1293
        %v1396 = vadd.f32 %v997, %v1298
        %v1397 = vadd.f32 %v998, %v1303
        %v1398 = vadd.f32 %v999, %v1308
        %v1399 = vadd.f32 %v1000, %v1313
        %v1400 = vadd.f32 %v1001, %v1318
        %v1401 = vadd.f32 %v1002, %v1323
        %v1402 = vadd.f32 %v1003, %v1328
        %v1403 = vadd.f32 %v1004, %v1333
        %v1404 = vadd.f32 %v1005, %v1338
        %v1405 = vadd.f32 %v1006, %v1343
        %v1406 = vadd.f32 %v1007, %v1348
        %v1407 = vadd.f32 %v1008, %v1353
        %v1408 = vadd.f32 %v1009, %v1358
        %v1409 = vadd.f32 %v1010, %v1363
        %v1410 = vadd.f32 %v1011, %v1368
        %v1411 = vadd.f32 %v1012, %v1373
        %v1412 = vadd.f32 %v1013, %v1378
        %v1413 = vld [vmem:[#allocation2 + $0x9] sm:$0xff]
        %v1414 = vld [vmem:[#allocation2 + $0x11] sm:$0xff]
        %v1415 = vld [vmem:[#allocation2 + $0x19] sm:$0xff]
        %v1416 = vld [vmem:[#allocation2 + $0x21] sm:$0xff]
        %v1417 = vld [vmem:[#allocation2 + $0x29] sm:$0xff]
        %v1418 = vld [vmem:[#allocation2 + $0x31] sm:$0xff]
        %v1419 = vld [vmem:[#allocation2 + $0x39] sm:$0xff]
        %v1420 = vld [vmem:[#allocation2 + $0x41] sm:$0xff]
        %v1421 = vld [vmem:[#allocation2 + $0x49] sm:$0xff]
        %v1422 = vld [vmem:[#allocation2 + $0x51] sm:$0xff]
        %v1423 = vld [vmem:[#allocation2 + $0x59] sm:$0xff]
        %v1424 = vld [vmem:[#allocation2 + $0x61] sm:$0xff]
        %v1425 = vld [vmem:[#allocation2 + $0x69] sm:$0xff]
        %v1426 = vld [vmem:[#allocation2 + $0x71] sm:$0xff]
        %v1427 = vld [vmem:[#allocation2 + $0x79] sm:$0xff]
        %v1428 = vld [vmem:[#allocation2 + $0x81] sm:$0xff]
        %v1429 = vld [vmem:[#allocation2 + $0x89] sm:$0xff]
        %v1430 = vld [vmem:[#allocation2 + $0x91] sm:$0xff]
        %v1431 = vld [vmem:[#allocation2 + $0x99] sm:$0xff]
        %v1432 = vld [vmem:[#allocation2 + $0xa1] sm:$0xff]
        %v1433 = vld [vmem:[#allocation2 + $0xa9] sm:$0xff]
        %v1434 = vld [vmem:[#allocation2 + $0xb1] sm:$0xff]
        %v1435 = vld [vmem:[#allocation2 + $0xb9] sm:$0xff]
        %v1436 = vld [vmem:[#allocation2 + $0xc1] sm:$0xff]
        %v1437 = vld [vmem:[#allocation2 + $0xc9] sm:$0xff]
        %v1438 = vld [vmem:[#allocation2 + $0xd1] sm:$0xff]
        %v1439 = vld [vmem:[#allocation2 + $0xd9] sm:$0xff]
        %v1440 = vld [vmem:[#allocation2 + $0xe1] sm:$0xff]
        %v1441 = vld [vmem:[#allocation2 + $0xe9] sm:$0xff]
        %v1442 = vld [vmem:[#allocation2 + $0xf1] sm:$0xff]
        %v1443 = vld [vmem:[#allocation2 + $0xf9] sm:$0xff]
        %v1444 = vld [vmem:[#allocation2 + $0x101] sm:$0xff]
        %s1445 = scalar_lea.vmem %s2, 40
        %v1446 = vld [vmem:[%s1445] sm:$0xf]
        %v1447 = vld [vmem:[%s1445 + $0x4] sm:$0xf]
        %v1448 = vld [vmem:[%s1445 + $0x8] sm:$0xf]
        %v1449 = vld [vmem:[%s1445 + $0xc] sm:$0xf]
        %v1450 = vld [vmem:[%s1445 + $0x10] sm:$0x3]
        %v1451 = vunpack.c.l.bf16 %v1446
        %v1452 = vunpack.c.l.bf16 %v1447
        %v1453 = vunpack.c.l.bf16 %v1448
        %v1454 = vunpack.c.l.bf16 %v1449
        %v1455 = vunpack.c.l.bf16 %v1450
        %v1457 = vsel %vm281, %v1413, 0
        %v1460 = vsel %vm281, %v1414, 0
        %v1463 = vsel %vm281, %v1415, 0
        %v1466 = vsel %vm281, %v1416, 0
        %v1469 = vsel %vm281, %v1417, 0
        %v1472 = vsel %vm281, %v1418, 0
        %v1475 = vsel %vm281, %v1419, 0
        %v1478 = vsel %vm281, %v1420, 0
        %v1481 = vsel %vm281, %v1421, 0
        %v1484 = vsel %vm281, %v1422, 0
        %v1487 = vsel %vm281, %v1423, 0
        %v1490 = vsel %vm281, %v1424, 0
        %v1493 = vsel %vm281, %v1425, 0
        %v1496 = vsel %vm281, %v1426, 0
        %v1499 = vsel %vm281, %v1427, 0
        %v1502 = vsel %vm281, %v1428, 0
        %v1505 = vsel %vm281, %v1429, 0
        %v1508 = vsel %vm281, %v1430, 0
        %v1511 = vsel %vm281, %v1431, 0
        %v1514 = vsel %vm281, %v1432, 0
        %v1517 = vsel %vm281, %v1433, 0
        %v1520 = vsel %vm281, %v1434, 0
        %v1523 = vsel %vm281, %v1435, 0
        %v1526 = vsel %vm281, %v1436, 0
        %v1529 = vsel %vm281, %v1437, 0
        %v1532 = vsel %vm281, %v1438, 0
        %v1535 = vsel %vm281, %v1439, 0
        %v1538 = vsel %vm281, %v1440, 0
        %v1541 = vsel %vm281, %v1441, 0
        %v1544 = vsel %vm281, %v1442, 0
        %v1547 = vsel %vm281, %v1443, 0
        %v1550 = vsel %vm281, %v1444, 0
        %v1553 = vsel %vm561, %v1455, 0
        %1555 = vmatprep.subr.mxu0 0.0
        %1556 = vmatpush1.msra.mxu0 %v1451
        %1557 = vmatprep.subr.mxu0 0.0
        %1558 = vmatpush1.msra.mxu0 %v1452
        %1559 = vmatprep.subr.mxu0 0.0
        %1560 = vmatpush1.msra.mxu0 %v1453
        %1561 = vmatprep.subr.mxu0 0.0
        %1562 = vmatpush1.msra.mxu0 %v1454
        %1563 = vmatprep.subr.mxu0 0.0
        %1564 = vmatpush1.msra.mxu0 %v1553
        %1565 = vmatprep.subr.mxu0 0.0
        %1566 = vmatpush1.msra.mxu0 0.0
        %1567 = vmatprep.subr.mxu0 0.0
        %1568 = vmatpush1.msra.mxu0 0.0
        %1569 = vmatprep.subr.mxu0 0.0
        %1570 = vmatpush1.msra.mxu0 0.0
        %1571 = vmatprep.subr.mxu0 0.0
        %1572 = vmatpush1.msra.mxu0 0.0
        %1573 = vmatprep.subr.mxu0 0.0
        %1574 = vmatpush1.msra.mxu0 0.0
        %1575 = vmatprep.subr.mxu0 0.0
        %1576 = vmatpush1.msra.mxu0 0.0
        %1577 = vmatprep.subr.mxu0 0.0
        %1578 = vmatpush1.msra.mxu0 0.0
        %1579 = vmatprep.subr.mxu0 0.0
        %1580 = vmatpush1.msra.mxu0 0.0
        %1581 = vmatprep.subr.mxu0 0.0
        %1582 = vmatpush1.msra.mxu0 0.0
        %1583 = vmatprep.subr.mxu0 0.0
        %1584 = vmatpush1.msra.mxu0 0.0
        %1585 = vmatprep.subr.mxu0 0.0
        %1586 = vmatpush1.msra.mxu0 0.0
        %1587 = vmatprep.subr.mxu0 0.0
        %1588 = vmatpush1.msra.mxu0 0.0
        %1589 = vmatprep.subr.mxu0 0.0
        %1590 = vmatpush1.msra.mxu0 0.0
        %1591 = vmatprep.subr.mxu0 0.0
        %1592 = vmatpush1.msra.mxu0 0.0
        %1593 = vmatprep.subr.mxu0 0.0
        %1594 = vmatpush1.msra.mxu0 0.0
        %1595 = vmatprep.subr.mxu0 0.0
        %1596 = vmatpush1.msra.mxu0 0.0
        %1597 = vmatprep.subr.mxu0 0.0
        %1598 = vmatpush1.msra.mxu0 0.0
        %1599 = vmatprep.subr.mxu0 0.0
        %1600 = vmatpush1.msra.mxu0 0.0
        %1601 = vmatprep.subr.mxu0 0.0
        %1602 = vmatpush1.msra.mxu0 0.0
        %1603 = vmatprep.subr.mxu0 0.0
        %1604 = vmatpush1.msra.mxu0 0.0
        %1605 = vmatprep.subr.mxu0 0.0
        %1606 = vmatpush1.msra.mxu0 0.0
        %1607 = vmatprep.subr.mxu0 0.0
        %1608 = vmatpush1.msra.mxu0 0.0
        %1609 = vmatprep.subr.mxu0 0.0
        %1610 = vmatpush1.msra.mxu0 0.0
        %1611 = vmatprep.subr.mxu0 0.0
        %1612 = vmatpush1.msra.mxu0 0.0
        %1613 = vmatprep.subr.mxu0 0.0
        %1614 = vmatpush1.msra.mxu0 0.0
        %1615 = vmatprep.subr.mxu0 0.0
        %1616 = vmatpush1.msra.mxu0 0.0
        %1617 = vmatprep.subr.mxu0 0.0
        %1618 = vmatpush1.msra.mxu0 0.0
        %1619 = vmatprep.mubr.f32.mxu0 0.0
        %1620 = vmatmul.mubr.f32.gmra.mrb[0].mxu0 %v1457
        %v1621 = vpop.f32.mrb[0].mxu0
        %v1622 = vadd.f32 0.0, %v1621
        %v1623 = vpop.f32.mrb[0].mxu0
        %1624 = vmatprep.mubr.f32.mxu0 0.0
        %1625 = vmatmul.mubr.f32.gmra.mrb[0].mxu0 %v1460
        %v1626 = vpop.f32.mrb[0].mxu0
        %v1627 = vadd.f32 0.0, %v1626
        %v1628 = vpop.f32.mrb[0].mxu0
        %1629 = vmatprep.mubr.f32.mxu0 0.0
        %1630 = vmatmul.mubr.f32.gmra.mrb[0].mxu0 %v1463
        %v1631 = vpop.f32.mrb[0].mxu0
        %v1632 = vadd.f32 0.0, %v1631
        %v1633 = vpop.f32.mrb[0].mxu0
        %1634 = vmatprep.mubr.f32.mxu0 0.0
        %1635 = vmatmul.mubr.f32.gmra.mrb[0].mxu0 %v1466
        %v1636 = vpop.f32.mrb[0].mxu0
        %v1637 = vadd.f32 0.0, %v1636
        %v1638 = vpop.f32.mrb[0].mxu0
        %1639 = vmatprep.mubr.f32.mxu0 0.0
        %1640 = vmatmul.mubr.f32.gmra.mrb[0].mxu0 %v1469
        %v1641 = vpop.f32.mrb[0].mxu0
        %v1642 = vadd.f32 0.0, %v1641
        %v1643 = vpop.f32.mrb[0].mxu0
        %1644 = vmatprep.mubr.f32.mxu0 0.0
        %1645 = vmatmul.mubr.f32.gmra.mrb[0].mxu0 %v1472
        %v1646 = vpop.f32.mrb[0].mxu0
        %v1647 = vadd.f32 0.0, %v1646
        %v1648 = vpop.f32.mrb[0].mxu0
        %1649 = vmatprep.mubr.f32.mxu0 0.0
        %1650 = vmatmul.mubr.f32.gmra.mrb[0].mxu0 %v1475
        %v1651 = vpop.f32.mrb[0].mxu0
        %v1652 = vadd.f32 0.0, %v1651
        %v1653 = vpop.f32.mrb[0].mxu0
        %1654 = vmatprep.mubr.f32.mxu0 0.0
        %1655 = vmatmul.mubr.f32.gmra.mrb[0].mxu0 %v1478
        %v1656 = vpop.f32.mrb[0].mxu0
        %v1657 = vadd.f32 0.0, %v1656
        %v1658 = vpop.f32.mrb[0].mxu0
        %1659 = vmatprep.mubr.f32.mxu0 0.0
        %1660 = vmatmul.mubr.f32.gmra.mrb[0].mxu0 %v1481
        %v1661 = vpop.f32.mrb[0].mxu0
        %v1662 = vadd.f32 0.0, %v1661
        %v1663 = vpop.f32.mrb[0].mxu0
        %1664 = vmatprep.mubr.f32.mxu0 0.0
        %1665 = vmatmul.mubr.f32.gmra.mrb[0].mxu0 %v1484
        %v1666 = vpop.f32.mrb[0].mxu0
        %v1667 = vadd.f32 0.0, %v1666
        %v1668 = vpop.f32.mrb[0].mxu0
        %1669 = vmatprep.mubr.f32.mxu0 0.0
        %1670 = vmatmul.mubr.f32.gmra.mrb[0].mxu0 %v1487
        %v1671 = vpop.f32.mrb[0].mxu0
        %v1672 = vadd.f32 0.0, %v1671
        %v1673 = vpop.f32.mrb[0].mxu0
        %1674 = vmatprep.mubr.f32.mxu0 0.0
        %1675 = vmatmul.mubr.f32.gmra.mrb[0].mxu0 %v1490
        %v1676 = vpop.f32.mrb[0].mxu0
        %v1677 = vadd.f32 0.0, %v1676
        %v1678 = vpop.f32.mrb[0].mxu0
        %1679 = vmatprep.mubr.f32.mxu0 0.0
        %1680 = vmatmul.mubr.f32.gmra.mrb[0].mxu0 %v1493
        %v1681 = vpop.f32.mrb[0].mxu0
        %v1682 = vadd.f32 0.0, %v1681
        %v1683 = vpop.f32.mrb[0].mxu0
        %1684 = vmatprep.mubr.f32.mxu0 0.0
        %1685 = vmatmul.mubr.f32.gmra.mrb[0].mxu0 %v1496
        %v1686 = vpop.f32.mrb[0].mxu0
        %v1687 = vadd.f32 0.0, %v1686
        %v1688 = vpop.f32.mrb[0].mxu0
        %1689 = vmatprep.mubr.f32.mxu0 0.0
        %1690 = vmatmul.mubr.f32.gmra.mrb[0].mxu0 %v1499
        %v1691 = vpop.f32.mrb[0].mxu0
        %v1692 = vadd.f32 0.0, %v1691
        %v1693 = vpop.f32.mrb[0].mxu0
        %1694 = vmatprep.mubr.f32.mxu0 0.0
        %1695 = vmatmul.mubr.f32.gmra.mrb[0].mxu0 %v1502
        %v1696 = vpop.f32.mrb[0].mxu0
        %v1697 = vadd.f32 0.0, %v1696
        %v1698 = vpop.f32.mrb[0].mxu0
        %1699 = vmatprep.mubr.f32.mxu0 0.0
        %1700 = vmatmul.mubr.f32.gmra.mrb[0].mxu0 %v1505
        %v1701 = vpop.f32.mrb[0].mxu0
        %v1702 = vadd.f32 0.0, %v1701
        %v1703 = vpop.f32.mrb[0].mxu0
        %1704 = vmatprep.mubr.f32.mxu0 0.0
        %1705 = vmatmul.mubr.f32.gmra.mrb[0].mxu0 %v1508
        %v1706 = vpop.f32.mrb[0].mxu0
        %v1707 = vadd.f32 0.0, %v1706
        %v1708 = vpop.f32.mrb[0].mxu0
        %1709 = vmatprep.mubr.f32.mxu0 0.0
        %1710 = vmatmul.mubr.f32.gmra.mrb[0].mxu0 %v1511
        %v1711 = vpop.f32.mrb[0].mxu0
        %v1712 = vadd.f32 0.0, %v1711
        %v1713 = vpop.f32.mrb[0].mxu0
        %1714 = vmatprep.mubr.f32.mxu0 0.0
        %1715 = vmatmul.mubr.f32.gmra.mrb[0].mxu0 %v1514
        %v1716 = vpop.f32.mrb[0].mxu0
        %v1717 = vadd.f32 0.0, %v1716
        %v1718 = vpop.f32.mrb[0].mxu0
        %1719 = vmatprep.mubr.f32.mxu0 0.0
        %1720 = vmatmul.mubr.f32.gmra.mrb[0].mxu0 %v1517
        %v1721 = vpop.f32.mrb[0].mxu0
        %v1722 = vadd.f32 0.0, %v1721
        %v1723 = vpop.f32.mrb[0].mxu0
        %1724 = vmatprep.mubr.f32.mxu0 0.0
        %1725 = vmatmul.mubr.f32.gmra.mrb[0].mxu0 %v1520
        %v1726 = vpop.f32.mrb[0].mxu0
        %v1727 = vadd.f32 0.0, %v1726
        %v1728 = vpop.f32.mrb[0].mxu0
        %1729 = vmatprep.mubr.f32.mxu0 0.0
        %1730 = vmatmul.mubr.f32.gmra.mrb[0].mxu0 %v1523
        %v1731 = vpop.f32.mrb[0].mxu0
        %v1732 = vadd.f32 0.0, %v1731
        %v1733 = vpop.f32.mrb[0].mxu0
        %1734 = vmatprep.mubr.f32.mxu0 0.0
        %1735 = vmatmul.mubr.f32.gmra.mrb[0].mxu0 %v1526
        %v1736 = vpop.f32.mrb[0].mxu0
        %v1737 = vadd.f32 0.0, %v1736
        %v1738 = vpop.f32.mrb[0].mxu0
        %1739 = vmatprep.mubr.f32.mxu0 0.0
        %1740 = vmatmul.mubr.f32.gmra.mrb[0].mxu0 %v1529
        %v1741 = vpop.f32.mrb[0].mxu0
        %v1742 = vadd.f32 0.0, %v1741
        %v1743 = vpop.f32.mrb[0].mxu0
        %1744 = vmatprep.mubr.f32.mxu0 0.0
        %1745 = vmatmul.mubr.f32.gmra.mrb[0].mxu0 %v1532
        %v1746 = vpop.f32.mrb[0].mxu0
        %v1747 = vadd.f32 0.0, %v1746
        %v1748 = vpop.f32.mrb[0].mxu0
        %1749 = vmatprep.mubr.f32.mxu0 0.0
        %1750 = vmatmul.mubr.f32.gmra.mrb[0].mxu0 %v1535
        %v1751 = vpop.f32.mrb[0].mxu0
        %v1752 = vadd.f32 0.0, %v1751
        %v1753 = vpop.f32.mrb[0].mxu0
        %1754 = vmatprep.mubr.f32.mxu0 0.0
        %1755 = vmatmul.mubr.f32.gmra.mrb[0].mxu0 %v1538
        %v1756 = vpop.f32.mrb[0].mxu0
        %v1757 = vadd.f32 0.0, %v1756
        %v1758 = vpop.f32.mrb[0].mxu0
        %1759 = vmatprep.mubr.f32.mxu0 0.0
        %1760 = vmatmul.mubr.f32.gmra.mrb[0].mxu0 %v1541
        %v1761 = vpop.f32.mrb[0].mxu0
        %v1762 = vadd.f32 0.0, %v1761
        %v1763 = vpop.f32.mrb[0].mxu0
        %1764 = vmatprep.mubr.f32.mxu0 0.0
        %1765 = vmatmul.mubr.f32.gmra.mrb[0].mxu0 %v1544
        %v1766 = vpop.f32.mrb[0].mxu0
        %v1767 = vadd.f32 0.0, %v1766
        %v1768 = vpop.f32.mrb[0].mxu0
        %1769 = vmatprep.mubr.f32.mxu0 0.0
        %1770 = vmatmul.mubr.f32.gmra.mrb[0].mxu0 %v1547
        %v1771 = vpop.f32.mrb[0].mxu0
        %v1772 = vadd.f32 0.0, %v1771
        %v1773 = vpop.f32.mrb[0].mxu0
        %1774 = vmatprep.mubr.f32.mxu0 0.0
        %1775 = vmatmul.mubr.f32.gmra.mrb[0].mxu0 %v1550
        %v1776 = vpop.f32.mrb[0].mxu0
        %v1777 = vadd.f32 0.0, %v1776
        %v1778 = vpop.f32.mrb[0].mxu0
        %1779 = vdwg.mxu0
        %1780 = vset.pattern.permute.xlu0 2
        %1781 = vperm.xlu0 %1780, %v384
        %v1782 = vpop.permute.xlu0 %1781
        %1784 = vset.pattern.permute.xlu0 2
        %1785 = vperm.xlu0 %1784, %v385
        %v1786 = vpop.permute.xlu0 %1785
        %1788 = vset.pattern.permute.xlu0 2
        %1789 = vperm.xlu0 %1788, %v386
        %v1790 = vpop.permute.xlu0 %1789
        %1792 = vset.pattern.permute.xlu0 2
        %1793 = vperm.xlu0 %1792, %v387
        %v1794 = vpop.permute.xlu0 %1793
        %1796 = vset.pattern.permute.xlu0 2
        %1797 = vperm.xlu0 %1796, %v388
        %v1798 = vpop.permute.xlu0 %1797
        %1800 = vset.pattern.permute.xlu0 2
        %1801 = vperm.xlu0 %1800, %v389
        %v1802 = vpop.permute.xlu0 %1801
        %1804 = vset.pattern.permute.xlu0 2
        %1805 = vperm.xlu0 %1804, %v390
        %v1806 = vpop.permute.xlu0 %1805
        %1808 = vset.pattern.permute.xlu0 2
        %1809 = vperm.xlu0 %1808, %v391
        %v1810 = vpop.permute.xlu0 %1809
        %1812 = vset.pattern.permute.xlu0 2
        %1813 = vperm.xlu0 %1812, %v392
        %v1814 = vpop.permute.xlu0 %1813
        %1816 = vset.pattern.permute.xlu0 2
        %1817 = vperm.xlu0 %1816, %v393
        %v1818 = vpop.permute.xlu0 %1817
        %1820 = vset.pattern.permute.xlu0 2
        %1821 = vperm.xlu0 %1820, %v394
        %v1822 = vpop.permute.xlu0 %1821
        %1824 = vset.pattern.permute.xlu0 2
        %1825 = vperm.xlu0 %1824, %v395
        %v1826 = vpop.permute.xlu0 %1825
        %1828 = vset.pattern.permute.xlu0 2
        %1829 = vperm.xlu0 %1828, %v396
        %v1830 = vpop.permute.xlu0 %1829
        %1832 = vset.pattern.permute.xlu0 2
        %1833 = vperm.xlu0 %1832, %v397
        %v1834 = vpop.permute.xlu0 %1833
        %1836 = vset.pattern.permute.xlu0 2
        %1837 = vperm.xlu0 %1836, %v398
        %v1838 = vpop.permute.xlu0 %1837
        %1840 = vset.pattern.permute.xlu0 2
        %1841 = vperm.xlu0 %1840, %v399
        %v1842 = vpop.permute.xlu0 %1841
        %1844 = vset.pattern.permute.xlu0 2
        %1845 = vperm.xlu0 %1844, %v400
        %v1846 = vpop.permute.xlu0 %1845
        %1848 = vset.pattern.permute.xlu0 2
        %1849 = vperm.xlu0 %1848, %v401
        %v1850 = vpop.permute.xlu0 %1849
        %1852 = vset.pattern.permute.xlu0 2
        %1853 = vperm.xlu0 %1852, %v402
        %v1854 = vpop.permute.xlu0 %1853
        %1856 = vset.pattern.permute.xlu0 2
        %1857 = vperm.xlu0 %1856, %v403
        %v1858 = vpop.permute.xlu0 %1857
        %1860 = vset.pattern.permute.xlu0 2
        %1861 = vperm.xlu0 %1860, %v404
        %v1862 = vpop.permute.xlu0 %1861
        %1864 = vset.pattern.permute.xlu0 2
        %1865 = vperm.xlu0 %1864, %v405
        %v1866 = vpop.permute.xlu0 %1865
        %1868 = vset.pattern.permute.xlu0 2
        %1869 = vperm.xlu0 %1868, %v406
        %v1870 = vpop.permute.xlu0 %1869
        %1872 = vset.pattern.permute.xlu0 2
        %1873 = vperm.xlu0 %1872, %v407
        %v1874 = vpop.permute.xlu0 %1873
        %1876 = vset.pattern.permute.xlu0 2
        %1877 = vperm.xlu0 %1876, %v408
        %v1878 = vpop.permute.xlu0 %1877
        %1880 = vset.pattern.permute.xlu0 2
        %1881 = vperm.xlu0 %1880, %v409
        %v1882 = vpop.permute.xlu0 %1881
        %1884 = vset.pattern.permute.xlu0 2
        %1885 = vperm.xlu0 %1884, %v410
        %v1886 = vpop.permute.xlu0 %1885
        %1888 = vset.pattern.permute.xlu0 2
        %1889 = vperm.xlu0 %1888, %v411
        %v1890 = vpop.permute.xlu0 %1889
        %1892 = vset.pattern.permute.xlu0 2
        %1893 = vperm.xlu0 %1892, %v412
        %v1894 = vpop.permute.xlu0 %1893
        %1896 = vset.pattern.permute.xlu0 2
        %1897 = vperm.xlu0 %1896, %v413
        %v1898 = vpop.permute.xlu0 %1897
        %1900 = vset.pattern.permute.xlu0 2
        %1901 = vperm.xlu0 %1900, %v414
        %v1902 = vpop.permute.xlu0 %1901
        %1904 = vset.pattern.permute.xlu0 2
        %1905 = vperm.xlu0 %1904, %v415
        %v1906 = vpop.permute.xlu0 %1905
        %v1908 = vmul.f32 %v1622, %v1782
        %v1909 = vmul.f32 %v1627, %v1786
        %v1910 = vmul.f32 %v1632, %v1790
        %v1911 = vmul.f32 %v1637, %v1794
        %v1912 = vmul.f32 %v1642, %v1798
        %v1913 = vmul.f32 %v1647, %v1802
        %v1914 = vmul.f32 %v1652, %v1806
        %v1915 = vmul.f32 %v1657, %v1810
        %v1916 = vmul.f32 %v1662, %v1814
        %v1917 = vmul.f32 %v1667, %v1818
        %v1918 = vmul.f32 %v1672, %v1822
        %v1919 = vmul.f32 %v1677, %v1826
        %v1920 = vmul.f32 %v1682, %v1830
        %v1921 = vmul.f32 %v1687, %v1834
        %v1922 = vmul.f32 %v1692, %v1838
        %v1923 = vmul.f32 %v1697, %v1842
        %v1924 = vmul.f32 %v1702, %v1846
        %v1925 = vmul.f32 %v1707, %v1850
        %v1926 = vmul.f32 %v1712, %v1854
        %v1927 = vmul.f32 %v1717, %v1858
        %v1928 = vmul.f32 %v1722, %v1862
        %v1929 = vmul.f32 %v1727, %v1866
        %v1930 = vmul.f32 %v1732, %v1870
        %v1931 = vmul.f32 %v1737, %v1874
        %v1932 = vmul.f32 %v1742, %v1878
        %v1933 = vmul.f32 %v1747, %v1882
        %v1934 = vmul.f32 %v1752, %v1886
        %v1935 = vmul.f32 %v1757, %v1890
        %v1936 = vmul.f32 %v1762, %v1894
        %v1937 = vmul.f32 %v1767, %v1898
        %v1938 = vmul.f32 %v1772, %v1902
        %v1939 = vmul.f32 %v1777, %v1906
        %v1940 = vadd.f32 %v1381, %v1908
        %v1941 = vadd.f32 %v1382, %v1909
        %v1942 = vadd.f32 %v1383, %v1910
        %v1943 = vadd.f32 %v1384, %v1911
        %v1944 = vadd.f32 %v1385, %v1912
        %v1945 = vadd.f32 %v1386, %v1913
        %v1946 = vadd.f32 %v1387, %v1914
        %v1947 = vadd.f32 %v1388, %v1915
        %v1948 = vadd.f32 %v1389, %v1916
        %v1949 = vadd.f32 %v1390, %v1917
        %v1950 = vadd.f32 %v1391, %v1918
        %v1951 = vadd.f32 %v1392, %v1919
        %v1952 = vadd.f32 %v1393, %v1920
        %v1953 = vadd.f32 %v1394, %v1921
        %v1954 = vadd.f32 %v1395, %v1922
        %v1955 = vadd.f32 %v1396, %v1923
        %v1956 = vadd.f32 %v1397, %v1924
        %v1957 = vadd.f32 %v1398, %v1925
        %v1958 = vadd.f32 %v1399, %v1926
        %v1959 = vadd.f32 %v1400, %v1927
        %v1960 = vadd.f32 %v1401, %v1928
        %v1961 = vadd.f32 %v1402, %v1929
        %v1962 = vadd.f32 %v1403, %v1930
        %v1963 = vadd.f32 %v1404, %v1931
        %v1964 = vadd.f32 %v1405, %v1932
        %v1965 = vadd.f32 %v1406, %v1933
        %v1966 = vadd.f32 %v1407, %v1934
        %v1967 = vadd.f32 %v1408, %v1935
        %v1968 = vadd.f32 %v1409, %v1936
        %v1969 = vadd.f32 %v1410, %v1937
        %v1970 = vadd.f32 %v1411, %v1938
        %v1971 = vadd.f32 %v1412, %v1939
        %v1972 = vld [vmem:[#allocation2 + $0x17] sm:$0xff]
        %v1973 = vld [vmem:[#allocation2 + $0x1f] sm:$0xff]
        %v1974 = vld [vmem:[#allocation2 + $0x27] sm:$0xff]
        %v1975 = vld [vmem:[#allocation2 + $0x2f] sm:$0xff]
        %v1976 = vld [vmem:[#allocation2 + $0x37] sm:$0xff]
        %v1977 = vld [vmem:[#allocation2 + $0x3f] sm:$0xff]
        %v1978 = vld [vmem:[#allocation2 + $0x47] sm:$0xff]
        %v1979 = vld [vmem:[#allocation2 + $0x4f] sm:$0xff]
        %v1980 = vld [vmem:[#allocation2 + $0x57] sm:$0xff]
        %v1981 = vld [vmem:[#allocation2 + $0x5f] sm:$0xff]
        %v1982 = vld [vmem:[#allocation2 + $0x67] sm:$0xff]
        %v1983 = vld [vmem:[#allocation2 + $0x6f] sm:$0xff]
        %v1984 = vld [vmem:[#allocation2 + $0x77] sm:$0xff]
        %v1985 = vld [vmem:[#allocation2 + $0x7f] sm:$0xff]
        %v1986 = vld [vmem:[#allocation2 + $0x87] sm:$0xff]
        %v1987 = vld [vmem:[#allocation2 + $0x8f] sm:$0xff]
        %v1988 = vld [vmem:[#allocation2 + $0x97] sm:$0xff]
        %v1989 = vld [vmem:[#allocation2 + $0x9f] sm:$0xff]
        %v1990 = vld [vmem:[#allocation2 + $0xa7] sm:$0xff]
        %v1991 = vld [vmem:[#allocation2 + $0xaf] sm:$0xff]
        %v1992 = vld [vmem:[#allocation2 + $0xb7] sm:$0xff]
        %v1993 = vld [vmem:[#allocation2 + $0xbf] sm:$0xff]
        %v1994 = vld [vmem:[#allocation2 + $0xc7] sm:$0xff]
        %v1995 = vld [vmem:[#allocation2 + $0xcf] sm:$0xff]
        %v1996 = vld [vmem:[#allocation2 + $0xd7] sm:$0xff]
        %v1997 = vld [vmem:[#allocation2 + $0xdf] sm:$0xff]
        %v1998 = vld [vmem:[#allocation2 + $0xe7] sm:$0xff]
        %v1999 = vld [vmem:[#allocation2 + $0xef] sm:$0xff]
        %v2000 = vld [vmem:[#allocation2 + $0xf7] sm:$0xff]
        %v2001 = vld [vmem:[#allocation2 + $0xff] sm:$0xff]
        %v2002 = vld [vmem:[#allocation2 + $0x107] sm:$0xff]
        %v2003 = vld [vmem:[#allocation2 + $0x10f] sm:$0xff]
        %s2004 = scalar_lea.vmem %s2, 60
        %v2005 = vld [vmem:[%s2004] sm:$0xf]
        %v2006 = vld [vmem:[%s2004 + $0x4] sm:$0xf]
        %v2007 = vld [vmem:[%s2004 + $0x8] sm:$0xf]
        %v2008 = vld [vmem:[%s2004 + $0xc] sm:$0xf]
        %v2009 = vld [vmem:[%s2004 + $0x10] sm:$0x3]
        %v2010 = vunpack.c.l.bf16 %v2005
        %v2011 = vunpack.c.l.bf16 %v2006
        %v2012 = vunpack.c.l.bf16 %v2007
        %v2013 = vunpack.c.l.bf16 %v2008
        %v2014 = vunpack.c.l.bf16 %v2009
        %v2016 = vsel %vm281, %v1972, 0
        %v2019 = vsel %vm281, %v1973, 0
        %v2022 = vsel %vm281, %v1974, 0
        %v2025 = vsel %vm281, %v1975, 0
        %v2028 = vsel %vm281, %v1976, 0
        %v2031 = vsel %vm281, %v1977, 0
        %v2034 = vsel %vm281, %v1978, 0
        %v2037 = vsel %vm281, %v1979, 0
        %v2040 = vsel %vm281, %v1980, 0
        %v2043 = vsel %vm281, %v1981, 0
        %v2046 = vsel %vm281, %v1982, 0
        %v2049 = vsel %vm281, %v1983, 0
        %v2052 = vsel %vm281, %v1984, 0
        %v2055 = vsel %vm281, %v1985, 0
        %v2058 = vsel %vm281, %v1986, 0
        %v2061 = vsel %vm281, %v1987, 0
        %v2064 = vsel %vm281, %v1988, 0
        %v2067 = vsel %vm281, %v1989, 0
        %v2070 = vsel %vm281, %v1990, 0
        %v2073 = vsel %vm281, %v1991, 0
        %v2076 = vsel %vm281, %v1992, 0
        %v2079 = vsel %vm281, %v1993, 0
        %v2082 = vsel %vm281, %v1994, 0
        %v2085 = vsel %vm281, %v1995, 0
        %v2088 = vsel %vm281, %v1996, 0
        %v2091 = vsel %vm281, %v1997, 0
        %v2094 = vsel %vm281, %v1998, 0
        %v2097 = vsel %vm281, %v1999, 0
        %v2100 = vsel %vm281, %v2000, 0
        %v2103 = vsel %vm281, %v2001, 0
        %v2106 = vsel %vm281, %v2002, 0
        %v2109 = vsel %vm281, %v2003, 0
        %v2112 = vsel %vm561, %v2014, 0
        %2114 = vmatprep.subr.mxu0 0.0
        %2115 = vmatpush1.msra.mxu0 %v2010
        %2116 = vmatprep.subr.mxu0 0.0
        %2117 = vmatpush1.msra.mxu0 %v2011
        %2118 = vmatprep.subr.mxu0 0.0
        %2119 = vmatpush1.msra.mxu0 %v2012
        %2120 = vmatprep.subr.mxu0 0.0
        %2121 = vmatpush1.msra.mxu0 %v2013
        %2122 = vmatprep.subr.mxu0 0.0
        %2123 = vmatpush1.msra.mxu0 %v2112
        %2124 = vmatprep.subr.mxu0 0.0
        %2125 = vmatpush1.msra.mxu0 0.0
        %2126 = vmatprep.subr.mxu0 0.0
        %2127 = vmatpush1.msra.mxu0 0.0
        %2128 = vmatprep.subr.mxu0 0.0
        %2129 = vmatpush1.msra.mxu0 0.0
        %2130 = vmatprep.subr.mxu0 0.0
        %2131 = vmatpush1.msra.mxu0 0.0
        %2132 = vmatprep.subr.mxu0 0.0
        %2133 = vmatpush1.msra.mxu0 0.0
        %2134 = vmatprep.subr.mxu0 0.0
        %2135 = vmatpush1.msra.mxu0 0.0
        %2136 = vmatprep.subr.mxu0 0.0
        %2137 = vmatpush1.msra.mxu0 0.0
        %2138 = vmatprep.subr.mxu0 0.0
        %2139 = vmatpush1.msra.mxu0 0.0
        %2140 = vmatprep.subr.mxu0 0.0
        %2141 = vmatpush1.msra.mxu0 0.0
        %2142 = vmatprep.subr.mxu0 0.0
        %2143 = vmatpush1.msra.mxu0 0.0
        %2144 = vmatprep.subr.mxu0 0.0
        %2145 = vmatpush1.msra.mxu0 0.0
        %2146 = vmatprep.subr.mxu0 0.0
        %2147 = vmatpush1.msra.mxu0 0.0
        %2148 = vmatprep.subr.mxu0 0.0
        %2149 = vmatpush1.msra.mxu0 0.0
        %2150 = vmatprep.subr.mxu0 0.0
        %2151 = vmatpush1.msra.mxu0 0.0
        %2152 = vmatprep.subr.mxu0 0.0
        %2153 = vmatpush1.msra.mxu0 0.0
        %2154 = vmatprep.subr.mxu0 0.0
        %2155 = vmatpush1.msra.mxu0 0.0
        %2156 = vmatprep.subr.mxu0 0.0
        %2157 = vmatpush1.msra.mxu0 0.0
        %2158 = vmatprep.subr.mxu0 0.0
        %2159 = vmatpush1.msra.mxu0 0.0
        %2160 = vmatprep.subr.mxu0 0.0
        %2161 = vmatpush1.msra.mxu0 0.0
        %2162 = vmatprep.subr.mxu0 0.0
        %2163 = vmatpush1.msra.mxu0 0.0
        %2164 = vmatprep.subr.mxu0 0.0
        %2165 = vmatpush1.msra.mxu0 0.0
        %2166 = vmatprep.subr.mxu0 0.0
        %2167 = vmatpush1.msra.mxu0 0.0
        %2168 = vmatprep.subr.mxu0 0.0
        %2169 = vmatpush1.msra.mxu0 0.0
        %2170 = vmatprep.subr.mxu0 0.0
        %2171 = vmatpush1.msra.mxu0 0.0
        %2172 = vmatprep.subr.mxu0 0.0
        %2173 = vmatpush1.msra.mxu0 0.0
        %2174 = vmatprep.subr.mxu0 0.0
        %2175 = vmatpush1.msra.mxu0 0.0
        %2176 = vmatprep.subr.mxu0 0.0
        %2177 = vmatpush1.msra.mxu0 0.0
        %2178 = vmatprep.mubr.f32.mxu0 0.0
        %2179 = vmatmul.mubr.f32.gmra.mrb[0].mxu0 %v2016
        %v2180 = vpop.f32.mrb[0].mxu0
        %v2181 = vadd.f32 0.0, %v2180
        %v2182 = vpop.f32.mrb[0].mxu0
        %2183 = vmatprep.mubr.f32.mxu0 0.0
        %2184 = vmatmul.mubr.f32.gmra.mrb[0].mxu0 %v2019
        %v2185 = vpop.f32.mrb[0].mxu0
        %v2186 = vadd.f32 0.0, %v2185
        %v2187 = vpop.f32.mrb[0].mxu0
        %2188 = vmatprep.mubr.f32.mxu0 0.0
        %2189 = vmatmul.mubr.f32.gmra.mrb[0].mxu0 %v2022
        %v2190 = vpop.f32.mrb[0].mxu0
        %v2191 = vadd.f32 0.0, %v2190
        %v2192 = vpop.f32.mrb[0].mxu0
        %2193 = vmatprep.mubr.f32.mxu0 0.0
        %2194 = vmatmul.mubr.f32.gmra.mrb[0].mxu0 %v2025
        %v2195 = vpop.f32.mrb[0].mxu0
        %v2196 = vadd.f32 0.0, %v2195
        %v2197 = vpop.f32.mrb[0].mxu0
        %2198 = vmatprep.mubr.f32.mxu0 0.0
        %2199 = vmatmul.mubr.f32.gmra.mrb[0].mxu0 %v2028
        %v2200 = vpop.f32.mrb[0].mxu0
        %v2201 = vadd.f32 0.0, %v2200
        %v2202 = vpop.f32.mrb[0].mxu0
        %2203 = vmatprep.mubr.f32.mxu0 0.0
        %2204 = vmatmul.mubr.f32.gmra.mrb[0].mxu0 %v2031
        %v2205 = vpop.f32.mrb[0].mxu0
        %v2206 = vadd.f32 0.0, %v2205
        %v2207 = vpop.f32.mrb[0].mxu0
        %2208 = vmatprep.mubr.f32.mxu0 0.0
        %2209 = vmatmul.mubr.f32.gmra.mrb[0].mxu0 %v2034
        %v2210 = vpop.f32.mrb[0].mxu0
        %v2211 = vadd.f32 0.0, %v2210
        %v2212 = vpop.f32.mrb[0].mxu0
        %2213 = vmatprep.mubr.f32.mxu0 0.0
        %2214 = vmatmul.mubr.f32.gmra.mrb[0].mxu0 %v2037
        %v2215 = vpop.f32.mrb[0].mxu0
        %v2216 = vadd.f32 0.0, %v2215
        %v2217 = vpop.f32.mrb[0].mxu0
        %2218 = vmatprep.mubr.f32.mxu0 0.0
        %2219 = vmatmul.mubr.f32.gmra.mrb[0].mxu0 %v2040
        %v2220 = vpop.f32.mrb[0].mxu0
        %v2221 = vadd.f32 0.0, %v2220
        %v2222 = vpop.f32.mrb[0].mxu0
        %2223 = vmatprep.mubr.f32.mxu0 0.0
        %2224 = vmatmul.mubr.f32.gmra.mrb[0].mxu0 %v2043
        %v2225 = vpop.f32.mrb[0].mxu0
        %v2226 = vadd.f32 0.0, %v2225
        %v2227 = vpop.f32.mrb[0].mxu0
        %2228 = vmatprep.mubr.f32.mxu0 0.0
        %2229 = vmatmul.mubr.f32.gmra.mrb[0].mxu0 %v2046
        %v2230 = vpop.f32.mrb[0].mxu0
        %v2231 = vadd.f32 0.0, %v2230
        %v2232 = vpop.f32.mrb[0].mxu0
        %2233 = vmatprep.mubr.f32.mxu0 0.0
        %2234 = vmatmul.mubr.f32.gmra.mrb[0].mxu0 %v2049
        %v2235 = vpop.f32.mrb[0].mxu0
        %v2236 = vadd.f32 0.0, %v2235
        %v2237 = vpop.f32.mrb[0].mxu0
        %2238 = vmatprep.mubr.f32.mxu0 0.0
        %2239 = vmatmul.mubr.f32.gmra.mrb[0].mxu0 %v2052
        %v2240 = vpop.f32.mrb[0].mxu0
        %v2241 = vadd.f32 0.0, %v2240
        %v2242 = vpop.f32.mrb[0].mxu0
        %2243 = vmatprep.mubr.f32.mxu0 0.0
        %2244 = vmatmul.mubr.f32.gmra.mrb[0].mxu0 %v2055
        %v2245 = vpop.f32.mrb[0].mxu0
        %v2246 = vadd.f32 0.0, %v2245
        %v2247 = vpop.f32.mrb[0].mxu0
        %2248 = vmatprep.mubr.f32.mxu0 0.0
        %2249 = vmatmul.mubr.f32.gmra.mrb[0].mxu0 %v2058
        %v2250 = vpop.f32.mrb[0].mxu0
        %v2251 = vadd.f32 0.0, %v2250
        %v2252 = vpop.f32.mrb[0].mxu0
        %2253 = vmatprep.mubr.f32.mxu0 0.0
        %2254 = vmatmul.mubr.f32.gmra.mrb[0].mxu0 %v2061
        %v2255 = vpop.f32.mrb[0].mxu0
        %v2256 = vadd.f32 0.0, %v2255
        %v2257 = vpop.f32.mrb[0].mxu0
        %2258 = vmatprep.mubr.f32.mxu0 0.0
        %2259 = vmatmul.mubr.f32.gmra.mrb[0].mxu0 %v2064
        %v2260 = vpop.f32.mrb[0].mxu0
        %v2261 = vadd.f32 0.0, %v2260
        %v2262 = vpop.f32.mrb[0].mxu0
        %2263 = vmatprep.mubr.f32.mxu0 0.0
        %2264 = vmatmul.mubr.f32.gmra.mrb[0].mxu0 %v2067
        %v2265 = vpop.f32.mrb[0].mxu0
        %v2266 = vadd.f32 0.0, %v2265
        %v2267 = vpop.f32.mrb[0].mxu0
        %2268 = vmatprep.mubr.f32.mxu0 0.0
        %2269 = vmatmul.mubr.f32.gmra.mrb[0].mxu0 %v2070
        %v2270 = vpop.f32.mrb[0].mxu0
        %v2271 = vadd.f32 0.0, %v2270
        %v2272 = vpop.f32.mrb[0].mxu0
        %2273 = vmatprep.mubr.f32.mxu0 0.0
        %2274 = vmatmul.mubr.f32.gmra.mrb[0].mxu0 %v2073
        %v2275 = vpop.f32.mrb[0].mxu0
        %v2276 = vadd.f32 0.0, %v2275
        %v2277 = vpop.f32.mrb[0].mxu0
        %2278 = vmatprep.mubr.f32.mxu0 0.0
        %2279 = vmatmul.mubr.f32.gmra.mrb[0].mxu0 %v2076
        %v2280 = vpop.f32.mrb[0].mxu0
        %v2281 = vadd.f32 0.0, %v2280
        %v2282 = vpop.f32.mrb[0].mxu0
        %2283 = vmatprep.mubr.f32.mxu0 0.0
        %2284 = vmatmul.mubr.f32.gmra.mrb[0].mxu0 %v2079
        %v2285 = vpop.f32.mrb[0].mxu0
        %v2286 = vadd.f32 0.0, %v2285
        %v2287 = vpop.f32.mrb[0].mxu0
        %2288 = vmatprep.mubr.f32.mxu0 0.0
        %2289 = vmatmul.mubr.f32.gmra.mrb[0].mxu0 %v2082
        %v2290 = vpop.f32.mrb[0].mxu0
        %v2291 = vadd.f32 0.0, %v2290
        %v2292 = vpop.f32.mrb[0].mxu0
        %2293 = vmatprep.mubr.f32.mxu0 0.0
        %2294 = vmatmul.mubr.f32.gmra.mrb[0].mxu0 %v2085
        %v2295 = vpop.f32.mrb[0].mxu0
        %v2296 = vadd.f32 0.0, %v2295
        %v2297 = vpop.f32.mrb[0].mxu0
        %2298 = vmatprep.mubr.f32.mxu0 0.0
        %2299 = vmatmul.mubr.f32.gmra.mrb[0].mxu0 %v2088
        %v2300 = vpop.f32.mrb[0].mxu0
        %v2301 = vadd.f32 0.0, %v2300
        %v2302 = vpop.f32.mrb[0].mxu0
        %2303 = vmatprep.mubr.f32.mxu0 0.0
        %2304 = vmatmul.mubr.f32.gmra.mrb[0].mxu0 %v2091
        %v2305 = vpop.f32.mrb[0].mxu0
        %v2306 = vadd.f32 0.0, %v2305
        %v2307 = vpop.f32.mrb[0].mxu0
        %2308 = vmatprep.mubr.f32.mxu0 0.0
        %2309 = vmatmul.mubr.f32.gmra.mrb[0].mxu0 %v2094
        %v2310 = vpop.f32.mrb[0].mxu0
        %v2311 = vadd.f32 0.0, %v2310
        %v2312 = vpop.f32.mrb[0].mxu0
        %2313 = vmatprep.mubr.f32.mxu0 0.0
        %2314 = vmatmul.mubr.f32.gmra.mrb[0].mxu0 %v2097
        %v2315 = vpop.f32.mrb[0].mxu0
        %v2316 = vadd.f32 0.0, %v2315
        %v2317 = vpop.f32.mrb[0].mxu0
        %2318 = vmatprep.mubr.f32.mxu0 0.0
        %2319 = vmatmul.mubr.f32.gmra.mrb[0].mxu0 %v2100
        %v2320 = vpop.f32.mrb[0].mxu0
        %v2321 = vadd.f32 0.0, %v2320
        %v2322 = vpop.f32.mrb[0].mxu0
        %2323 = vmatprep.mubr.f32.mxu0 0.0
        %2324 = vmatmul.mubr.f32.gmra.mrb[0].mxu0 %v2103
        %v2325 = vpop.f32.mrb[0].mxu0
        %v2326 = vadd.f32 0.0, %v2325
        %v2327 = vpop.f32.mrb[0].mxu0
        %2328 = vmatprep.mubr.f32.mxu0 0.0
        %2329 = vmatmul.mubr.f32.gmra.mrb[0].mxu0 %v2106
        %v2330 = vpop.f32.mrb[0].mxu0
        %v2331 = vadd.f32 0.0, %v2330
        %v2332 = vpop.f32.mrb[0].mxu0
        %2333 = vmatprep.mubr.f32.mxu0 0.0
        %2334 = vmatmul.mubr.f32.gmra.mrb[0].mxu0 %v2109
        %v2335 = vpop.f32.mrb[0].mxu0
        %v2336 = vadd.f32 0.0, %v2335
        %v2337 = vpop.f32.mrb[0].mxu0
        %2338 = vdwg.mxu0
        %v2339 = vmul.f32 %v2181, %v793
        %v2340 = vmul.f32 %v2186, %v798
        %v2341 = vmul.f32 %v2191, %v803
        %v2342 = vmul.f32 %v2196, %v808
        %v2343 = vmul.f32 %v2201, %v813
        %v2344 = vmul.f32 %v2206, %v818
        %v2345 = vmul.f32 %v2211, %v823
        %v2346 = vmul.f32 %v2216, %v828
        %v2347 = vmul.f32 %v2221, %v833
        %v2348 = vmul.f32 %v2226, %v838
        %v2349 = vmul.f32 %v2231, %v843
        %v2350 = vmul.f32 %v2236, %v848
        %v2351 = vmul.f32 %v2241, %v853
        %v2352 = vmul.f32 %v2246, %v858
        %v2353 = vmul.f32 %v2251, %v863
        %v2354 = vmul.f32 %v2256, %v868
        %v2355 = vmul.f32 %v2261, %v873
        %v2356 = vmul.f32 %v2266, %v878
        %v2357 = vmul.f32 %v2271, %v883
        %v2358 = vmul.f32 %v2276, %v888
        %v2359 = vmul.f32 %v2281, %v893
        %v2360 = vmul.f32 %v2286, %v898
        %v2361 = vmul.f32 %v2291, %v903
        %v2362 = vmul.f32 %v2296, %v908
        %v2363 = vmul.f32 %v2301, %v913
        %v2364 = vmul.f32 %v2306, %v918
        %v2365 = vmul.f32 %v2311, %v923
        %v2366 = vmul.f32 %v2316, %v928
        %v2367 = vmul.f32 %v2321, %v933
        %v2368 = vmul.f32 %v2326, %v938
        %v2369 = vmul.f32 %v2331, %v943
        %v2370 = vmul.f32 %v2336, %v948
        %v2371 = vadd.f32 %v1940, %v2339
        %v2372 = vadd.f32 %v1941, %v2340
        %v2373 = vadd.f32 %v1942, %v2341
        %v2374 = vadd.f32 %v1943, %v2342
        %v2375 = vadd.f32 %v1944, %v2343
        %v2376 = vadd.f32 %v1945, %v2344
        %v2377 = vadd.f32 %v1946, %v2345
        %v2378 = vadd.f32 %v1947, %v2346
        %v2379 = vadd.f32 %v1948, %v2347
        %v2380 = vadd.f32 %v1949, %v2348
        %v2381 = vadd.f32 %v1950, %v2349
        %v2382 = vadd.f32 %v1951, %v2350
        %v2383 = vadd.f32 %v1952, %v2351
        %v2384 = vadd.f32 %v1953, %v2352
        %v2385 = vadd.f32 %v1954, %v2353
        %v2386 = vadd.f32 %v1955, %v2354
        %v2387 = vadd.f32 %v1956, %v2355
        %v2388 = vadd.f32 %v1957, %v2356
        %v2389 = vadd.f32 %v1958, %v2357
        %v2390 = vadd.f32 %v1959, %v2358
        %v2391 = vadd.f32 %v1960, %v2359
        %v2392 = vadd.f32 %v1961, %v2360
        %v2393 = vadd.f32 %v1962, %v2361
        %v2394 = vadd.f32 %v1963, %v2362
        %v2395 = vadd.f32 %v1964, %v2363
        %v2396 = vadd.f32 %v1965, %v2364
        %v2397 = vadd.f32 %v1966, %v2365
        %v2398 = vadd.f32 %v1967, %v2366
        %v2399 = vadd.f32 %v1968, %v2367
        %v2400 = vadd.f32 %v1969, %v2368
        %v2401 = vadd.f32 %v1970, %v2369
        %v2402 = vadd.f32 %v1971, %v2370
        %v2403 = vld [vmem:[#allocation2 + $0x18] sm:$0xff]
        %v2404 = vld [vmem:[#allocation2 + $0x20] sm:$0xff]
        %v2405 = vld [vmem:[#allocation2 + $0x28] sm:$0xff]
        %v2406 = vld [vmem:[#allocation2 + $0x30] sm:$0xff]
        %v2407 = vld [vmem:[#allocation2 + $0x38] sm:$0xff]
        %v2408 = vld [vmem:[#allocation2 + $0x40] sm:$0xff]
        %v2409 = vld [vmem:[#allocation2 + $0x48] sm:$0xff]
        %v2410 = vld [vmem:[#allocation2 + $0x50] sm:$0xff]
        %v2411 = vld [vmem:[#allocation2 + $0x58] sm:$0xff]
        %v2412 = vld [vmem:[#allocation2 + $0x60] sm:$0xff]
        %v2413 = vld [vmem:[#allocation2 + $0x68] sm:$0xff]
        %v2414 = vld [vmem:[#allocation2 + $0x70] sm:$0xff]
        %v2415 = vld [vmem:[#allocation2 + $0x78] sm:$0xff]
        %v2416 = vld [vmem:[#allocation2 + $0x80] sm:$0xff]
        %v2417 = vld [vmem:[#allocation2 + $0x88] sm:$0xff]
        %v2418 = vld [vmem:[#allocation2 + $0x90] sm:$0xff]
        %v2419 = vld [vmem:[#allocation2 + $0x98] sm:$0xff]
        %v2420 = vld [vmem:[#allocation2 + $0xa0] sm:$0xff]
        %v2421 = vld [vmem:[#allocation2 + $0xa8] sm:$0xff]
        %v2422 = vld [vmem:[#allocation2 + $0xb0] sm:$0xff]
        %v2423 = vld [vmem:[#allocation2 + $0xb8] sm:$0xff]
        %v2424 = vld [vmem:[#allocation2 + $0xc0] sm:$0xff]
        %v2425 = vld [vmem:[#allocation2 + $0xc8] sm:$0xff]
        %v2426 = vld [vmem:[#allocation2 + $0xd0] sm:$0xff]
        %v2427 = vld [vmem:[#allocation2 + $0xd8] sm:$0xff]
        %v2428 = vld [vmem:[#allocation2 + $0xe0] sm:$0xff]
        %v2429 = vld [vmem:[#allocation2 + $0xe8] sm:$0xff]
        %v2430 = vld [vmem:[#allocation2 + $0xf0] sm:$0xff]
        %v2431 = vld [vmem:[#allocation2 + $0xf8] sm:$0xff]
        %v2432 = vld [vmem:[#allocation2 + $0x100] sm:$0xff]
        %v2433 = vld [vmem:[#allocation2 + $0x108] sm:$0xff]
        %v2434 = vld [vmem:[#allocation2 + $0x110] sm:$0xff]
        %s2435 = scalar_lea.vmem %s2, 80
        %v2436 = vld [vmem:[%s2435] sm:$0xf]
        %v2437 = vld [vmem:[%s2435 + $0x4] sm:$0xf]
        %v2438 = vld [vmem:[%s2435 + $0x8] sm:$0xf]
        %v2439 = vld [vmem:[%s2435 + $0xc] sm:$0xf]
        %v2440 = vld [vmem:[%s2435 + $0x10] sm:$0x3]
        %v2441 = vunpack.c.l.bf16 %v2436
        %v2442 = vunpack.c.l.bf16 %v2437
        %v2443 = vunpack.c.l.bf16 %v2438
        %v2444 = vunpack.c.l.bf16 %v2439
        %v2445 = vunpack.c.l.bf16 %v2440
        %v2447 = vsel %vm281, %v2403, 0
        %v2450 = vsel %vm281, %v2404, 0
        %v2453 = vsel %vm281, %v2405, 0
        %v2456 = vsel %vm281, %v2406, 0
        %v2459 = vsel %vm281, %v2407, 0
        %v2462 = vsel %vm281, %v2408, 0
        %v2465 = vsel %vm281, %v2409, 0
        %v2468 = vsel %vm281, %v2410, 0
        %v2471 = vsel %vm281, %v2411, 0
        %v2474 = vsel %vm281, %v2412, 0
        %v2477 = vsel %vm281, %v2413, 0
        %v2480 = vsel %vm281, %v2414, 0
        %v2483 = vsel %vm281, %v2415, 0
        %v2486 = vsel %vm281, %v2416, 0
        %v2489 = vsel %vm281, %v2417, 0
        %v2492 = vsel %vm281, %v2418, 0
        %v2495 = vsel %vm281, %v2419, 0
        %v2498 = vsel %vm281, %v2420, 0
        %v2501 = vsel %vm281, %v2421, 0
        %v2504 = vsel %vm281, %v2422, 0
        %v2507 = vsel %vm281, %v2423, 0
        %v2510 = vsel %vm281, %v2424, 0
        %v2513 = vsel %vm281, %v2425, 0
        %v2516 = vsel %vm281, %v2426, 0
        %v2519 = vsel %vm281, %v2427, 0
        %v2522 = vsel %vm281, %v2428, 0
        %v2525 = vsel %vm281, %v2429, 0
        %v2528 = vsel %vm281, %v2430, 0
        %v2531 = vsel %vm281, %v2431, 0
        %v2534 = vsel %vm281, %v2432, 0
        %v2537 = vsel %vm281, %v2433, 0
        %v2540 = vsel %vm281, %v2434, 0
        %v2543 = vsel %vm561, %v2445, 0
        %2545 = vmatprep.subr.mxu0 0.0
        %2546 = vmatpush1.msra.mxu0 %v2441
        %2547 = vmatprep.subr.mxu0 0.0
        %2548 = vmatpush1.msra.mxu0 %v2442
        %2549 = vmatprep.subr.mxu0 0.0
        %2550 = vmatpush1.msra.mxu0 %v2443
        %2551 = vmatprep.subr.mxu0 0.0
        %2552 = vmatpush1.msra.mxu0 %v2444
        %2553 = vmatprep.subr.mxu0 0.0
        %2554 = vmatpush1.msra.mxu0 %v2543
        %2555 = vmatprep.subr.mxu0 0.0
        %2556 = vmatpush1.msra.mxu0 0.0
        %2557 = vmatprep.subr.mxu0 0.0
        %2558 = vmatpush1.msra.mxu0 0.0
        %2559 = vmatprep.subr.mxu0 0.0
        %2560 = vmatpush1.msra.mxu0 0.0
        %2561 = vmatprep.subr.mxu0 0.0
        %2562 = vmatpush1.msra.mxu0 0.0
        %2563 = vmatprep.subr.mxu0 0.0
        %2564 = vmatpush1.msra.mxu0 0.0
        %2565 = vmatprep.subr.mxu0 0.0
        %2566 = vmatpush1.msra.mxu0 0.0
        %2567 = vmatprep.subr.mxu0 0.0
        %2568 = vmatpush1.msra.mxu0 0.0
        %2569 = vmatprep.subr.mxu0 0.0
        %2570 = vmatpush1.msra.mxu0 0.0
        %2571 = vmatprep.subr.mxu0 0.0
        %2572 = vmatpush1.msra.mxu0 0.0
        %2573 = vmatprep.subr.mxu0 0.0
        %2574 = vmatpush1.msra.mxu0 0.0
        %2575 = vmatprep.subr.mxu0 0.0
        %2576 = vmatpush1.msra.mxu0 0.0
        %2577 = vmatprep.subr.mxu0 0.0
        %2578 = vmatpush1.msra.mxu0 0.0
        %2579 = vmatprep.subr.mxu0 0.0
        %2580 = vmatpush1.msra.mxu0 0.0
        %2581 = vmatprep.subr.mxu0 0.0
        %2582 = vmatpush1.msra.mxu0 0.0
        %2583 = vmatprep.subr.mxu0 0.0
        %2584 = vmatpush1.msra.mxu0 0.0
        %2585 = vmatprep.subr.mxu0 0.0
        %2586 = vmatpush1.msra.mxu0 0.0
        %2587 = vmatprep.subr.mxu0 0.0
        %2588 = vmatpush1.msra.mxu0 0.0
        %2589 = vmatprep.subr.mxu0 0.0
        %2590 = vmatpush1.msra.mxu0 0.0
        %2591 = vmatprep.subr.mxu0 0.0
        %2592 = vmatpush1.msra.mxu0 0.0
        %2593 = vmatprep.subr.mxu0 0.0
        %2594 = vmatpush1.msra.mxu0 0.0
        %2595 = vmatprep.subr.mxu0 0.0
        %2596 = vmatpush1.msra.mxu0 0.0
        %2597 = vmatprep.subr.mxu0 0.0
        %2598 = vmatpush1.msra.mxu0 0.0
        %2599 = vmatprep.subr.mxu0 0.0
        %2600 = vmatpush1.msra.mxu0 0.0
        %2601 = vmatprep.subr.mxu0 0.0
        %2602 = vmatpush1.msra.mxu0 0.0
        %2603 = vmatprep.subr.mxu0 0.0
        %2604 = vmatpush1.msra.mxu0 0.0
        %2605 = vmatprep.subr.mxu0 0.0
        %2606 = vmatpush1.msra.mxu0 0.0
        %2607 = vmatprep.subr.mxu0 0.0
        %2608 = vmatpush1.msra.mxu0 0.0
        %2609 = vmatprep.mubr.f32.mxu0 0.0
        %2610 = vmatmul.mubr.f32.gmra.mrb[0].mxu0 %v2447
        %v2611 = vpop.f32.mrb[0].mxu0
        %v2612 = vadd.f32 0.0, %v2611
        %v2613 = vpop.f32.mrb[0].mxu0
        %2614 = vmatprep.mubr.f32.mxu0 0.0
        %2615 = vmatmul.mubr.f32.gmra.mrb[0].mxu0 %v2450
        %v2616 = vpop.f32.mrb[0].mxu0
        %v2617 = vadd.f32 0.0, %v2616
        %v2618 = vpop.f32.mrb[0].mxu0
        %2619 = vmatprep.mubr.f32.mxu0 0.0
        %2620 = vmatmul.mubr.f32.gmra.mrb[0].mxu0 %v2453
        %v2621 = vpop.f32.mrb[0].mxu0
        %v2622 = vadd.f32 0.0, %v2621
        %v2623 = vpop.f32.mrb[0].mxu0
        %2624 = vmatprep.mubr.f32.mxu0 0.0
        %2625 = vmatmul.mubr.f32.gmra.mrb[0].mxu0 %v2456
        %v2626 = vpop.f32.mrb[0].mxu0
        %v2627 = vadd.f32 0.0, %v2626
        %v2628 = vpop.f32.mrb[0].mxu0
        %2629 = vmatprep.mubr.f32.mxu0 0.0
        %2630 = vmatmul.mubr.f32.gmra.mrb[0].mxu0 %v2459
        %v2631 = vpop.f32.mrb[0].mxu0
        %v2632 = vadd.f32 0.0, %v2631
        %v2633 = vpop.f32.mrb[0].mxu0
        %2634 = vmatprep.mubr.f32.mxu0 0.0
        %2635 = vmatmul.mubr.f32.gmra.mrb[0].mxu0 %v2462
        %v2636 = vpop.f32.mrb[0].mxu0
        %v2637 = vadd.f32 0.0, %v2636
        %v2638 = vpop.f32.mrb[0].mxu0
        %2639 = vmatprep.mubr.f32.mxu0 0.0
        %2640 = vmatmul.mubr.f32.gmra.mrb[0].mxu0 %v2465
        %v2641 = vpop.f32.mrb[0].mxu0
        %v2642 = vadd.f32 0.0, %v2641
        %v2643 = vpop.f32.mrb[0].mxu0
        %2644 = vmatprep.mubr.f32.mxu0 0.0
        %2645 = vmatmul.mubr.f32.gmra.mrb[0].mxu0 %v2468
        %v2646 = vpop.f32.mrb[0].mxu0
        %v2647 = vadd.f32 0.0, %v2646
        %v2648 = vpop.f32.mrb[0].mxu0
        %2649 = vmatprep.mubr.f32.mxu0 0.0
        %2650 = vmatmul.mubr.f32.gmra.mrb[0].mxu0 %v2471
        %v2651 = vpop.f32.mrb[0].mxu0
        %v2652 = vadd.f32 0.0, %v2651
        %v2653 = vpop.f32.mrb[0].mxu0
        %2654 = vmatprep.mubr.f32.mxu0 0.0
        %2655 = vmatmul.mubr.f32.gmra.mrb[0].mxu0 %v2474
        %v2656 = vpop.f32.mrb[0].mxu0
        %v2657 = vadd.f32 0.0, %v2656
        %v2658 = vpop.f32.mrb[0].mxu0
        %2659 = vmatprep.mubr.f32.mxu0 0.0
        %2660 = vmatmul.mubr.f32.gmra.mrb[0].mxu0 %v2477
        %v2661 = vpop.f32.mrb[0].mxu0
        %v2662 = vadd.f32 0.0, %v2661
        %v2663 = vpop.f32.mrb[0].mxu0
        %2664 = vmatprep.mubr.f32.mxu0 0.0
        %2665 = vmatmul.mubr.f32.gmra.mrb[0].mxu0 %v2480
        %v2666 = vpop.f32.mrb[0].mxu0
        %v2667 = vadd.f32 0.0, %v2666
        %v2668 = vpop.f32.mrb[0].mxu0
        %2669 = vmatprep.mubr.f32.mxu0 0.0
        %2670 = vmatmul.mubr.f32.gmra.mrb[0].mxu0 %v2483
        %v2671 = vpop.f32.mrb[0].mxu0
        %v2672 = vadd.f32 0.0, %v2671
        %v2673 = vpop.f32.mrb[0].mxu0
        %2674 = vmatprep.mubr.f32.mxu0 0.0
        %2675 = vmatmul.mubr.f32.gmra.mrb[0].mxu0 %v2486
        %v2676 = vpop.f32.mrb[0].mxu0
        %v2677 = vadd.f32 0.0, %v2676
        %v2678 = vpop.f32.mrb[0].mxu0
        %2679 = vmatprep.mubr.f32.mxu0 0.0
        %2680 = vmatmul.mubr.f32.gmra.mrb[0].mxu0 %v2489
        %v2681 = vpop.f32.mrb[0].mxu0
        %v2682 = vadd.f32 0.0, %v2681
        %v2683 = vpop.f32.mrb[0].mxu0
        %2684 = vmatprep.mubr.f32.mxu0 0.0
        %2685 = vmatmul.mubr.f32.gmra.mrb[0].mxu0 %v2492
        %v2686 = vpop.f32.mrb[0].mxu0
        %v2687 = vadd.f32 0.0, %v2686
        %v2688 = vpop.f32.mrb[0].mxu0
        %2689 = vmatprep.mubr.f32.mxu0 0.0
        %2690 = vmatmul.mubr.f32.gmra.mrb[0].mxu0 %v2495
        %v2691 = vpop.f32.mrb[0].mxu0
        %v2692 = vadd.f32 0.0, %v2691
        %v2693 = vpop.f32.mrb[0].mxu0
        %2694 = vmatprep.mubr.f32.mxu0 0.0
        %2695 = vmatmul.mubr.f32.gmra.mrb[0].mxu0 %v2498
        %v2696 = vpop.f32.mrb[0].mxu0
        %v2697 = vadd.f32 0.0, %v2696
        %v2698 = vpop.f32.mrb[0].mxu0
        %2699 = vmatprep.mubr.f32.mxu0 0.0
        %2700 = vmatmul.mubr.f32.gmra.mrb[0].mxu0 %v2501
        %v2701 = vpop.f32.mrb[0].mxu0
        %v2702 = vadd.f32 0.0, %v2701
        %v2703 = vpop.f32.mrb[0].mxu0
        %2704 = vmatprep.mubr.f32.mxu0 0.0
        %2705 = vmatmul.mubr.f32.gmra.mrb[0].mxu0 %v2504
        %v2706 = vpop.f32.mrb[0].mxu0
        %v2707 = vadd.f32 0.0, %v2706
        %v2708 = vpop.f32.mrb[0].mxu0
        %2709 = vmatprep.mubr.f32.mxu0 0.0
        %2710 = vmatmul.mubr.f32.gmra.mrb[0].mxu0 %v2507
        %v2711 = vpop.f32.mrb[0].mxu0
        %v2712 = vadd.f32 0.0, %v2711
        %v2713 = vpop.f32.mrb[0].mxu0
        %2714 = vmatprep.mubr.f32.mxu0 0.0
        %2715 = vmatmul.mubr.f32.gmra.mrb[0].mxu0 %v2510
        %v2716 = vpop.f32.mrb[0].mxu0
        %v2717 = vadd.f32 0.0, %v2716
        %v2718 = vpop.f32.mrb[0].mxu0
        %2719 = vmatprep.mubr.f32.mxu0 0.0
        %2720 = vmatmul.mubr.f32.gmra.mrb[0].mxu0 %v2513
        %v2721 = vpop.f32.mrb[0].mxu0
        %v2722 = vadd.f32 0.0, %v2721
        %v2723 = vpop.f32.mrb[0].mxu0
        %2724 = vmatprep.mubr.f32.mxu0 0.0
        %2725 = vmatmul.mubr.f32.gmra.mrb[0].mxu0 %v2516
        %v2726 = vpop.f32.mrb[0].mxu0
        %v2727 = vadd.f32 0.0, %v2726
        %v2728 = vpop.f32.mrb[0].mxu0
        %2729 = vmatprep.mubr.f32.mxu0 0.0
        %2730 = vmatmul.mubr.f32.gmra.mrb[0].mxu0 %v2519
        %v2731 = vpop.f32.mrb[0].mxu0
        %v2732 = vadd.f32 0.0, %v2731
        %v2733 = vpop.f32.mrb[0].mxu0
        %2734 = vmatprep.mubr.f32.mxu0 0.0
        %2735 = vmatmul.mubr.f32.gmra.mrb[0].mxu0 %v2522
        %v2736 = vpop.f32.mrb[0].mxu0
        %v2737 = vadd.f32 0.0, %v2736
        %v2738 = vpop.f32.mrb[0].mxu0
        %2739 = vmatprep.mubr.f32.mxu0 0.0
        %2740 = vmatmul.mubr.f32.gmra.mrb[0].mxu0 %v2525
        %v2741 = vpop.f32.mrb[0].mxu0
        %v2742 = vadd.f32 0.0, %v2741
        %v2743 = vpop.f32.mrb[0].mxu0
        %2744 = vmatprep.mubr.f32.mxu0 0.0
        %2745 = vmatmul.mubr.f32.gmra.mrb[0].mxu0 %v2528
        %v2746 = vpop.f32.mrb[0].mxu0
        %v2747 = vadd.f32 0.0, %v2746
        %v2748 = vpop.f32.mrb[0].mxu0
        %2749 = vmatprep.mubr.f32.mxu0 0.0
        %2750 = vmatmul.mubr.f32.gmra.mrb[0].mxu0 %v2531
        %v2751 = vpop.f32.mrb[0].mxu0
        %v2752 = vadd.f32 0.0, %v2751
        %v2753 = vpop.f32.mrb[0].mxu0
        %2754 = vmatprep.mubr.f32.mxu0 0.0
        %2755 = vmatmul.mubr.f32.gmra.mrb[0].mxu0 %v2534
        %v2756 = vpop.f32.mrb[0].mxu0
        %v2757 = vadd.f32 0.0, %v2756
        %v2758 = vpop.f32.mrb[0].mxu0
        %2759 = vmatprep.mubr.f32.mxu0 0.0
        %2760 = vmatmul.mubr.f32.gmra.mrb[0].mxu0 %v2537
        %v2761 = vpop.f32.mrb[0].mxu0
        %v2762 = vadd.f32 0.0, %v2761
        %v2763 = vpop.f32.mrb[0].mxu0
        %2764 = vmatprep.mubr.f32.mxu0 0.0
        %2765 = vmatmul.mubr.f32.gmra.mrb[0].mxu0 %v2540
        %v2766 = vpop.f32.mrb[0].mxu0
        %v2767 = vadd.f32 0.0, %v2766
        %v2768 = vpop.f32.mrb[0].mxu0
        %2769 = vdwg.mxu0
        %v2770 = vadd.f32 %v2371, %v2612
        %v2771 = vadd.f32 %v2372, %v2617
        %v2772 = vadd.f32 %v2373, %v2622
        %v2773 = vadd.f32 %v2374, %v2627
        %v2774 = vadd.f32 %v2375, %v2632
        %v2775 = vadd.f32 %v2376, %v2637
        %v2776 = vadd.f32 %v2377, %v2642
        %v2777 = vadd.f32 %v2378, %v2647
        %v2778 = vadd.f32 %v2379, %v2652
        %v2779 = vadd.f32 %v2380, %v2657
        %v2780 = vadd.f32 %v2381, %v2662
        %v2781 = vadd.f32 %v2382, %v2667
        %v2782 = vadd.f32 %v2383, %v2672
        %v2783 = vadd.f32 %v2384, %v2677
        %v2784 = vadd.f32 %v2385, %v2682
        %v2785 = vadd.f32 %v2386, %v2687
        %v2786 = vadd.f32 %v2387, %v2692
        %v2787 = vadd.f32 %v2388, %v2697
        %v2788 = vadd.f32 %v2389, %v2702
        %v2789 = vadd.f32 %v2390, %v2707
        %v2790 = vadd.f32 %v2391, %v2712
        %v2791 = vadd.f32 %v2392, %v2717
        %v2792 = vadd.f32 %v2393, %v2722
        %v2793 = vadd.f32 %v2394, %v2727
        %v2794 = vadd.f32 %v2395, %v2732
        %v2795 = vadd.f32 %v2396, %v2737
        %v2796 = vadd.f32 %v2397, %v2742
        %v2797 = vadd.f32 %v2398, %v2747
        %v2798 = vadd.f32 %v2399, %v2752
        %v2799 = vadd.f32 %v2400, %v2757
        %v2800 = vadd.f32 %v2401, %v2762
        %v2801 = vadd.f32 %v2402, %v2767
        %v2802 = vld [vmem:[#allocation2 + $0x19] sm:$0xff]
        %v2803 = vld [vmem:[#allocation2 + $0x21] sm:$0xff]
        %v2804 = vld [vmem:[#allocation2 + $0x29] sm:$0xff]
        %v2805 = vld [vmem:[#allocation2 + $0x31] sm:$0xff]
        %v2806 = vld [vmem:[#allocation2 + $0x39] sm:$0xff]
        %v2807 = vld [vmem:[#allocation2 + $0x41] sm:$0xff]
        %v2808 = vld [vmem:[#allocation2 + $0x49] sm:$0xff]
        %v2809 = vld [vmem:[#allocation2 + $0x51] sm:$0xff]
        %v2810 = vld [vmem:[#allocation2 + $0x59] sm:$0xff]
        %v2811 = vld [vmem:[#allocation2 + $0x61] sm:$0xff]
        %v2812 = vld [vmem:[#allocation2 + $0x69] sm:$0xff]
        %v2813 = vld [vmem:[#allocation2 + $0x71] sm:$0xff]
        %v2814 = vld [vmem:[#allocation2 + $0x79] sm:$0xff]
        %v2815 = vld [vmem:[#allocation2 + $0x81] sm:$0xff]
        %v2816 = vld [vmem:[#allocation2 + $0x89] sm:$0xff]
        %v2817 = vld [vmem:[#allocation2 + $0x91] sm:$0xff]
        %v2818 = vld [vmem:[#allocation2 + $0x99] sm:$0xff]
        %v2819 = vld [vmem:[#allocation2 + $0xa1] sm:$0xff]
        %v2820 = vld [vmem:[#allocation2 + $0xa9] sm:$0xff]
        %v2821 = vld [vmem:[#allocation2 + $0xb1] sm:$0xff]
        %v2822 = vld [vmem:[#allocation2 + $0xb9] sm:$0xff]
        %v2823 = vld [vmem:[#allocation2 + $0xc1] sm:$0xff]
        %v2824 = vld [vmem:[#allocation2 + $0xc9] sm:$0xff]
        %v2825 = vld [vmem:[#allocation2 + $0xd1] sm:$0xff]
        %v2826 = vld [vmem:[#allocation2 + $0xd9] sm:$0xff]
        %v2827 = vld [vmem:[#allocation2 + $0xe1] sm:$0xff]
        %v2828 = vld [vmem:[#allocation2 + $0xe9] sm:$0xff]
        %v2829 = vld [vmem:[#allocation2 + $0xf1] sm:$0xff]
        %v2830 = vld [vmem:[#allocation2 + $0xf9] sm:$0xff]
        %v2831 = vld [vmem:[#allocation2 + $0x101] sm:$0xff]
        %v2832 = vld [vmem:[#allocation2 + $0x109] sm:$0xff]
        %v2833 = vld [vmem:[#allocation2 + $0x111] sm:$0xff]
        %s2834 = scalar_lea.vmem %s2, 100
        %v2835 = vld [vmem:[%s2834] sm:$0xf]
        %v2836 = vld [vmem:[%s2834 + $0x4] sm:$0xf]
        %v2837 = vld [vmem:[%s2834 + $0x8] sm:$0xf]
        %v2838 = vld [vmem:[%s2834 + $0xc] sm:$0xf]
        %v2839 = vld [vmem:[%s2834 + $0x10] sm:$0x3]
        %v2840 = vunpack.c.l.bf16 %v2835
        %v2841 = vunpack.c.l.bf16 %v2836
        %v2842 = vunpack.c.l.bf16 %v2837
        %v2843 = vunpack.c.l.bf16 %v2838
        %v2844 = vunpack.c.l.bf16 %v2839
        %v2846 = vsel %vm281, %v2802, 0
        %v2849 = vsel %vm281, %v2803, 0
        %v2852 = vsel %vm281, %v2804, 0
        %v2855 = vsel %vm281, %v2805, 0
        %v2858 = vsel %vm281, %v2806, 0
        %v2861 = vsel %vm281, %v2807, 0
        %v2864 = vsel %vm281, %v2808, 0
        %v2867 = vsel %vm281, %v2809, 0
        %v2870 = vsel %vm281, %v2810, 0
        %v2873 = vsel %vm281, %v2811, 0
        %v2876 = vsel %vm281, %v2812, 0
        %v2879 = vsel %vm281, %v2813, 0
        %v2882 = vsel %vm281, %v2814, 0
        %v2885 = vsel %vm281, %v2815, 0
        %v2888 = vsel %vm281, %v2816, 0
        %v2891 = vsel %vm281, %v2817, 0
        %v2894 = vsel %vm281, %v2818, 0
        %v2897 = vsel %vm281, %v2819, 0
        %v2900 = vsel %vm281, %v2820, 0
        %v2903 = vsel %vm281, %v2821, 0
        %v2906 = vsel %vm281, %v2822, 0
        %v2909 = vsel %vm281, %v2823, 0
        %v2912 = vsel %vm281, %v2824, 0
        %v2915 = vsel %vm281, %v2825, 0
        %v2918 = vsel %vm281, %v2826, 0
        %v2921 = vsel %vm281, %v2827, 0
        %v2924 = vsel %vm281, %v2828, 0
        %v2927 = vsel %vm281, %v2829, 0
        %v2930 = vsel %vm281, %v2830, 0
        %v2933 = vsel %vm281, %v2831, 0
        %v2936 = vsel %vm281, %v2832, 0
        %v2939 = vsel %vm281, %v2833, 0
        %v2942 = vsel %vm561, %v2844, 0
        %2944 = vmatprep.subr.mxu0 0.0
        %2945 = vmatpush1.msra.mxu0 %v2840
        %2946 = vmatprep.subr.mxu0 0.0
        %2947 = vmatpush1.msra.mxu0 %v2841
        %2948 = vmatprep.subr.mxu0 0.0
        %2949 = vmatpush1.msra.mxu0 %v2842
        %2950 = vmatprep.subr.mxu0 0.0
        %2951 = vmatpush1.msra.mxu0 %v2843
        %2952 = vmatprep.subr.mxu0 0.0
        %2953 = vmatpush1.msra.mxu0 %v2942
        %2954 = vmatprep.subr.mxu0 0.0
        %2955 = vmatpush1.msra.mxu0 0.0
        %2956 = vmatprep.subr.mxu0 0.0
        %2957 = vmatpush1.msra.mxu0 0.0
        %2958 = vmatprep.subr.mxu0 0.0
        %2959 = vmatpush1.msra.mxu0 0.0
        %2960 = vmatprep.subr.mxu0 0.0
        %2961 = vmatpush1.msra.mxu0 0.0
        %2962 = vmatprep.subr.mxu0 0.0
        %2963 = vmatpush1.msra.mxu0 0.0
        %2964 = vmatprep.subr.mxu0 0.0
        %2965 = vmatpush1.msra.mxu0 0.0
        %2966 = vmatprep.subr.mxu0 0.0
        %2967 = vmatpush1.msra.mxu0 0.0
        %2968 = vmatprep.subr.mxu0 0.0
        %2969 = vmatpush1.msra.mxu0 0.0
        %2970 = vmatprep.subr.mxu0 0.0
        %2971 = vmatpush1.msra.mxu0 0.0
        %2972 = vmatprep.subr.mxu0 0.0
        %2973 = vmatpush1.msra.mxu0 0.0
        %2974 = vmatprep.subr.mxu0 0.0
        %2975 = vmatpush1.msra.mxu0 0.0
        %2976 = vmatprep.subr.mxu0 0.0
        %2977 = vmatpush1.msra.mxu0 0.0
        %2978 = vmatprep.subr.mxu0 0.0
        %2979 = vmatpush1.msra.mxu0 0.0
        %2980 = vmatprep.subr.mxu0 0.0
        %2981 = vmatpush1.msra.mxu0 0.0
        %2982 = vmatprep.subr.mxu0 0.0
        %2983 = vmatpush1.msra.mxu0 0.0
        %2984 = vmatprep.subr.mxu0 0.0
        %2985 = vmatpush1.msra.mxu0 0.0
        %2986 = vmatprep.subr.mxu0 0.0
        %2987 = vmatpush1.msra.mxu0 0.0
        %2988 = vmatprep.subr.mxu0 0.0
        %2989 = vmatpush1.msra.mxu0 0.0
        %2990 = vmatprep.subr.mxu0 0.0
        %2991 = vmatpush1.msra.mxu0 0.0
        %2992 = vmatprep.subr.mxu0 0.0
        %2993 = vmatpush1.msra.mxu0 0.0
        %2994 = vmatprep.subr.mxu0 0.0
        %2995 = vmatpush1.msra.mxu0 0.0
        %2996 = vmatprep.subr.mxu0 0.0
        %2997 = vmatpush1.msra.mxu0 0.0
        %2998 = vmatprep.subr.mxu0 0.0
        %2999 = vmatpush1.msra.mxu0 0.0
        %3000 = vmatprep.subr.mxu0 0.0
        %3001 = vmatpush1.msra.mxu0 0.0
        %3002 = vmatprep.subr.mxu0 0.0
        %3003 = vmatpush1.msra.mxu0 0.0
        %3004 = vmatprep.subr.mxu0 0.0
        %3005 = vmatpush1.msra.mxu0 0.0
        %3006 = vmatprep.subr.mxu0 0.0
        %3007 = vmatpush1.msra.mxu0 0.0
        %3008 = vmatprep.mubr.f32.mxu0 0.0
        %3009 = vmatmul.mubr.f32.gmra.mrb[0].mxu0 %v2846
        %v3010 = vpop.f32.mrb[0].mxu0
        %v3011 = vadd.f32 0.0, %v3010
        %v3012 = vpop.f32.mrb[0].mxu0
        %3013 = vmatprep.mubr.f32.mxu0 0.0
        %3014 = vmatmul.mubr.f32.gmra.mrb[0].mxu0 %v2849
        %v3015 = vpop.f32.mrb[0].mxu0
        %v3016 = vadd.f32 0.0, %v3015
        %v3017 = vpop.f32.mrb[0].mxu0
        %3018 = vmatprep.mubr.f32.mxu0 0.0
        %3019 = vmatmul.mubr.f32.gmra.mrb[0].mxu0 %v2852
        %v3020 = vpop.f32.mrb[0].mxu0
        %v3021 = vadd.f32 0.0, %v3020
        %v3022 = vpop.f32.mrb[0].mxu0
        %3023 = vmatprep.mubr.f32.mxu0 0.0
        %3024 = vmatmul.mubr.f32.gmra.mrb[0].mxu0 %v2855
        %v3025 = vpop.f32.mrb[0].mxu0
        %v3026 = vadd.f32 0.0, %v3025
        %v3027 = vpop.f32.mrb[0].mxu0
        %3028 = vmatprep.mubr.f32.mxu0 0.0
        %3029 = vmatmul.mubr.f32.gmra.mrb[0].mxu0 %v2858
        %v3030 = vpop.f32.mrb[0].mxu0
        %v3031 = vadd.f32 0.0, %v3030
        %v3032 = vpop.f32.mrb[0].mxu0
        %3033 = vmatprep.mubr.f32.mxu0 0.0
        %3034 = vmatmul.mubr.f32.gmra.mrb[0].mxu0 %v2861
        %v3035 = vpop.f32.mrb[0].mxu0
        %v3036 = vadd.f32 0.0, %v3035
        %v3037 = vpop.f32.mrb[0].mxu0
        %3038 = vmatprep.mubr.f32.mxu0 0.0
        %3039 = vmatmul.mubr.f32.gmra.mrb[0].mxu0 %v2864
        %v3040 = vpop.f32.mrb[0].mxu0
        %v3041 = vadd.f32 0.0, %v3040
        %v3042 = vpop.f32.mrb[0].mxu0
        %3043 = vmatprep.mubr.f32.mxu0 0.0
        %3044 = vmatmul.mubr.f32.gmra.mrb[0].mxu0 %v2867
        %v3045 = vpop.f32.mrb[0].mxu0
        %v3046 = vadd.f32 0.0, %v3045
        %v3047 = vpop.f32.mrb[0].mxu0
        %3048 = vmatprep.mubr.f32.mxu0 0.0
        %3049 = vmatmul.mubr.f32.gmra.mrb[0].mxu0 %v2870
        %v3050 = vpop.f32.mrb[0].mxu0
        %v3051 = vadd.f32 0.0, %v3050
        %v3052 = vpop.f32.mrb[0].mxu0
        %3053 = vmatprep.mubr.f32.mxu0 0.0
        %3054 = vmatmul.mubr.f32.gmra.mrb[0].mxu0 %v2873
        %v3055 = vpop.f32.mrb[0].mxu0
        %v3056 = vadd.f32 0.0, %v3055
        %v3057 = vpop.f32.mrb[0].mxu0
        %3058 = vmatprep.mubr.f32.mxu0 0.0
        %3059 = vmatmul.mubr.f32.gmra.mrb[0].mxu0 %v2876
        %v3060 = vpop.f32.mrb[0].mxu0
        %v3061 = vadd.f32 0.0, %v3060
        %v3062 = vpop.f32.mrb[0].mxu0
        %3063 = vmatprep.mubr.f32.mxu0 0.0
        %3064 = vmatmul.mubr.f32.gmra.mrb[0].mxu0 %v2879
        %v3065 = vpop.f32.mrb[0].mxu0
        %v3066 = vadd.f32 0.0, %v3065
        %v3067 = vpop.f32.mrb[0].mxu0
        %3068 = vmatprep.mubr.f32.mxu0 0.0
        %3069 = vmatmul.mubr.f32.gmra.mrb[0].mxu0 %v2882
        %v3070 = vpop.f32.mrb[0].mxu0
        %v3071 = vadd.f32 0.0, %v3070
        %v3072 = vpop.f32.mrb[0].mxu0
        %3073 = vmatprep.mubr.f32.mxu0 0.0
        %3074 = vmatmul.mubr.f32.gmra.mrb[0].mxu0 %v2885
        %v3075 = vpop.f32.mrb[0].mxu0
        %v3076 = vadd.f32 0.0, %v3075
        %v3077 = vpop.f32.mrb[0].mxu0
        %3078 = vmatprep.mubr.f32.mxu0 0.0
        %3079 = vmatmul.mubr.f32.gmra.mrb[0].mxu0 %v2888
        %v3080 = vpop.f32.mrb[0].mxu0
        %v3081 = vadd.f32 0.0, %v3080
        %v3082 = vpop.f32.mrb[0].mxu0
        %3083 = vmatprep.mubr.f32.mxu0 0.0
        %3084 = vmatmul.mubr.f32.gmra.mrb[0].mxu0 %v2891
        %v3085 = vpop.f32.mrb[0].mxu0
        %v3086 = vadd.f32 0.0, %v3085
        %v3087 = vpop.f32.mrb[0].mxu0
        %3088 = vmatprep.mubr.f32.mxu0 0.0
        %3089 = vmatmul.mubr.f32.gmra.mrb[0].mxu0 %v2894
        %v3090 = vpop.f32.mrb[0].mxu0
        %v3091 = vadd.f32 0.0, %v3090
        %v3092 = vpop.f32.mrb[0].mxu0
        %3093 = vmatprep.mubr.f32.mxu0 0.0
        %3094 = vmatmul.mubr.f32.gmra.mrb[0].mxu0 %v2897
        %v3095 = vpop.f32.mrb[0].mxu0
        %v3096 = vadd.f32 0.0, %v3095
        %v3097 = vpop.f32.mrb[0].mxu0
        %3098 = vmatprep.mubr.f32.mxu0 0.0
        %3099 = vmatmul.mubr.f32.gmra.mrb[0].mxu0 %v2900
        %v3100 = vpop.f32.mrb[0].mxu0
        %v3101 = vadd.f32 0.0, %v3100
        %v3102 = vpop.f32.mrb[0].mxu0
        %3103 = vmatprep.mubr.f32.mxu0 0.0
        %3104 = vmatmul.mubr.f32.gmra.mrb[0].mxu0 %v2903
        %v3105 = vpop.f32.mrb[0].mxu0
        %v3106 = vadd.f32 0.0, %v3105
        %v3107 = vpop.f32.mrb[0].mxu0
        %3108 = vmatprep.mubr.f32.mxu0 0.0
        %3109 = vmatmul.mubr.f32.gmra.mrb[0].mxu0 %v2906
        %v3110 = vpop.f32.mrb[0].mxu0
        %v3111 = vadd.f32 0.0, %v3110
        %v3112 = vpop.f32.mrb[0].mxu0
        %3113 = vmatprep.mubr.f32.mxu0 0.0
        %3114 = vmatmul.mubr.f32.gmra.mrb[0].mxu0 %v2909
        %v3115 = vpop.f32.mrb[0].mxu0
        %v3116 = vadd.f32 0.0, %v3115
        %v3117 = vpop.f32.mrb[0].mxu0
        %3118 = vmatprep.mubr.f32.mxu0 0.0
        %3119 = vmatmul.mubr.f32.gmra.mrb[0].mxu0 %v2912
        %v3120 = vpop.f32.mrb[0].mxu0
        %v3121 = vadd.f32 0.0, %v3120
        %v3122 = vpop.f32.mrb[0].mxu0
        %3123 = vmatprep.mubr.f32.mxu0 0.0
        %3124 = vmatmul.mubr.f32.gmra.mrb[0].mxu0 %v2915
        %v3125 = vpop.f32.mrb[0].mxu0
        %v3126 = vadd.f32 0.0, %v3125
        %v3127 = vpop.f32.mrb[0].mxu0
        %3128 = vmatprep.mubr.f32.mxu0 0.0
        %3129 = vmatmul.mubr.f32.gmra.mrb[0].mxu0 %v2918
        %v3130 = vpop.f32.mrb[0].mxu0
        %v3131 = vadd.f32 0.0, %v3130
        %v3132 = vpop.f32.mrb[0].mxu0
        %3133 = vmatprep.mubr.f32.mxu0 0.0
        %3134 = vmatmul.mubr.f32.gmra.mrb[0].mxu0 %v2921
        %v3135 = vpop.f32.mrb[0].mxu0
        %v3136 = vadd.f32 0.0, %v3135
        %v3137 = vpop.f32.mrb[0].mxu0
        %3138 = vmatprep.mubr.f32.mxu0 0.0
        %3139 = vmatmul.mubr.f32.gmra.mrb[0].mxu0 %v2924
        %v3140 = vpop.f32.mrb[0].mxu0
        %v3141 = vadd.f32 0.0, %v3140
        %v3142 = vpop.f32.mrb[0].mxu0
        %3143 = vmatprep.mubr.f32.mxu0 0.0
        %3144 = vmatmul.mubr.f32.gmra.mrb[0].mxu0 %v2927
        %v3145 = vpop.f32.mrb[0].mxu0
        %v3146 = vadd.f32 0.0, %v3145
        %v3147 = vpop.f32.mrb[0].mxu0
        %3148 = vmatprep.mubr.f32.mxu0 0.0
        %3149 = vmatmul.mubr.f32.gmra.mrb[0].mxu0 %v2930
        %v3150 = vpop.f32.mrb[0].mxu0
        %v3151 = vadd.f32 0.0, %v3150
        %v3152 = vpop.f32.mrb[0].mxu0
        %3153 = vmatprep.mubr.f32.mxu0 0.0
        %3154 = vmatmul.mubr.f32.gmra.mrb[0].mxu0 %v2933
        %v3155 = vpop.f32.mrb[0].mxu0
        %v3156 = vadd.f32 0.0, %v3155
        %v3157 = vpop.f32.mrb[0].mxu0
        %3158 = vmatprep.mubr.f32.mxu0 0.0
        %3159 = vmatmul.mubr.f32.gmra.mrb[0].mxu0 %v2936
        %v3160 = vpop.f32.mrb[0].mxu0
        %v3161 = vadd.f32 0.0, %v3160
        %v3162 = vpop.f32.mrb[0].mxu0
        %3163 = vmatprep.mubr.f32.mxu0 0.0
        %3164 = vmatmul.mubr.f32.gmra.mrb[0].mxu0 %v2939
        %v3165 = vpop.f32.mrb[0].mxu0
        %v3166 = vadd.f32 0.0, %v3165
        %v3167 = vpop.f32.mrb[0].mxu0
        %3168 = vdwg.mxu0
        %v3169 = vmul.f32 %v3011, %v1782
        %v3170 = vmul.f32 %v3016, %v1786
        %v3171 = vmul.f32 %v3021, %v1790
        %v3172 = vmul.f32 %v3026, %v1794
        %v3173 = vmul.f32 %v3031, %v1798
        %v3174 = vmul.f32 %v3036, %v1802
        %v3175 = vmul.f32 %v3041, %v1806
        %v3176 = vmul.f32 %v3046, %v1810
        %v3177 = vmul.f32 %v3051, %v1814
        %v3178 = vmul.f32 %v3056, %v1818
        %v3179 = vmul.f32 %v3061, %v1822
        %v3180 = vmul.f32 %v3066, %v1826
        %v3181 = vmul.f32 %v3071, %v1830
        %v3182 = vmul.f32 %v3076, %v1834
        %v3183 = vmul.f32 %v3081, %v1838
        %v3184 = vmul.f32 %v3086, %v1842
        %v3185 = vmul.f32 %v3091, %v1846
        %v3186 = vmul.f32 %v3096, %v1850
        %v3187 = vmul.f32 %v3101, %v1854
        %v3188 = vmul.f32 %v3106, %v1858
        %v3189 = vmul.f32 %v3111, %v1862
        %v3190 = vmul.f32 %v3116, %v1866
        %v3191 = vmul.f32 %v3121, %v1870
        %v3192 = vmul.f32 %v3126, %v1874
        %v3193 = vmul.f32 %v3131, %v1878
        %v3194 = vmul.f32 %v3136, %v1882
        %v3195 = vmul.f32 %v3141, %v1886
        %v3196 = vmul.f32 %v3146, %v1890
        %v3197 = vmul.f32 %v3151, %v1894
        %v3198 = vmul.f32 %v3156, %v1898
        %v3199 = vmul.f32 %v3161, %v1902
        %v3200 = vmul.f32 %v3166, %v1906
        %v3201 = vadd.f32 %v2770, %v3169
        %v3202 = vadd.f32 %v2771, %v3170
        %v3203 = vadd.f32 %v2772, %v3171
        %v3204 = vadd.f32 %v2773, %v3172
        %v3205 = vadd.f32 %v2774, %v3173
        %v3206 = vadd.f32 %v2775, %v3174
        %v3207 = vadd.f32 %v2776, %v3175
        %v3208 = vadd.f32 %v2777, %v3176
        %v3209 = vadd.f32 %v2778, %v3177
        %v3210 = vadd.f32 %v2779, %v3178
        %v3211 = vadd.f32 %v2780, %v3179
        %v3212 = vadd.f32 %v2781, %v3180
        %v3213 = vadd.f32 %v2782, %v3181
        %v3214 = vadd.f32 %v2783, %v3182
        %v3215 = vadd.f32 %v2784, %v3183
        %v3216 = vadd.f32 %v2785, %v3184
        %v3217 = vadd.f32 %v2786, %v3185
        %v3218 = vadd.f32 %v2787, %v3186
        %v3219 = vadd.f32 %v2788, %v3187
        %v3220 = vadd.f32 %v2789, %v3188
        %v3221 = vadd.f32 %v2790, %v3189
        %v3222 = vadd.f32 %v2791, %v3190
        %v3223 = vadd.f32 %v2792, %v3191
        %v3224 = vadd.f32 %v2793, %v3192
        %v3225 = vadd.f32 %v2794, %v3193
        %v3226 = vadd.f32 %v2795, %v3194
        %v3227 = vadd.f32 %v2796, %v3195
        %v3228 = vadd.f32 %v2797, %v3196
        %v3229 = vadd.f32 %v2798, %v3197
        %v3230 = vadd.f32 %v2799, %v3198
        %v3231 = vadd.f32 %v2800, %v3199
        %v3232 = vadd.f32 %v2801, %v3200
        %v3233 = vld [vmem:[#allocation2 + $0x27] sm:$0xff]
        %v3234 = vld [vmem:[#allocation2 + $0x2f] sm:$0xff]
        %v3235 = vld [vmem:[#allocation2 + $0x37] sm:$0xff]
        %v3236 = vld [vmem:[#allocation2 + $0x3f] sm:$0xff]
        %v3237 = vld [vmem:[#allocation2 + $0x47] sm:$0xff]
        %v3238 = vld [vmem:[#allocation2 + $0x4f] sm:$0xff]
        %v3239 = vld [vmem:[#allocation2 + $0x57] sm:$0xff]
        %v3240 = vld [vmem:[#allocation2 + $0x5f] sm:$0xff]
        %v3241 = vld [vmem:[#allocation2 + $0x67] sm:$0xff]
        %v3242 = vld [vmem:[#allocation2 + $0x6f] sm:$0xff]
        %v3243 = vld [vmem:[#allocation2 + $0x77] sm:$0xff]
        %v3244 = vld [vmem:[#allocation2 + $0x7f] sm:$0xff]
        %v3245 = vld [vmem:[#allocation2 + $0x87] sm:$0xff]
        %v3246 = vld [vmem:[#allocation2 + $0x8f] sm:$0xff]
        %v3247 = vld [vmem:[#allocation2 + $0x97] sm:$0xff]
        %v3248 = vld [vmem:[#allocation2 + $0x9f] sm:$0xff]
        %v3249 = vld [vmem:[#allocation2 + $0xa7] sm:$0xff]
        %v3250 = vld [vmem:[#allocation2 + $0xaf] sm:$0xff]
        %v3251 = vld [vmem:[#allocation2 + $0xb7] sm:$0xff]
        %v3252 = vld [vmem:[#allocation2 + $0xbf] sm:$0xff]
        %v3253 = vld [vmem:[#allocation2 + $0xc7] sm:$0xff]
        %v3254 = vld [vmem:[#allocation2 + $0xcf] sm:$0xff]
        %v3255 = vld [vmem:[#allocation2 + $0xd7] sm:$0xff]
        %v3256 = vld [vmem:[#allocation2 + $0xdf] sm:$0xff]
        %v3257 = vld [vmem:[#allocation2 + $0xe7] sm:$0xff]
        %v3258 = vld [vmem:[#allocation2 + $0xef] sm:$0xff]
        %v3259 = vld [vmem:[#allocation2 + $0xf7] sm:$0xff]
        %v3260 = vld [vmem:[#allocation2 + $0xff] sm:$0xff]
        %v3261 = vld [vmem:[#allocation2 + $0x107] sm:$0xff]
        %v3262 = vld [vmem:[#allocation2 + $0x10f] sm:$0xff]
        %v3263 = vld [vmem:[#allocation2 + $0x117] sm:$0xff]
        %v3264 = vld [vmem:[#allocation2 + $0x11f] sm:$0xff]
        %s3265 = scalar_lea.vmem %s2, 120
        %v3266 = vld [vmem:[%s3265] sm:$0xf]
        %v3267 = vld [vmem:[%s3265 + $0x4] sm:$0xf]
        %v3268 = vld [vmem:[%s3265 + $0x8] sm:$0xf]
        %v3269 = vld [vmem:[%s3265 + $0xc] sm:$0xf]
        %v3270 = vld [vmem:[%s3265 + $0x10] sm:$0x3]
        %v3271 = vunpack.c.l.bf16 %v3266
        %v3272 = vunpack.c.l.bf16 %v3267
        %v3273 = vunpack.c.l.bf16 %v3268
        %v3274 = vunpack.c.l.bf16 %v3269
        %v3275 = vunpack.c.l.bf16 %v3270
        %v3277 = vsel %vm281, %v3233, 0
        %v3280 = vsel %vm281, %v3234, 0
        %v3283 = vsel %vm281, %v3235, 0
        %v3286 = vsel %vm281, %v3236, 0
        %v3289 = vsel %vm281, %v3237, 0
        %v3292 = vsel %vm281, %v3238, 0
        %v3295 = vsel %vm281, %v3239, 0
        %v3298 = vsel %vm281, %v3240, 0
        %v3301 = vsel %vm281, %v3241, 0
        %v3304 = vsel %vm281, %v3242, 0
        %v3307 = vsel %vm281, %v3243, 0
        %v3310 = vsel %vm281, %v3244, 0
        %v3313 = vsel %vm281, %v3245, 0
        %v3316 = vsel %vm281, %v3246, 0
        %v3319 = vsel %vm281, %v3247, 0
        %v3322 = vsel %vm281, %v3248, 0
        %v3325 = vsel %vm281, %v3249, 0
        %v3328 = vsel %vm281, %v3250, 0
        %v3331 = vsel %vm281, %v3251, 0
        %v3334 = vsel %vm281, %v3252, 0
        %v3337 = vsel %vm281, %v3253, 0
        %v3340 = vsel %vm281, %v3254, 0
        %v3343 = vsel %vm281, %v3255, 0
        %v3346 = vsel %vm281, %v3256, 0
        %v3349 = vsel %vm281, %v3257, 0
        %v3352 = vsel %vm281, %v3258, 0
        %v3355 = vsel %vm281, %v3259, 0
        %v3358 = vsel %vm281, %v3260, 0
        %v3361 = vsel %vm281, %v3261, 0
        %v3364 = vsel %vm281, %v3262, 0
        %v3367 = vsel %vm281, %v3263, 0
        %v3370 = vsel %vm281, %v3264, 0
        %v3373 = vsel %vm561, %v3275, 0
        %3375 = vmatprep.subr.mxu0 0.0
        %3376 = vmatpush1.msra.mxu0 %v3271
        %3377 = vmatprep.subr.mxu0 0.0
        %3378 = vmatpush1.msra.mxu0 %v3272
        %3379 = vmatprep.subr.mxu0 0.0
        %3380 = vmatpush1.msra.mxu0 %v3273
        %3381 = vmatprep.subr.mxu0 0.0
        %3382 = vmatpush1.msra.mxu0 %v3274
        %3383 = vmatprep.subr.mxu0 0.0
        %3384 = vmatpush1.msra.mxu0 %v3373
        %3385 = vmatprep.subr.mxu0 0.0
        %3386 = vmatpush1.msra.mxu0 0.0
        %3387 = vmatprep.subr.mxu0 0.0
        %3388 = vmatpush1.msra.mxu0 0.0
        %3389 = vmatprep.subr.mxu0 0.0
        %3390 = vmatpush1.msra.mxu0 0.0
        %3391 = vmatprep.subr.mxu0 0.0
        %3392 = vmatpush1.msra.mxu0 0.0
        %3393 = vmatprep.subr.mxu0 0.0
        %3394 = vmatpush1.msra.mxu0 0.0
        %3395 = vmatprep.subr.mxu0 0.0
        %3396 = vmatpush1.msra.mxu0 0.0
        %3397 = vmatprep.subr.mxu0 0.0
        %3398 = vmatpush1.msra.mxu0 0.0
        %3399 = vmatprep.subr.mxu0 0.0
        %3400 = vmatpush1.msra.mxu0 0.0
        %3401 = vmatprep.subr.mxu0 0.0
        %3402 = vmatpush1.msra.mxu0 0.0
        %3403 = vmatprep.subr.mxu0 0.0
        %3404 = vmatpush1.msra.mxu0 0.0
        %3405 = vmatprep.subr.mxu0 0.0
        %3406 = vmatpush1.msra.mxu0 0.0
        %3407 = vmatprep.subr.mxu0 0.0
        %3408 = vmatpush1.msra.mxu0 0.0
        %3409 = vmatprep.subr.mxu0 0.0
        %3410 = vmatpush1.msra.mxu0 0.0
        %3411 = vmatprep.subr.mxu0 0.0
        %3412 = vmatpush1.msra.mxu0 0.0
        %3413 = vmatprep.subr.mxu0 0.0
        %3414 = vmatpush1.msra.mxu0 0.0
        %3415 = vmatprep.subr.mxu0 0.0
        %3416 = vmatpush1.msra.mxu0 0.0
        %3417 = vmatprep.subr.mxu0 0.0
        %3418 = vmatpush1.msra.mxu0 0.0
        %3419 = vmatprep.subr.mxu0 0.0
        %3420 = vmatpush1.msra.mxu0 0.0
        %3421 = vmatprep.subr.mxu0 0.0
        %3422 = vmatpush1.msra.mxu0 0.0
        %3423 = vmatprep.subr.mxu0 0.0
        %3424 = vmatpush1.msra.mxu0 0.0
        %3425 = vmatprep.subr.mxu0 0.0
        %3426 = vmatpush1.msra.mxu0 0.0
        %3427 = vmatprep.subr.mxu0 0.0
        %3428 = vmatpush1.msra.mxu0 0.0
        %3429 = vmatprep.subr.mxu0 0.0
        %3430 = vmatpush1.msra.mxu0 0.0
        %3431 = vmatprep.subr.mxu0 0.0
        %3432 = vmatpush1.msra.mxu0 0.0
        %3433 = vmatprep.subr.mxu0 0.0
        %3434 = vmatpush1.msra.mxu0 0.0
        %3435 = vmatprep.subr.mxu0 0.0
        %3436 = vmatpush1.msra.mxu0 0.0
        %3437 = vmatprep.subr.mxu0 0.0
        %3438 = vmatpush1.msra.mxu0 0.0
        %3439 = vmatprep.mubr.f32.mxu0 0.0
        %3440 = vmatmul.mubr.f32.gmra.mrb[0].mxu0 %v3277
        %v3441 = vpop.f32.mrb[0].mxu0
        %v3442 = vadd.f32 0.0, %v3441
        %v3443 = vpop.f32.mrb[0].mxu0
        %3444 = vmatprep.mubr.f32.mxu0 0.0
        %3445 = vmatmul.mubr.f32.gmra.mrb[0].mxu0 %v3280
        %v3446 = vpop.f32.mrb[0].mxu0
        %v3447 = vadd.f32 0.0, %v3446
        %v3448 = vpop.f32.mrb[0].mxu0
        %3449 = vmatprep.mubr.f32.mxu0 0.0
        %3450 = vmatmul.mubr.f32.gmra.mrb[0].mxu0 %v3283
        %v3451 = vpop.f32.mrb[0].mxu0
        %v3452 = vadd.f32 0.0, %v3451
        %v3453 = vpop.f32.mrb[0].mxu0
        %3454 = vmatprep.mubr.f32.mxu0 0.0
        %3455 = vmatmul.mubr.f32.gmra.mrb[0].mxu0 %v3286
        %v3456 = vpop.f32.mrb[0].mxu0
        %v3457 = vadd.f32 0.0, %v3456
        %v3458 = vpop.f32.mrb[0].mxu0
        %3459 = vmatprep.mubr.f32.mxu0 0.0
        %3460 = vmatmul.mubr.f32.gmra.mrb[0].mxu0 %v3289
        %v3461 = vpop.f32.mrb[0].mxu0
        %v3462 = vadd.f32 0.0, %v3461
        %v3463 = vpop.f32.mrb[0].mxu0
        %3464 = vmatprep.mubr.f32.mxu0 0.0
        %3465 = vmatmul.mubr.f32.gmra.mrb[0].mxu0 %v3292
        %v3466 = vpop.f32.mrb[0].mxu0
        %v3467 = vadd.f32 0.0, %v3466
        %v3468 = vpop.f32.mrb[0].mxu0
        %3469 = vmatprep.mubr.f32.mxu0 0.0
        %3470 = vmatmul.mubr.f32.gmra.mrb[0].mxu0 %v3295
        %v3471 = vpop.f32.mrb[0].mxu0
        %v3472 = vadd.f32 0.0, %v3471
        %v3473 = vpop.f32.mrb[0].mxu0
        %3474 = vmatprep.mubr.f32.mxu0 0.0
        %3475 = vmatmul.mubr.f32.gmra.mrb[0].mxu0 %v3298
        %v3476 = vpop.f32.mrb[0].mxu0
        %v3477 = vadd.f32 0.0, %v3476
        %v3478 = vpop.f32.mrb[0].mxu0
        %3479 = vmatprep.mubr.f32.mxu0 0.0
        %3480 = vmatmul.mubr.f32.gmra.mrb[0].mxu0 %v3301
        %v3481 = vpop.f32.mrb[0].mxu0
        %v3482 = vadd.f32 0.0, %v3481
        %v3483 = vpop.f32.mrb[0].mxu0
        %3484 = vmatprep.mubr.f32.mxu0 0.0
        %3485 = vmatmul.mubr.f32.gmra.mrb[0].mxu0 %v3304
        %v3486 = vpop.f32.mrb[0].mxu0
        %v3487 = vadd.f32 0.0, %v3486
        %v3488 = vpop.f32.mrb[0].mxu0
        %3489 = vmatprep.mubr.f32.mxu0 0.0
        %3490 = vmatmul.mubr.f32.gmra.mrb[0].mxu0 %v3307
        %v3491 = vpop.f32.mrb[0].mxu0
        %v3492 = vadd.f32 0.0, %v3491
        %v3493 = vpop.f32.mrb[0].mxu0
        %3494 = vmatprep.mubr.f32.mxu0 0.0
        %3495 = vmatmul.mubr.f32.gmra.mrb[0].mxu0 %v3310
        %v3496 = vpop.f32.mrb[0].mxu0
        %v3497 = vadd.f32 0.0, %v3496
        %v3498 = vpop.f32.mrb[0].mxu0
        %3499 = vmatprep.mubr.f32.mxu0 0.0
        %3500 = vmatmul.mubr.f32.gmra.mrb[0].mxu0 %v3313
        %v3501 = vpop.f32.mrb[0].mxu0
        %v3502 = vadd.f32 0.0, %v3501
        %v3503 = vpop.f32.mrb[0].mxu0
        %3504 = vmatprep.mubr.f32.mxu0 0.0
        %3505 = vmatmul.mubr.f32.gmra.mrb[0].mxu0 %v3316
        %v3506 = vpop.f32.mrb[0].mxu0
        %v3507 = vadd.f32 0.0, %v3506
        %v3508 = vpop.f32.mrb[0].mxu0
        %3509 = vmatprep.mubr.f32.mxu0 0.0
        %3510 = vmatmul.mubr.f32.gmra.mrb[0].mxu0 %v3319
        %v3511 = vpop.f32.mrb[0].mxu0
        %v3512 = vadd.f32 0.0, %v3511
        %v3513 = vpop.f32.mrb[0].mxu0
        %3514 = vmatprep.mubr.f32.mxu0 0.0
        %3515 = vmatmul.mubr.f32.gmra.mrb[0].mxu0 %v3322
        %v3516 = vpop.f32.mrb[0].mxu0
        %v3517 = vadd.f32 0.0, %v3516
        %v3518 = vpop.f32.mrb[0].mxu0
        %3519 = vmatprep.mubr.f32.mxu0 0.0
        %3520 = vmatmul.mubr.f32.gmra.mrb[0].mxu0 %v3325
        %v3521 = vpop.f32.mrb[0].mxu0
        %v3522 = vadd.f32 0.0, %v3521
        %v3523 = vpop.f32.mrb[0].mxu0
        %3524 = vmatprep.mubr.f32.mxu0 0.0
        %3525 = vmatmul.mubr.f32.gmra.mrb[0].mxu0 %v3328
        %v3526 = vpop.f32.mrb[0].mxu0
        %v3527 = vadd.f32 0.0, %v3526
        %v3528 = vpop.f32.mrb[0].mxu0
        %3529 = vmatprep.mubr.f32.mxu0 0.0
        %3530 = vmatmul.mubr.f32.gmra.mrb[0].mxu0 %v3331
        %v3531 = vpop.f32.mrb[0].mxu0
        %v3532 = vadd.f32 0.0, %v3531
        %v3533 = vpop.f32.mrb[0].mxu0
        %3534 = vmatprep.mubr.f32.mxu0 0.0
        %3535 = vmatmul.mubr.f32.gmra.mrb[0].mxu0 %v3334
        %v3536 = vpop.f32.mrb[0].mxu0
        %v3537 = vadd.f32 0.0, %v3536
        %v3538 = vpop.f32.mrb[0].mxu0
        %3539 = vmatprep.mubr.f32.mxu0 0.0
        %3540 = vmatmul.mubr.f32.gmra.mrb[0].mxu0 %v3337
        %v3541 = vpop.f32.mrb[0].mxu0
        %v3542 = vadd.f32 0.0, %v3541
        %v3543 = vpop.f32.mrb[0].mxu0
        %3544 = vmatprep.mubr.f32.mxu0 0.0
        %3545 = vmatmul.mubr.f32.gmra.mrb[0].mxu0 %v3340
        %v3546 = vpop.f32.mrb[0].mxu0
        %v3547 = vadd.f32 0.0, %v3546
        %v3548 = vpop.f32.mrb[0].mxu0
        %3549 = vmatprep.mubr.f32.mxu0 0.0
        %3550 = vmatmul.mubr.f32.gmra.mrb[0].mxu0 %v3343
        %v3551 = vpop.f32.mrb[0].mxu0
        %v3552 = vadd.f32 0.0, %v3551
        %v3553 = vpop.f32.mrb[0].mxu0
        %3554 = vmatprep.mubr.f32.mxu0 0.0
        %3555 = vmatmul.mubr.f32.gmra.mrb[0].mxu0 %v3346
        %v3556 = vpop.f32.mrb[0].mxu0
        %v3557 = vadd.f32 0.0, %v3556
        %v3558 = vpop.f32.mrb[0].mxu0
        %3559 = vmatprep.mubr.f32.mxu0 0.0
        %3560 = vmatmul.mubr.f32.gmra.mrb[0].mxu0 %v3349
        %v3561 = vpop.f32.mrb[0].mxu0
        %v3562 = vadd.f32 0.0, %v3561
        %v3563 = vpop.f32.mrb[0].mxu0
        %3564 = vmatprep.mubr.f32.mxu0 0.0
        %3565 = vmatmul.mubr.f32.gmra.mrb[0].mxu0 %v3352
        %v3566 = vpop.f32.mrb[0].mxu0
        %v3567 = vadd.f32 0.0, %v3566
        %v3568 = vpop.f32.mrb[0].mxu0
        %3569 = vmatprep.mubr.f32.mxu0 0.0
        %3570 = vmatmul.mubr.f32.gmra.mrb[0].mxu0 %v3355
        %v3571 = vpop.f32.mrb[0].mxu0
        %v3572 = vadd.f32 0.0, %v3571
        %v3573 = vpop.f32.mrb[0].mxu0
        %3574 = vmatprep.mubr.f32.mxu0 0.0
        %3575 = vmatmul.mubr.f32.gmra.mrb[0].mxu0 %v3358
        %v3576 = vpop.f32.mrb[0].mxu0
        %v3577 = vadd.f32 0.0, %v3576
        %v3578 = vpop.f32.mrb[0].mxu0
        %3579 = vmatprep.mubr.f32.mxu0 0.0
        %3580 = vmatmul.mubr.f32.gmra.mrb[0].mxu0 %v3361
        %v3581 = vpop.f32.mrb[0].mxu0
        %v3582 = vadd.f32 0.0, %v3581
        %v3583 = vpop.f32.mrb[0].mxu0
        %3584 = vmatprep.mubr.f32.mxu0 0.0
        %3585 = vmatmul.mubr.f32.gmra.mrb[0].mxu0 %v3364
        %v3586 = vpop.f32.mrb[0].mxu0
        %v3587 = vadd.f32 0.0, %v3586
        %v3588 = vpop.f32.mrb[0].mxu0
        %3589 = vmatprep.mubr.f32.mxu0 0.0
        %3590 = vmatmul.mubr.f32.gmra.mrb[0].mxu0 %v3367
        %v3591 = vpop.f32.mrb[0].mxu0
        %v3592 = vadd.f32 0.0, %v3591
        %v3593 = vpop.f32.mrb[0].mxu0
        %3594 = vmatprep.mubr.f32.mxu0 0.0
        %3595 = vmatmul.mubr.f32.gmra.mrb[0].mxu0 %v3370
        %v3596 = vpop.f32.mrb[0].mxu0
        %v3597 = vadd.f32 0.0, %v3596
        %v3598 = vpop.f32.mrb[0].mxu0
        %3599 = vdwg.mxu0
        %v3600 = vmul.f32 %v3442, %v793
        %v3601 = vmul.f32 %v3447, %v798
        %v3602 = vmul.f32 %v3452, %v803
        %v3603 = vmul.f32 %v3457, %v808
        %v3604 = vmul.f32 %v3462, %v813
        %v3605 = vmul.f32 %v3467, %v818
        %v3606 = vmul.f32 %v3472, %v823
        %v3607 = vmul.f32 %v3477, %v828
        %v3608 = vmul.f32 %v3482, %v833
        %v3609 = vmul.f32 %v3487, %v838
        %v3610 = vmul.f32 %v3492, %v843
        %v3611 = vmul.f32 %v3497, %v848
        %v3612 = vmul.f32 %v3502, %v853
        %v3613 = vmul.f32 %v3507, %v858
        %v3614 = vmul.f32 %v3512, %v863
        %v3615 = vmul.f32 %v3517, %v868
        %v3616 = vmul.f32 %v3522, %v873
        %v3617 = vmul.f32 %v3527, %v878
        %v3618 = vmul.f32 %v3532, %v883
        %v3619 = vmul.f32 %v3537, %v888
        %v3620 = vmul.f32 %v3542, %v893
        %v3621 = vmul.f32 %v3547, %v898
        %v3622 = vmul.f32 %v3552, %v903
        %v3623 = vmul.f32 %v3557, %v908
        %v3624 = vmul.f32 %v3562, %v913
        %v3625 = vmul.f32 %v3567, %v918
        %v3626 = vmul.f32 %v3572, %v923
        %v3627 = vmul.f32 %v3577, %v928
        %v3628 = vmul.f32 %v3582, %v933
        %v3629 = vmul.f32 %v3587, %v938
        %v3630 = vmul.f32 %v3592, %v943
        %v3631 = vmul.f32 %v3597, %v948
        %v3632 = vadd.f32 %v3201, %v3600
        %v3633 = vadd.f32 %v3202, %v3601
        %v3634 = vadd.f32 %v3203, %v3602
        %v3635 = vadd.f32 %v3204, %v3603
        %v3636 = vadd.f32 %v3205, %v3604
        %v3637 = vadd.f32 %v3206, %v3605
        %v3638 = vadd.f32 %v3207, %v3606
        %v3639 = vadd.f32 %v3208, %v3607
        %v3640 = vadd.f32 %v3209, %v3608
        %v3641 = vadd.f32 %v3210, %v3609
        %v3642 = vadd.f32 %v3211, %v3610
        %v3643 = vadd.f32 %v3212, %v3611
        %v3644 = vadd.f32 %v3213, %v3612
        %v3645 = vadd.f32 %v3214, %v3613
        %v3646 = vadd.f32 %v3215, %v3614
        %v3647 = vadd.f32 %v3216, %v3615
        %v3648 = vadd.f32 %v3217, %v3616
        %v3649 = vadd.f32 %v3218, %v3617
        %v3650 = vadd.f32 %v3219, %v3618
        %v3651 = vadd.f32 %v3220, %v3619
        %v3652 = vadd.f32 %v3221, %v3620
        %v3653 = vadd.f32 %v3222, %v3621
        %v3654 = vadd.f32 %v3223, %v3622
        %v3655 = vadd.f32 %v3224, %v3623
        %v3656 = vadd.f32 %v3225, %v3624
        %v3657 = vadd.f32 %v3226, %v3625
        %v3658 = vadd.f32 %v3227, %v3626
        %v3659 = vadd.f32 %v3228, %v3627
        %v3660 = vadd.f32 %v3229, %v3628
        %v3661 = vadd.f32 %v3230, %v3629
        %v3662 = vadd.f32 %v3231, %v3630
        %v3663 = vadd.f32 %v3232, %v3631
        %v3664 = vld [vmem:[#allocation2 + $0x28] sm:$0xff]
        %v3665 = vld [vmem:[#allocation2 + $0x30] sm:$0xff]
        %v3666 = vld [vmem:[#allocation2 + $0x38] sm:$0xff]
        %v3667 = vld [vmem:[#allocation2 + $0x40] sm:$0xff]
        %v3668 = vld [vmem:[#allocation2 + $0x48] sm:$0xff]
        %v3669 = vld [vmem:[#allocation2 + $0x50] sm:$0xff]
        %v3670 = vld [vmem:[#allocation2 + $0x58] sm:$0xff]
        %v3671 = vld [vmem:[#allocation2 + $0x60] sm:$0xff]
        %v3672 = vld [vmem:[#allocation2 + $0x68] sm:$0xff]
        %v3673 = vld [vmem:[#allocation2 + $0x70] sm:$0xff]
        %v3674 = vld [vmem:[#allocation2 + $0x78] sm:$0xff]
        %v3675 = vld [vmem:[#allocation2 + $0x80] sm:$0xff]
        %v3676 = vld [vmem:[#allocation2 + $0x88] sm:$0xff]
        %v3677 = vld [vmem:[#allocation2 + $0x90] sm:$0xff]
        %v3678 = vld [vmem:[#allocation2 + $0x98] sm:$0xff]
        %v3679 = vld [vmem:[#allocation2 + $0xa0] sm:$0xff]
        %v3680 = vld [vmem:[#allocation2 + $0xa8] sm:$0xff]
        %v3681 = vld [vmem:[#allocation2 + $0xb0] sm:$0xff]
        %v3682 = vld [vmem:[#allocation2 + $0xb8] sm:$0xff]
        %v3683 = vld [vmem:[#allocation2 + $0xc0] sm:$0xff]
        %v3684 = vld [vmem:[#allocation2 + $0xc8] sm:$0xff]
        %v3685 = vld [vmem:[#allocation2 + $0xd0] sm:$0xff]
        %v3686 = vld [vmem:[#allocation2 + $0xd8] sm:$0xff]
        %v3687 = vld [vmem:[#allocation2 + $0xe0] sm:$0xff]
        %v3688 = vld [vmem:[#allocation2 + $0xe8] sm:$0xff]
        %v3689 = vld [vmem:[#allocation2 + $0xf0] sm:$0xff]
        %v3690 = vld [vmem:[#allocation2 + $0xf8] sm:$0xff]
        %v3691 = vld [vmem:[#allocation2 + $0x100] sm:$0xff]
        %v3692 = vld [vmem:[#allocation2 + $0x108] sm:$0xff]
        %v3693 = vld [vmem:[#allocation2 + $0x110] sm:$0xff]
        %v3694 = vld [vmem:[#allocation2 + $0x118] sm:$0xff]
        %v3695 = vld [vmem:[#allocation2 + $0x120] sm:$0xff]
        %s3696 = scalar_lea.vmem %s2, 140
        %v3697 = vld [vmem:[%s3696] sm:$0xf]
        %v3698 = vld [vmem:[%s3696 + $0x4] sm:$0xf]
        %v3699 = vld [vmem:[%s3696 + $0x8] sm:$0xf]
        %v3700 = vld [vmem:[%s3696 + $0xc] sm:$0xf]
        %v3701 = vld [vmem:[%s3696 + $0x10] sm:$0x3]
        %v3702 = vunpack.c.l.bf16 %v3697
        %v3703 = vunpack.c.l.bf16 %v3698
        %v3704 = vunpack.c.l.bf16 %v3699
        %v3705 = vunpack.c.l.bf16 %v3700
        %v3706 = vunpack.c.l.bf16 %v3701
        %v3708 = vsel %vm281, %v3664, 0
        %v3711 = vsel %vm281, %v3665, 0
        %v3714 = vsel %vm281, %v3666, 0
        %v3717 = vsel %vm281, %v3667, 0
        %v3720 = vsel %vm281, %v3668, 0
        %v3723 = vsel %vm281, %v3669, 0
        %v3726 = vsel %vm281, %v3670, 0
        %v3729 = vsel %vm281, %v3671, 0
        %v3732 = vsel %vm281, %v3672, 0
        %v3735 = vsel %vm281, %v3673, 0
        %v3738 = vsel %vm281, %v3674, 0
        %v3741 = vsel %vm281, %v3675, 0
        %v3744 = vsel %vm281, %v3676, 0
        %v3747 = vsel %vm281, %v3677, 0
        %v3750 = vsel %vm281, %v3678, 0
        %v3753 = vsel %vm281, %v3679, 0
        %v3756 = vsel %vm281, %v3680, 0
        %v3759 = vsel %vm281, %v3681, 0
        %v3762 = vsel %vm281, %v3682, 0
        %v3765 = vsel %vm281, %v3683, 0
        %v3768 = vsel %vm281, %v3684, 0
        %v3771 = vsel %vm281, %v3685, 0
        %v3774 = vsel %vm281, %v3686, 0
        %v3777 = vsel %vm281, %v3687, 0
        %v3780 = vsel %vm281, %v3688, 0
        %v3783 = vsel %vm281, %v3689, 0
        %v3786 = vsel %vm281, %v3690, 0
        %v3789 = vsel %vm281, %v3691, 0
        %v3792 = vsel %vm281, %v3692, 0
        %v3795 = vsel %vm281, %v3693, 0
        %v3798 = vsel %vm281, %v3694, 0
        %v3801 = vsel %vm281, %v3695, 0
        %v3804 = vsel %vm561, %v3706, 0
        %3806 = vmatprep.subr.mxu0 0.0
        %3807 = vmatpush1.msra.mxu0 %v3702
        %3808 = vmatprep.subr.mxu0 0.0
        %3809 = vmatpush1.msra.mxu0 %v3703
        %3810 = vmatprep.subr.mxu0 0.0
        %3811 = vmatpush1.msra.mxu0 %v3704
        %3812 = vmatprep.subr.mxu0 0.0
        %3813 = vmatpush1.msra.mxu0 %v3705
        %3814 = vmatprep.subr.mxu0 0.0
        %3815 = vmatpush1.msra.mxu0 %v3804
        %3816 = vmatprep.subr.mxu0 0.0
        %3817 = vmatpush1.msra.mxu0 0.0
        %3818 = vmatprep.subr.mxu0 0.0
        %3819 = vmatpush1.msra.mxu0 0.0
        %3820 = vmatprep.subr.mxu0 0.0
        %3821 = vmatpush1.msra.mxu0 0.0
        %3822 = vmatprep.subr.mxu0 0.0
        %3823 = vmatpush1.msra.mxu0 0.0
        %3824 = vmatprep.subr.mxu0 0.0
        %3825 = vmatpush1.msra.mxu0 0.0
        %3826 = vmatprep.subr.mxu0 0.0
        %3827 = vmatpush1.msra.mxu0 0.0
        %3828 = vmatprep.subr.mxu0 0.0
        %3829 = vmatpush1.msra.mxu0 0.0
        %3830 = vmatprep.subr.mxu0 0.0
        %3831 = vmatpush1.msra.mxu0 0.0
        %3832 = vmatprep.subr.mxu0 0.0
        %3833 = vmatpush1.msra.mxu0 0.0
        %3834 = vmatprep.subr.mxu0 0.0
        %3835 = vmatpush1.msra.mxu0 0.0
        %3836 = vmatprep.subr.mxu0 0.0
        %3837 = vmatpush1.msra.mxu0 0.0
        %3838 = vmatprep.subr.mxu0 0.0
        %3839 = vmatpush1.msra.mxu0 0.0
        %3840 = vmatprep.subr.mxu0 0.0
        %3841 = vmatpush1.msra.mxu0 0.0
        %3842 = vmatprep.subr.mxu0 0.0
        %3843 = vmatpush1.msra.mxu0 0.0
        %3844 = vmatprep.subr.mxu0 0.0
        %3845 = vmatpush1.msra.mxu0 0.0
        %3846 = vmatprep.subr.mxu0 0.0
        %3847 = vmatpush1.msra.mxu0 0.0
        %3848 = vmatprep.subr.mxu0 0.0
        %3849 = vmatpush1.msra.mxu0 0.0
        %3850 = vmatprep.subr.mxu0 0.0
        %3851 = vmatpush1.msra.mxu0 0.0
        %3852 = vmatprep.subr.mxu0 0.0
        %3853 = vmatpush1.msra.mxu0 0.0
        %3854 = vmatprep.subr.mxu0 0.0
        %3855 = vmatpush1.msra.mxu0 0.0
        %3856 = vmatprep.subr.mxu0 0.0
        %3857 = vmatpush1.msra.mxu0 0.0
        %3858 = vmatprep.subr.mxu0 0.0
        %3859 = vmatpush1.msra.mxu0 0.0
        %3860 = vmatprep.subr.mxu0 0.0
        %3861 = vmatpush1.msra.mxu0 0.0
        %3862 = vmatprep.subr.mxu0 0.0
        %3863 = vmatpush1.msra.mxu0 0.0
        %3864 = vmatprep.subr.mxu0 0.0
        %3865 = vmatpush1.msra.mxu0 0.0
        %3866 = vmatprep.subr.mxu0 0.0
        %3867 = vmatpush1.msra.mxu0 0.0
        %3868 = vmatprep.subr.mxu0 0.0
        %3869 = vmatpush1.msra.mxu0 0.0
        %3870 = vmatprep.mubr.f32.mxu0 0.0
        %3871 = vmatmul.mubr.f32.gmra.mrb[0].mxu0 %v3708
        %v3872 = vpop.f32.mrb[0].mxu0
        %v3873 = vadd.f32 0.0, %v3872
        %v3874 = vpop.f32.mrb[0].mxu0
        %3875 = vmatprep.mubr.f32.mxu0 0.0
        %3876 = vmatmul.mubr.f32.gmra.mrb[0].mxu0 %v3711
        %v3877 = vpop.f32.mrb[0].mxu0
        %v3878 = vadd.f32 0.0, %v3877
        %v3879 = vpop.f32.mrb[0].mxu0
        %3880 = vmatprep.mubr.f32.mxu0 0.0
        %3881 = vmatmul.mubr.f32.gmra.mrb[0].mxu0 %v3714
        %v3882 = vpop.f32.mrb[0].mxu0
        %v3883 = vadd.f32 0.0, %v3882
        %v3884 = vpop.f32.mrb[0].mxu0
        %3885 = vmatprep.mubr.f32.mxu0 0.0
        %3886 = vmatmul.mubr.f32.gmra.mrb[0].mxu0 %v3717
        %v3887 = vpop.f32.mrb[0].mxu0
        %v3888 = vadd.f32 0.0, %v3887
        %v3889 = vpop.f32.mrb[0].mxu0
        %3890 = vmatprep.mubr.f32.mxu0 0.0
        %3891 = vmatmul.mubr.f32.gmra.mrb[0].mxu0 %v3720
        %v3892 = vpop.f32.mrb[0].mxu0
        %v3893 = vadd.f32 0.0, %v3892
        %v3894 = vpop.f32.mrb[0].mxu0
        %3895 = vmatprep.mubr.f32.mxu0 0.0
        %3896 = vmatmul.mubr.f32.gmra.mrb[0].mxu0 %v3723
        %v3897 = vpop.f32.mrb[0].mxu0
        %v3898 = vadd.f32 0.0, %v3897
        %v3899 = vpop.f32.mrb[0].mxu0
        %3900 = vmatprep.mubr.f32.mxu0 0.0
        %3901 = vmatmul.mubr.f32.gmra.mrb[0].mxu0 %v3726
        %v3902 = vpop.f32.mrb[0].mxu0
        %v3903 = vadd.f32 0.0, %v3902
        %v3904 = vpop.f32.mrb[0].mxu0
        %3905 = vmatprep.mubr.f32.mxu0 0.0
        %3906 = vmatmul.mubr.f32.gmra.mrb[0].mxu0 %v3729
        %v3907 = vpop.f32.mrb[0].mxu0
        %v3908 = vadd.f32 0.0, %v3907
        %v3909 = vpop.f32.mrb[0].mxu0
        %3910 = vmatprep.mubr.f32.mxu0 0.0
        %3911 = vmatmul.mubr.f32.gmra.mrb[0].mxu0 %v3732
        %v3912 = vpop.f32.mrb[0].mxu0
        %v3913 = vadd.f32 0.0, %v3912
        %v3914 = vpop.f32.mrb[0].mxu0
        %3915 = vmatprep.mubr.f32.mxu0 0.0
        %3916 = vmatmul.mubr.f32.gmra.mrb[0].mxu0 %v3735
        %v3917 = vpop.f32.mrb[0].mxu0
        %v3918 = vadd.f32 0.0, %v3917
        %v3919 = vpop.f32.mrb[0].mxu0
        %3920 = vmatprep.mubr.f32.mxu0 0.0
        %3921 = vmatmul.mubr.f32.gmra.mrb[0].mxu0 %v3738
        %v3922 = vpop.f32.mrb[0].mxu0
        %v3923 = vadd.f32 0.0, %v3922
        %v3924 = vpop.f32.mrb[0].mxu0
        %3925 = vmatprep.mubr.f32.mxu0 0.0
        %3926 = vmatmul.mubr.f32.gmra.mrb[0].mxu0 %v3741
        %v3927 = vpop.f32.mrb[0].mxu0
        %v3928 = vadd.f32 0.0, %v3927
        %v3929 = vpop.f32.mrb[0].mxu0
        %3930 = vmatprep.mubr.f32.mxu0 0.0
        %3931 = vmatmul.mubr.f32.gmra.mrb[0].mxu0 %v3744
        %v3932 = vpop.f32.mrb[0].mxu0
        %v3933 = vadd.f32 0.0, %v3932
        %v3934 = vpop.f32.mrb[0].mxu0
        %3935 = vmatprep.mubr.f32.mxu0 0.0
        %3936 = vmatmul.mubr.f32.gmra.mrb[0].mxu0 %v3747
        %v3937 = vpop.f32.mrb[0].mxu0
        %v3938 = vadd.f32 0.0, %v3937
        %v3939 = vpop.f32.mrb[0].mxu0
        %3940 = vmatprep.mubr.f32.mxu0 0.0
        %3941 = vmatmul.mubr.f32.gmra.mrb[0].mxu0 %v3750
        %v3942 = vpop.f32.mrb[0].mxu0
        %v3943 = vadd.f32 0.0, %v3942
        %v3944 = vpop.f32.mrb[0].mxu0
        %3945 = vmatprep.mubr.f32.mxu0 0.0
        %3946 = vmatmul.mubr.f32.gmra.mrb[0].mxu0 %v3753
        %v3947 = vpop.f32.mrb[0].mxu0
        %v3948 = vadd.f32 0.0, %v3947
        %v3949 = vpop.f32.mrb[0].mxu0
        %3950 = vmatprep.mubr.f32.mxu0 0.0
        %3951 = vmatmul.mubr.f32.gmra.mrb[0].mxu0 %v3756
        %v3952 = vpop.f32.mrb[0].mxu0
        %v3953 = vadd.f32 0.0, %v3952
        %v3954 = vpop.f32.mrb[0].mxu0
        %3955 = vmatprep.mubr.f32.mxu0 0.0
        %3956 = vmatmul.mubr.f32.gmra.mrb[0].mxu0 %v3759
        %v3957 = vpop.f32.mrb[0].mxu0
        %v3958 = vadd.f32 0.0, %v3957
        %v3959 = vpop.f32.mrb[0].mxu0
        %3960 = vmatprep.mubr.f32.mxu0 0.0
        %3961 = vmatmul.mubr.f32.gmra.mrb[0].mxu0 %v3762
        %v3962 = vpop.f32.mrb[0].mxu0
        %v3963 = vadd.f32 0.0, %v3962
        %v3964 = vpop.f32.mrb[0].mxu0
        %3965 = vmatprep.mubr.f32.mxu0 0.0
        %3966 = vmatmul.mubr.f32.gmra.mrb[0].mxu0 %v3765
        %v3967 = vpop.f32.mrb[0].mxu0
        %v3968 = vadd.f32 0.0, %v3967
        %v3969 = vpop.f32.mrb[0].mxu0
        %3970 = vmatprep.mubr.f32.mxu0 0.0
        %3971 = vmatmul.mubr.f32.gmra.mrb[0].mxu0 %v3768
        %v3972 = vpop.f32.mrb[0].mxu0
        %v3973 = vadd.f32 0.0, %v3972
        %v3974 = vpop.f32.mrb[0].mxu0
        %3975 = vmatprep.mubr.f32.mxu0 0.0
        %3976 = vmatmul.mubr.f32.gmra.mrb[0].mxu0 %v3771
        %v3977 = vpop.f32.mrb[0].mxu0
        %v3978 = vadd.f32 0.0, %v3977
        %v3979 = vpop.f32.mrb[0].mxu0
        %3980 = vmatprep.mubr.f32.mxu0 0.0
        %3981 = vmatmul.mubr.f32.gmra.mrb[0].mxu0 %v3774
        %v3982 = vpop.f32.mrb[0].mxu0
        %v3983 = vadd.f32 0.0, %v3982
        %v3984 = vpop.f32.mrb[0].mxu0
        %3985 = vmatprep.mubr.f32.mxu0 0.0
        %3986 = vmatmul.mubr.f32.gmra.mrb[0].mxu0 %v3777
        %v3987 = vpop.f32.mrb[0].mxu0
        %v3988 = vadd.f32 0.0, %v3987
        %v3989 = vpop.f32.mrb[0].mxu0
        %3990 = vmatprep.mubr.f32.mxu0 0.0
        %3991 = vmatmul.mubr.f32.gmra.mrb[0].mxu0 %v3780
        %v3992 = vpop.f32.mrb[0].mxu0
        %v3993 = vadd.f32 0.0, %v3992
        %v3994 = vpop.f32.mrb[0].mxu0
        %3995 = vmatprep.mubr.f32.mxu0 0.0
        %3996 = vmatmul.mubr.f32.gmra.mrb[0].mxu0 %v3783
        %v3997 = vpop.f32.mrb[0].mxu0
        %v3998 = vadd.f32 0.0, %v3997
        %v3999 = vpop.f32.mrb[0].mxu0
        %4000 = vmatprep.mubr.f32.mxu0 0.0
        %4001 = vmatmul.mubr.f32.gmra.mrb[0].mxu0 %v3786
        %v4002 = vpop.f32.mrb[0].mxu0
        %v4003 = vadd.f32 0.0, %v4002
        %v4004 = vpop.f32.mrb[0].mxu0
        %4005 = vmatprep.mubr.f32.mxu0 0.0
        %4006 = vmatmul.mubr.f32.gmra.mrb[0].mxu0 %v3789
        %v4007 = vpop.f32.mrb[0].mxu0
        %v4008 = vadd.f32 0.0, %v4007
        %v4009 = vpop.f32.mrb[0].mxu0
        %4010 = vmatprep.mubr.f32.mxu0 0.0
        %4011 = vmatmul.mubr.f32.gmra.mrb[0].mxu0 %v3792
        %v4012 = vpop.f32.mrb[0].mxu0
        %v4013 = vadd.f32 0.0, %v4012
        %v4014 = vpop.f32.mrb[0].mxu0
        %4015 = vmatprep.mubr.f32.mxu0 0.0
        %4016 = vmatmul.mubr.f32.gmra.mrb[0].mxu0 %v3795
        %v4017 = vpop.f32.mrb[0].mxu0
        %v4018 = vadd.f32 0.0, %v4017
        %v4019 = vpop.f32.mrb[0].mxu0
        %4020 = vmatprep.mubr.f32.mxu0 0.0
        %4021 = vmatmul.mubr.f32.gmra.mrb[0].mxu0 %v3798
        %v4022 = vpop.f32.mrb[0].mxu0
        %v4023 = vadd.f32 0.0, %v4022
        %v4024 = vpop.f32.mrb[0].mxu0
        %4025 = vmatprep.mubr.f32.mxu0 0.0
        %4026 = vmatmul.mubr.f32.gmra.mrb[0].mxu0 %v3801
        %v4027 = vpop.f32.mrb[0].mxu0
        %v4028 = vadd.f32 0.0, %v4027
        %v4029 = vpop.f32.mrb[0].mxu0
        %4030 = vdwg.mxu0
        %v4031 = vadd.f32 %v3632, %v3873
        %v4032 = vadd.f32 %v3633, %v3878
        %v4033 = vadd.f32 %v3634, %v3883
        %v4034 = vadd.f32 %v3635, %v3888
        %v4035 = vadd.f32 %v3636, %v3893
        %v4036 = vadd.f32 %v3637, %v3898
        %v4037 = vadd.f32 %v3638, %v3903
        %v4038 = vadd.f32 %v3639, %v3908
        %v4039 = vadd.f32 %v3640, %v3913
        %v4040 = vadd.f32 %v3641, %v3918
        %v4041 = vadd.f32 %v3642, %v3923
        %v4042 = vadd.f32 %v3643, %v3928
        %v4043 = vadd.f32 %v3644, %v3933
        %v4044 = vadd.f32 %v3645, %v3938
        %v4045 = vadd.f32 %v3646, %v3943
        %v4046 = vadd.f32 %v3647, %v3948
        %v4047 = vadd.f32 %v3648, %v3953
        %v4048 = vadd.f32 %v3649, %v3958
        %v4049 = vadd.f32 %v3650, %v3963
        %v4050 = vadd.f32 %v3651, %v3968
        %v4051 = vadd.f32 %v3652, %v3973
        %v4052 = vadd.f32 %v3653, %v3978
        %v4053 = vadd.f32 %v3654, %v3983
        %v4054 = vadd.f32 %v3655, %v3988
        %v4055 = vadd.f32 %v3656, %v3993
        %v4056 = vadd.f32 %v3657, %v3998
        %v4057 = vadd.f32 %v3658, %v4003
        %v4058 = vadd.f32 %v3659, %v4008
        %v4059 = vadd.f32 %v3660, %v4013
        %v4060 = vadd.f32 %v3661, %v4018
        %v4061 = vadd.f32 %v3662, %v4023
        %v4062 = vadd.f32 %v3663, %v4028
        %v4063 = vld [vmem:[#allocation2 + $0x29] sm:$0xff]
        %v4064 = vld [vmem:[#allocation2 + $0x31] sm:$0xff]
        %v4065 = vld [vmem:[#allocation2 + $0x39] sm:$0xff]
        %v4066 = vld [vmem:[#allocation2 + $0x41] sm:$0xff]
        %v4067 = vld [vmem:[#allocation2 + $0x49] sm:$0xff]
        %v4068 = vld [vmem:[#allocation2 + $0x51] sm:$0xff]
        %v4069 = vld [vmem:[#allocation2 + $0x59] sm:$0xff]
        %v4070 = vld [vmem:[#allocation2 + $0x61] sm:$0xff]
        %v4071 = vld [vmem:[#allocation2 + $0x69] sm:$0xff]
        %v4072 = vld [vmem:[#allocation2 + $0x71] sm:$0xff]
        %v4073 = vld [vmem:[#allocation2 + $0x79] sm:$0xff]
        %v4074 = vld [vmem:[#allocation2 + $0x81] sm:$0xff]
        %v4075 = vld [vmem:[#allocation2 + $0x89] sm:$0xff]
        %v4076 = vld [vmem:[#allocation2 + $0x91] sm:$0xff]
        %v4077 = vld [vmem:[#allocation2 + $0x99] sm:$0xff]
        %v4078 = vld [vmem:[#allocation2 + $0xa1] sm:$0xff]
        %v4079 = vld [vmem:[#allocation2 + $0xa9] sm:$0xff]
        %v4080 = vld [vmem:[#allocation2 + $0xb1] sm:$0xff]
        %v4081 = vld [vmem:[#allocation2 + $0xb9] sm:$0xff]
        %v4082 = vld [vmem:[#allocation2 + $0xc1] sm:$0xff]
        %v4083 = vld [vmem:[#allocation2 + $0xc9] sm:$0xff]
        %v4084 = vld [vmem:[#allocation2 + $0xd1] sm:$0xff]
        %v4085 = vld [vmem:[#allocation2 + $0xd9] sm:$0xff]
        %v4086 = vld [vmem:[#allocation2 + $0xe1] sm:$0xff]
        %v4087 = vld [vmem:[#allocation2 + $0xe9] sm:$0xff]
        %v4088 = vld [vmem:[#allocation2 + $0xf1] sm:$0xff]
        %v4089 = vld [vmem:[#allocation2 + $0xf9] sm:$0xff]
        %v4090 = vld [vmem:[#allocation2 + $0x101] sm:$0xff]
        %v4091 = vld [vmem:[#allocation2 + $0x109] sm:$0xff]
        %v4092 = vld [vmem:[#allocation2 + $0x111] sm:$0xff]
        %v4093 = vld [vmem:[#allocation2 + $0x119] sm:$0xff]
        %v4094 = vld [vmem:[#allocation2 + $0x121] sm:$0xff]
        %s4095 = scalar_lea.vmem %s2, 160
        %v4096 = vld [vmem:[%s4095] sm:$0xf]
        %v4097 = vld [vmem:[%s4095 + $0x4] sm:$0xf]
        %v4098 = vld [vmem:[%s4095 + $0x8] sm:$0xf]
        %v4099 = vld [vmem:[%s4095 + $0xc] sm:$0xf]
        %v4100 = vld [vmem:[%s4095 + $0x10] sm:$0x3]
        %v4101 = vunpack.c.l.bf16 %v4096
        %v4102 = vunpack.c.l.bf16 %v4097
        %v4103 = vunpack.c.l.bf16 %v4098
        %v4104 = vunpack.c.l.bf16 %v4099
        %v4105 = vunpack.c.l.bf16 %v4100
        %v4107 = vsel %vm281, %v4063, 0
        %v4110 = vsel %vm281, %v4064, 0
        %v4113 = vsel %vm281, %v4065, 0
        %v4116 = vsel %vm281, %v4066, 0
        %v4119 = vsel %vm281, %v4067, 0
        %v4122 = vsel %vm281, %v4068, 0
        %v4125 = vsel %vm281, %v4069, 0
        %v4128 = vsel %vm281, %v4070, 0
        %v4131 = vsel %vm281, %v4071, 0
        %v4134 = vsel %vm281, %v4072, 0
        %v4137 = vsel %vm281, %v4073, 0
        %v4140 = vsel %vm281, %v4074, 0
        %v4143 = vsel %vm281, %v4075, 0
        %v4146 = vsel %vm281, %v4076, 0
        %v4149 = vsel %vm281, %v4077, 0
        %v4152 = vsel %vm281, %v4078, 0
        %v4155 = vsel %vm281, %v4079, 0
        %v4158 = vsel %vm281, %v4080, 0
        %v4161 = vsel %vm281, %v4081, 0
        %v4164 = vsel %vm281, %v4082, 0
        %v4167 = vsel %vm281, %v4083, 0
        %v4170 = vsel %vm281, %v4084, 0
        %v4173 = vsel %vm281, %v4085, 0
        %v4176 = vsel %vm281, %v4086, 0
        %v4179 = vsel %vm281, %v4087, 0
        %v4182 = vsel %vm281, %v4088, 0
        %v4185 = vsel %vm281, %v4089, 0
        %v4188 = vsel %vm281, %v4090, 0
        %v4191 = vsel %vm281, %v4091, 0
        %v4194 = vsel %vm281, %v4092, 0
        %v4197 = vsel %vm281, %v4093, 0
        %v4200 = vsel %vm281, %v4094, 0
        %v4203 = vsel %vm561, %v4105, 0
        %4205 = vmatprep.subr.mxu0 0.0
        %4206 = vmatpush1.msra.mxu0 %v4101
        %4207 = vmatprep.subr.mxu0 0.0
        %4208 = vmatpush1.msra.mxu0 %v4102
        %4209 = vmatprep.subr.mxu0 0.0
        %4210 = vmatpush1.msra.mxu0 %v4103
        %4211 = vmatprep.subr.mxu0 0.0
        %4212 = vmatpush1.msra.mxu0 %v4104
        %4213 = vmatprep.subr.mxu0 0.0
        %4214 = vmatpush1.msra.mxu0 %v4203
        %4215 = vmatprep.subr.mxu0 0.0
        %4216 = vmatpush1.msra.mxu0 0.0
        %4217 = vmatprep.subr.mxu0 0.0
        %4218 = vmatpush1.msra.mxu0 0.0
        %4219 = vmatprep.subr.mxu0 0.0
        %4220 = vmatpush1.msra.mxu0 0.0
        %4221 = vmatprep.subr.mxu0 0.0
        %4222 = vmatpush1.msra.mxu0 0.0
        %4223 = vmatprep.subr.mxu0 0.0
        %4224 = vmatpush1.msra.mxu0 0.0
        %4225 = vmatprep.subr.mxu0 0.0
        %4226 = vmatpush1.msra.mxu0 0.0
        %4227 = vmatprep.subr.mxu0 0.0
        %4228 = vmatpush1.msra.mxu0 0.0
        %4229 = vmatprep.subr.mxu0 0.0
        %4230 = vmatpush1.msra.mxu0 0.0
        %4231 = vmatprep.subr.mxu0 0.0
        %4232 = vmatpush1.msra.mxu0 0.0
        %4233 = vmatprep.subr.mxu0 0.0
        %4234 = vmatpush1.msra.mxu0 0.0
        %4235 = vmatprep.subr.mxu0 0.0
        %4236 = vmatpush1.msra.mxu0 0.0
        %4237 = vmatprep.subr.mxu0 0.0
        %4238 = vmatpush1.msra.mxu0 0.0
        %4239 = vmatprep.subr.mxu0 0.0
        %4240 = vmatpush1.msra.mxu0 0.0
        %4241 = vmatprep.subr.mxu0 0.0
        %4242 = vmatpush1.msra.mxu0 0.0
        %4243 = vmatprep.subr.mxu0 0.0
        %4244 = vmatpush1.msra.mxu0 0.0
        %4245 = vmatprep.subr.mxu0 0.0
        %4246 = vmatpush1.msra.mxu0 0.0
        %4247 = vmatprep.subr.mxu0 0.0
        %4248 = vmatpush1.msra.mxu0 0.0
        %4249 = vmatprep.subr.mxu0 0.0
        %4250 = vmatpush1.msra.mxu0 0.0
        %4251 = vmatprep.subr.mxu0 0.0
        %4252 = vmatpush1.msra.mxu0 0.0
        %4253 = vmatprep.subr.mxu0 0.0
        %4254 = vmatpush1.msra.mxu0 0.0
        %4255 = vmatprep.subr.mxu0 0.0
        %4256 = vmatpush1.msra.mxu0 0.0
        %4257 = vmatprep.subr.mxu0 0.0
        %4258 = vmatpush1.msra.mxu0 0.0
        %4259 = vmatprep.subr.mxu0 0.0
        %4260 = vmatpush1.msra.mxu0 0.0
        %4261 = vmatprep.subr.mxu0 0.0
        %4262 = vmatpush1.msra.mxu0 0.0
        %4263 = vmatprep.subr.mxu0 0.0
        %4264 = vmatpush1.msra.mxu0 0.0
        %4265 = vmatprep.subr.mxu0 0.0
        %4266 = vmatpush1.msra.mxu0 0.0
        %4267 = vmatprep.subr.mxu0 0.0
        %4268 = vmatpush1.msra.mxu0 0.0
        %4269 = vmatprep.mubr.f32.mxu0 0.0
        %4270 = vmatmul.mubr.f32.gmra.mrb[0].mxu0 %v4107
        %v4271 = vpop.f32.mrb[0].mxu0
        %v4272 = vadd.f32 0.0, %v4271
        %v4273 = vpop.f32.mrb[0].mxu0
        %4274 = vmatprep.mubr.f32.mxu0 0.0
        %4275 = vmatmul.mubr.f32.gmra.mrb[0].mxu0 %v4110
        %v4276 = vpop.f32.mrb[0].mxu0
        %v4277 = vadd.f32 0.0, %v4276
        %v4278 = vpop.f32.mrb[0].mxu0
        %4279 = vmatprep.mubr.f32.mxu0 0.0
        %4280 = vmatmul.mubr.f32.gmra.mrb[0].mxu0 %v4113
        %v4281 = vpop.f32.mrb[0].mxu0
        %v4282 = vadd.f32 0.0, %v4281
        %v4283 = vpop.f32.mrb[0].mxu0
        %4284 = vmatprep.mubr.f32.mxu0 0.0
        %4285 = vmatmul.mubr.f32.gmra.mrb[0].mxu0 %v4116
        %v4286 = vpop.f32.mrb[0].mxu0
        %v4287 = vadd.f32 0.0, %v4286
        %v4288 = vpop.f32.mrb[0].mxu0
        %4289 = vmatprep.mubr.f32.mxu0 0.0
        %4290 = vmatmul.mubr.f32.gmra.mrb[0].mxu0 %v4119
        %v4291 = vpop.f32.mrb[0].mxu0
        %v4292 = vadd.f32 0.0, %v4291
        %v4293 = vpop.f32.mrb[0].mxu0
        %4294 = vmatprep.mubr.f32.mxu0 0.0
        %4295 = vmatmul.mubr.f32.gmra.mrb[0].mxu0 %v4122
        %v4296 = vpop.f32.mrb[0].mxu0
        %v4297 = vadd.f32 0.0, %v4296
        %v4298 = vpop.f32.mrb[0].mxu0
        %4299 = vmatprep.mubr.f32.mxu0 0.0
        %4300 = vmatmul.mubr.f32.gmra.mrb[0].mxu0 %v4125
        %v4301 = vpop.f32.mrb[0].mxu0
        %v4302 = vadd.f32 0.0, %v4301
        %v4303 = vpop.f32.mrb[0].mxu0
        %4304 = vmatprep.mubr.f32.mxu0 0.0
        %4305 = vmatmul.mubr.f32.gmra.mrb[0].mxu0 %v4128
        %v4306 = vpop.f32.mrb[0].mxu0
        %v4307 = vadd.f32 0.0, %v4306
        %v4308 = vpop.f32.mrb[0].mxu0
        %4309 = vmatprep.mubr.f32.mxu0 0.0
        %4310 = vmatmul.mubr.f32.gmra.mrb[0].mxu0 %v4131
        %v4311 = vpop.f32.mrb[0].mxu0
        %v4312 = vadd.f32 0.0, %v4311
        %v4313 = vpop.f32.mrb[0].mxu0
        %4314 = vmatprep.mubr.f32.mxu0 0.0
        %4315 = vmatmul.mubr.f32.gmra.mrb[0].mxu0 %v4134
        %v4316 = vpop.f32.mrb[0].mxu0
        %v4317 = vadd.f32 0.0, %v4316
        %v4318 = vpop.f32.mrb[0].mxu0
        %4319 = vmatprep.mubr.f32.mxu0 0.0
        %4320 = vmatmul.mubr.f32.gmra.mrb[0].mxu0 %v4137
        %v4321 = vpop.f32.mrb[0].mxu0
        %v4322 = vadd.f32 0.0, %v4321
        %v4323 = vpop.f32.mrb[0].mxu0
        %4324 = vmatprep.mubr.f32.mxu0 0.0
        %4325 = vmatmul.mubr.f32.gmra.mrb[0].mxu0 %v4140
        %v4326 = vpop.f32.mrb[0].mxu0
        %v4327 = vadd.f32 0.0, %v4326
        %v4328 = vpop.f32.mrb[0].mxu0
        %4329 = vmatprep.mubr.f32.mxu0 0.0
        %4330 = vmatmul.mubr.f32.gmra.mrb[0].mxu0 %v4143
        %v4331 = vpop.f32.mrb[0].mxu0
        %v4332 = vadd.f32 0.0, %v4331
        %v4333 = vpop.f32.mrb[0].mxu0
        %4334 = vmatprep.mubr.f32.mxu0 0.0
        %4335 = vmatmul.mubr.f32.gmra.mrb[0].mxu0 %v4146
        %v4336 = vpop.f32.mrb[0].mxu0
        %v4337 = vadd.f32 0.0, %v4336
        %v4338 = vpop.f32.mrb[0].mxu0
        %4339 = vmatprep.mubr.f32.mxu0 0.0
        %4340 = vmatmul.mubr.f32.gmra.mrb[0].mxu0 %v4149
        %v4341 = vpop.f32.mrb[0].mxu0
        %v4342 = vadd.f32 0.0, %v4341
        %v4343 = vpop.f32.mrb[0].mxu0
        %4344 = vmatprep.mubr.f32.mxu0 0.0
        %4345 = vmatmul.mubr.f32.gmra.mrb[0].mxu0 %v4152
        %v4346 = vpop.f32.mrb[0].mxu0
        %v4347 = vadd.f32 0.0, %v4346
        %v4348 = vpop.f32.mrb[0].mxu0
        %4349 = vmatprep.mubr.f32.mxu0 0.0
        %4350 = vmatmul.mubr.f32.gmra.mrb[0].mxu0 %v4155
        %v4351 = vpop.f32.mrb[0].mxu0
        %v4352 = vadd.f32 0.0, %v4351
        %v4353 = vpop.f32.mrb[0].mxu0
        %4354 = vmatprep.mubr.f32.mxu0 0.0
        %4355 = vmatmul.mubr.f32.gmra.mrb[0].mxu0 %v4158
        %v4356 = vpop.f32.mrb[0].mxu0
        %v4357 = vadd.f32 0.0, %v4356
        %v4358 = vpop.f32.mrb[0].mxu0
        %4359 = vmatprep.mubr.f32.mxu0 0.0
        %4360 = vmatmul.mubr.f32.gmra.mrb[0].mxu0 %v4161
        %v4361 = vpop.f32.mrb[0].mxu0
        %v4362 = vadd.f32 0.0, %v4361
        %v4363 = vpop.f32.mrb[0].mxu0
        %4364 = vmatprep.mubr.f32.mxu0 0.0
        %4365 = vmatmul.mubr.f32.gmra.mrb[0].mxu0 %v4164
        %v4366 = vpop.f32.mrb[0].mxu0
        %v4367 = vadd.f32 0.0, %v4366
        %v4368 = vpop.f32.mrb[0].mxu0
        %4369 = vmatprep.mubr.f32.mxu0 0.0
        %4370 = vmatmul.mubr.f32.gmra.mrb[0].mxu0 %v4167
        %v4371 = vpop.f32.mrb[0].mxu0
        %v4372 = vadd.f32 0.0, %v4371
        %v4373 = vpop.f32.mrb[0].mxu0
        %4374 = vmatprep.mubr.f32.mxu0 0.0
        %4375 = vmatmul.mubr.f32.gmra.mrb[0].mxu0 %v4170
        %v4376 = vpop.f32.mrb[0].mxu0
        %v4377 = vadd.f32 0.0, %v4376
        %v4378 = vpop.f32.mrb[0].mxu0
        %4379 = vmatprep.mubr.f32.mxu0 0.0
        %4380 = vmatmul.mubr.f32.gmra.mrb[0].mxu0 %v4173
        %v4381 = vpop.f32.mrb[0].mxu0
        %v4382 = vadd.f32 0.0, %v4381
        %v4383 = vpop.f32.mrb[0].mxu0
        %4384 = vmatprep.mubr.f32.mxu0 0.0
        %4385 = vmatmul.mubr.f32.gmra.mrb[0].mxu0 %v4176
        %v4386 = vpop.f32.mrb[0].mxu0
        %v4387 = vadd.f32 0.0, %v4386
        %v4388 = vpop.f32.mrb[0].mxu0
        %4389 = vmatprep.mubr.f32.mxu0 0.0
        %4390 = vmatmul.mubr.f32.gmra.mrb[0].mxu0 %v4179
        %v4391 = vpop.f32.mrb[0].mxu0
        %v4392 = vadd.f32 0.0, %v4391
        %v4393 = vpop.f32.mrb[0].mxu0
        %4394 = vmatprep.mubr.f32.mxu0 0.0
        %4395 = vmatmul.mubr.f32.gmra.mrb[0].mxu0 %v4182
        %v4396 = vpop.f32.mrb[0].mxu0
        %v4397 = vadd.f32 0.0, %v4396
        %v4398 = vpop.f32.mrb[0].mxu0
        %4399 = vmatprep.mubr.f32.mxu0 0.0
        %4400 = vmatmul.mubr.f32.gmra.mrb[0].mxu0 %v4185
        %v4401 = vpop.f32.mrb[0].mxu0
        %v4402 = vadd.f32 0.0, %v4401
        %v4403 = vpop.f32.mrb[0].mxu0
        %4404 = vmatprep.mubr.f32.mxu0 0.0
        %4405 = vmatmul.mubr.f32.gmra.mrb[0].mxu0 %v4188
        %v4406 = vpop.f32.mrb[0].mxu0
        %v4407 = vadd.f32 0.0, %v4406
        %v4408 = vpop.f32.mrb[0].mxu0
        %4409 = vmatprep.mubr.f32.mxu0 0.0
        %4410 = vmatmul.mubr.f32.gmra.mrb[0].mxu0 %v4191
        %v4411 = vpop.f32.mrb[0].mxu0
        %v4412 = vadd.f32 0.0, %v4411
        %v4413 = vpop.f32.mrb[0].mxu0
        %4414 = vmatprep.mubr.f32.mxu0 0.0
        %4415 = vmatmul.mubr.f32.gmra.mrb[0].mxu0 %v4194
        %v4416 = vpop.f32.mrb[0].mxu0
        %v4417 = vadd.f32 0.0, %v4416
        %v4418 = vpop.f32.mrb[0].mxu0
        %4419 = vmatprep.mubr.f32.mxu0 0.0
        %4420 = vmatmul.mubr.f32.gmra.mrb[0].mxu0 %v4197
        %v4421 = vpop.f32.mrb[0].mxu0
        %v4422 = vadd.f32 0.0, %v4421
        %v4423 = vpop.f32.mrb[0].mxu0
        %4424 = vmatprep.mubr.f32.mxu0 0.0
        %4425 = vmatmul.mubr.f32.gmra.mrb[0].mxu0 %v4200
        %v4426 = vpop.f32.mrb[0].mxu0
        %v4427 = vadd.f32 0.0, %v4426
        %v4428 = vpop.f32.mrb[0].mxu0
        %4429 = vdwg.mxu0
        %v4430 = vmul.f32 %v4272, %v1782
        %v4431 = vmul.f32 %v4277, %v1786
        %v4432 = vmul.f32 %v4282, %v1790
        %v4433 = vmul.f32 %v4287, %v1794
        %v4434 = vmul.f32 %v4292, %v1798
        %v4435 = vmul.f32 %v4297, %v1802
        %v4436 = vmul.f32 %v4302, %v1806
        %v4437 = vmul.f32 %v4307, %v1810
        %v4438 = vmul.f32 %v4312, %v1814
        %v4439 = vmul.f32 %v4317, %v1818
        %v4440 = vmul.f32 %v4322, %v1822
        %v4441 = vmul.f32 %v4327, %v1826
        %v4442 = vmul.f32 %v4332, %v1830
        %v4443 = vmul.f32 %v4337, %v1834
        %v4444 = vmul.f32 %v4342, %v1838
        %v4445 = vmul.f32 %v4347, %v1842
        %v4446 = vmul.f32 %v4352, %v1846
        %v4447 = vmul.f32 %v4357, %v1850
        %v4448 = vmul.f32 %v4362, %v1854
        %v4449 = vmul.f32 %v4367, %v1858
        %v4450 = vmul.f32 %v4372, %v1862
        %v4451 = vmul.f32 %v4377, %v1866
        %v4452 = vmul.f32 %v4382, %v1870
        %v4453 = vmul.f32 %v4387, %v1874
        %v4454 = vmul.f32 %v4392, %v1878
        %v4455 = vmul.f32 %v4397, %v1882
        %v4456 = vmul.f32 %v4402, %v1886
        %v4457 = vmul.f32 %v4407, %v1890
        %v4458 = vmul.f32 %v4412, %v1894
        %v4459 = vmul.f32 %v4417, %v1898
        %v4460 = vmul.f32 %v4422, %v1902
        %v4461 = vmul.f32 %v4427, %v1906
        %v4462 = vadd.f32 %v4031, %v4430
        %v4463 = vadd.f32 %v4032, %v4431
        %v4464 = vadd.f32 %v4033, %v4432
        %v4465 = vadd.f32 %v4034, %v4433
        %v4466 = vadd.f32 %v4035, %v4434
        %v4467 = vadd.f32 %v4036, %v4435
        %v4468 = vadd.f32 %v4037, %v4436
        %v4469 = vadd.f32 %v4038, %v4437
        %v4470 = vadd.f32 %v4039, %v4438
        %v4471 = vadd.f32 %v4040, %v4439
        %v4472 = vadd.f32 %v4041, %v4440
        %v4473 = vadd.f32 %v4042, %v4441
        %v4474 = vadd.f32 %v4043, %v4442
        %v4475 = vadd.f32 %v4044, %v4443
        %v4476 = vadd.f32 %v4045, %v4444
        %v4477 = vadd.f32 %v4046, %v4445
        %v4478 = vadd.f32 %v4047, %v4446
        %v4479 = vadd.f32 %v4048, %v4447
        %v4480 = vadd.f32 %v4049, %v4448
        %v4481 = vadd.f32 %v4050, %v4449
        %v4482 = vadd.f32 %v4051, %v4450
        %v4483 = vadd.f32 %v4052, %v4451
        %v4484 = vadd.f32 %v4053, %v4452
        %v4485 = vadd.f32 %v4054, %v4453
        %v4486 = vadd.f32 %v4055, %v4454
        %v4487 = vadd.f32 %v4056, %v4455
        %v4488 = vadd.f32 %v4057, %v4456
        %v4489 = vadd.f32 %v4058, %v4457
        %v4490 = vadd.f32 %v4059, %v4458
        %v4491 = vadd.f32 %v4060, %v4459
        %v4492 = vadd.f32 %v4061, %v4460
        %v4493 = vadd.f32 %v4062, %v4461
        %v4494 = vmul.f32 %v4462, 0.5
        %v4495 = vmul.f32 %v4463, 0.5
        %v4496 = vmul.f32 %v4464, 0.5
        %v4497 = vmul.f32 %v4465, 0.5
        %v4498 = vmul.f32 %v4466, 0.5
        %v4499 = vmul.f32 %v4467, 0.5
        %v4500 = vmul.f32 %v4468, 0.5
        %v4501 = vmul.f32 %v4469, 0.5
        %v4502 = vmul.f32 %v4470, 0.5
        %v4503 = vmul.f32 %v4471, 0.5
        %v4504 = vmul.f32 %v4472, 0.5
        %v4505 = vmul.f32 %v4473, 0.5
        %v4506 = vmul.f32 %v4474, 0.5
        %v4507 = vmul.f32 %v4475, 0.5
        %v4508 = vmul.f32 %v4476, 0.5
        %v4509 = vmul.f32 %v4477, 0.5
        %v4510 = vmul.f32 %v4478, 0.5
        %v4511 = vmul.f32 %v4479, 0.5
        %v4512 = vmul.f32 %v4480, 0.5
        %v4513 = vmul.f32 %v4481, 0.5
        %v4514 = vmul.f32 %v4482, 0.5
        %v4515 = vmul.f32 %v4483, 0.5
        %v4516 = vmul.f32 %v4484, 0.5
        %v4517 = vmul.f32 %v4485, 0.5
        %v4518 = vmul.f32 %v4486, 0.5
        %v4519 = vmul.f32 %v4487, 0.5
        %v4520 = vmul.f32 %v4488, 0.5
        %v4521 = vmul.f32 %v4489, 0.5
        %v4522 = vmul.f32 %v4490, 0.5
        %v4523 = vmul.f32 %v4491, 0.5
        %v4524 = vmul.f32 %v4492, 0.5
        %v4525 = vmul.f32 %v4493, 0.5
        %v4526 = vtanh.pop %v4494
        %v4527 = vtanh.pop %v4495
        %v4528 = vtanh.pop %v4496
        %v4529 = vtanh.pop %v4497
        %v4530 = vtanh.pop %v4498
        %v4531 = vtanh.pop %v4499
        %v4532 = vtanh.pop %v4500
        %v4533 = vtanh.pop %v4501
        %v4534 = vtanh.pop %v4502
        %v4535 = vtanh.pop %v4503
        %v4536 = vtanh.pop %v4504
        %v4537 = vtanh.pop %v4505
        %v4538 = vtanh.pop %v4506
        %v4539 = vtanh.pop %v4507
        %v4540 = vtanh.pop %v4508
        %v4541 = vtanh.pop %v4509
        %v4542 = vtanh.pop %v4510
        %v4543 = vtanh.pop %v4511
        %v4544 = vtanh.pop %v4512
        %v4545 = vtanh.pop %v4513
        %v4546 = vtanh.pop %v4514
        %v4547 = vtanh.pop %v4515
        %v4548 = vtanh.pop %v4516
        %v4549 = vtanh.pop %v4517
        %v4550 = vtanh.pop %v4518
        %v4551 = vtanh.pop %v4519
        %v4552 = vtanh.pop %v4520
        %v4553 = vtanh.pop %v4521
        %v4554 = vtanh.pop %v4522
        %v4555 = vtanh.pop %v4523
        %v4556 = vtanh.pop %v4524
        %v4557 = vtanh.pop %v4525
        %v4558 = vadd.f32 %v4526, 1.0
        %v4559 = vadd.f32 %v4527, 1.0
        %v4560 = vadd.f32 %v4528, 1.0
        %v4561 = vadd.f32 %v4529, 1.0
        %v4562 = vadd.f32 %v4530, 1.0
        %v4563 = vadd.f32 %v4531, 1.0
        %v4564 = vadd.f32 %v4532, 1.0
        %v4565 = vadd.f32 %v4533, 1.0
        %v4566 = vadd.f32 %v4534, 1.0
        %v4567 = vadd.f32 %v4535, 1.0
        %v4568 = vadd.f32 %v4536, 1.0
        %v4569 = vadd.f32 %v4537, 1.0
        %v4570 = vadd.f32 %v4538, 1.0
        %v4571 = vadd.f32 %v4539, 1.0
        %v4572 = vadd.f32 %v4540, 1.0
        %v4573 = vadd.f32 %v4541, 1.0
        %v4574 = vadd.f32 %v4542, 1.0
        %v4575 = vadd.f32 %v4543, 1.0
        %v4576 = vadd.f32 %v4544, 1.0
        %v4577 = vadd.f32 %v4545, 1.0
        %v4578 = vadd.f32 %v4546, 1.0
        %v4579 = vadd.f32 %v4547, 1.0
        %v4580 = vadd.f32 %v4548, 1.0
        %v4581 = vadd.f32 %v4549, 1.0
        %v4582 = vadd.f32 %v4550, 1.0
        %v4583 = vadd.f32 %v4551, 1.0
        %v4584 = vadd.f32 %v4552, 1.0
        %v4585 = vadd.f32 %v4553, 1.0
        %v4586 = vadd.f32 %v4554, 1.0
        %v4587 = vadd.f32 %v4555, 1.0
        %v4588 = vadd.f32 %v4556, 1.0
        %v4589 = vadd.f32 %v4557, 1.0
        %v4590 = vmul.f32 %v4558, 0.5
        %v4591 = vmul.f32 %v4559, 0.5
        %v4592 = vmul.f32 %v4560, 0.5
        %v4593 = vmul.f32 %v4561, 0.5
        %v4594 = vmul.f32 %v4562, 0.5
        %v4595 = vmul.f32 %v4563, 0.5
        %v4596 = vmul.f32 %v4564, 0.5
        %v4597 = vmul.f32 %v4565, 0.5
        %v4598 = vmul.f32 %v4566, 0.5
        %v4599 = vmul.f32 %v4567, 0.5
        %v4600 = vmul.f32 %v4568, 0.5
        %v4601 = vmul.f32 %v4569, 0.5
        %v4602 = vmul.f32 %v4570, 0.5
        %v4603 = vmul.f32 %v4571, 0.5
        %v4604 = vmul.f32 %v4572, 0.5
        %v4605 = vmul.f32 %v4573, 0.5
        %v4606 = vmul.f32 %v4574, 0.5
        %v4607 = vmul.f32 %v4575, 0.5
        %v4608 = vmul.f32 %v4576, 0.5
        %v4609 = vmul.f32 %v4577, 0.5
        %v4610 = vmul.f32 %v4578, 0.5
        %v4611 = vmul.f32 %v4579, 0.5
        %v4612 = vmul.f32 %v4580, 0.5
        %v4613 = vmul.f32 %v4581, 0.5
        %v4614 = vmul.f32 %v4582, 0.5
        %v4615 = vmul.f32 %v4583, 0.5
        %v4616 = vmul.f32 %v4584, 0.5
        %v4617 = vmul.f32 %v4585, 0.5
        %v4618 = vmul.f32 %v4586, 0.5
        %v4619 = vmul.f32 %v4587, 0.5
        %v4620 = vmul.f32 %v4588, 0.5
        %v4621 = vmul.f32 %v4589, 0.5
        %v4622 = vtanh.pop %v4462
        %v4623 = vtanh.pop %v4463
        %v4624 = vtanh.pop %v4464
        %v4625 = vtanh.pop %v4465
        %v4626 = vtanh.pop %v4466
        %v4627 = vtanh.pop %v4467
        %v4628 = vtanh.pop %v4468
        %v4629 = vtanh.pop %v4469
        %v4630 = vtanh.pop %v4470
        %v4631 = vtanh.pop %v4471
        %v4632 = vtanh.pop %v4472
        %v4633 = vtanh.pop %v4473
        %v4634 = vtanh.pop %v4474
        %v4635 = vtanh.pop %v4475
        %v4636 = vtanh.pop %v4476
        %v4637 = vtanh.pop %v4477
        %v4638 = vtanh.pop %v4478
        %v4639 = vtanh.pop %v4479
        %v4640 = vtanh.pop %v4480
        %v4641 = vtanh.pop %v4481
        %v4642 = vtanh.pop %v4482
        %v4643 = vtanh.pop %v4483
        %v4644 = vtanh.pop %v4484
        %v4645 = vtanh.pop %v4485
        %v4646 = vtanh.pop %v4486
        %v4647 = vtanh.pop %v4487
        %v4648 = vtanh.pop %v4488
        %v4649 = vtanh.pop %v4489
        %v4650 = vtanh.pop %v4490
        %v4651 = vtanh.pop %v4491
        %v4652 = vtanh.pop %v4492
        %v4653 = vtanh.pop %v4493
        %v4654 = vld [vmem:[%s280] sm:$0xff]
        %v4655 = vld [vmem:[%s280 + $0x8] sm:$0xff]
        %v4656 = vld [vmem:[%s280 + $0x10] sm:$0xff]
        %v4657 = vld [vmem:[%s280 + $0x18] sm:$0xff]
        %v4658 = vld [vmem:[%s280 + $0x20] sm:$0xff]
        %v4659 = vld [vmem:[%s280 + $0x28] sm:$0xff]
        %v4660 = vld [vmem:[%s280 + $0x30] sm:$0xff]
        %v4661 = vld [vmem:[%s280 + $0x38] sm:$0xff]
        %v4662 = vld [vmem:[%s280 + $0x40] sm:$0xff]
        %v4663 = vld [vmem:[%s280 + $0x48] sm:$0xff]
        %v4664 = vld [vmem:[%s280 + $0x50] sm:$0xff]
        %v4665 = vld [vmem:[%s280 + $0x58] sm:$0xff]
        %v4666 = vld [vmem:[%s280 + $0x60] sm:$0xff]
        %v4667 = vld [vmem:[%s280 + $0x68] sm:$0xff]
        %v4668 = vld [vmem:[%s280 + $0x70] sm:$0xff]
        %v4669 = vld [vmem:[%s280 + $0x78] sm:$0xff]
        %v4670 = vld [vmem:[%s280 + $0x80] sm:$0xff]
        %v4671 = vld [vmem:[%s280 + $0x88] sm:$0xff]
        %v4672 = vld [vmem:[%s280 + $0x90] sm:$0xff]
        %v4673 = vld [vmem:[%s280 + $0x98] sm:$0xff]
        %v4674 = vld [vmem:[%s280 + $0xa0] sm:$0xff]
        %v4675 = vld [vmem:[%s280 + $0xa8] sm:$0xff]
        %v4676 = vld [vmem:[%s280 + $0xb0] sm:$0xff]
        %v4677 = vld [vmem:[%s280 + $0xb8] sm:$0xff]
        %v4678 = vld [vmem:[%s280 + $0xc0] sm:$0xff]
        %v4679 = vld [vmem:[%s280 + $0xc8] sm:$0xff]
        %v4680 = vld [vmem:[%s280 + $0xd0] sm:$0xff]
        %v4681 = vld [vmem:[%s280 + $0xd8] sm:$0xff]
        %v4682 = vld [vmem:[%s280 + $0xe0] sm:$0xff]
        %v4683 = vld [vmem:[%s280 + $0xe8] sm:$0xff]
        %v4684 = vld [vmem:[%s280 + $0xf0] sm:$0xff]
        %v4685 = vld [vmem:[%s280 + $0xf8] sm:$0xff]
        %4718 = vrot.lane.b32.xlu0 %v4654, 32
        %v4719 = vpop.permute.xlu0 %4718
        %4720 = vrot.lane.b32.xlu0 %v4655, 32
        %v4721 = vpop.permute.xlu0 %4720
        %4722 = vrot.lane.b32.xlu0 %v4656, 32
        %v4723 = vpop.permute.xlu0 %4722
        %4724 = vrot.lane.b32.xlu0 %v4657, 32
        %v4725 = vpop.permute.xlu0 %4724
        %4726 = vrot.lane.b32.xlu0 %v4658, 32
        %v4727 = vpop.permute.xlu0 %4726
        %4728 = vrot.lane.b32.xlu0 %v4659, 32
        %v4729 = vpop.permute.xlu0 %4728
        %4730 = vrot.lane.b32.xlu0 %v4660, 32
        %v4731 = vpop.permute.xlu0 %4730
        %4732 = vrot.lane.b32.xlu0 %v4661, 32
        %v4733 = vpop.permute.xlu0 %4732
        %4734 = vrot.lane.b32.xlu0 %v4662, 32
        %v4735 = vpop.permute.xlu0 %4734
        %4736 = vrot.lane.b32.xlu0 %v4663, 32
        %v4737 = vpop.permute.xlu0 %4736
        %4738 = vrot.lane.b32.xlu0 %v4664, 32
        %v4739 = vpop.permute.xlu0 %4738
        %4740 = vrot.lane.b32.xlu0 %v4665, 32
        %v4741 = vpop.permute.xlu0 %4740
        %4742 = vrot.lane.b32.xlu0 %v4666, 32
        %v4743 = vpop.permute.xlu0 %4742
        %4744 = vrot.lane.b32.xlu0 %v4667, 32
        %v4745 = vpop.permute.xlu0 %4744
        %4746 = vrot.lane.b32.xlu0 %v4668, 32
        %v4747 = vpop.permute.xlu0 %4746
        %4748 = vrot.lane.b32.xlu0 %v4669, 32
        %v4749 = vpop.permute.xlu0 %4748
        %4750 = vrot.lane.b32.xlu0 %v4670, 32
        %v4751 = vpop.permute.xlu0 %4750
        %4752 = vrot.lane.b32.xlu0 %v4671, 32
        %v4753 = vpop.permute.xlu0 %4752
        %4754 = vrot.lane.b32.xlu0 %v4672, 32
        %v4755 = vpop.permute.xlu0 %4754
        %4756 = vrot.lane.b32.xlu0 %v4673, 32
        %v4757 = vpop.permute.xlu0 %4756
        %4758 = vrot.lane.b32.xlu0 %v4674, 32
        %v4759 = vpop.permute.xlu0 %4758
        %4760 = vrot.lane.b32.xlu0 %v4675, 32
        %v4761 = vpop.permute.xlu0 %4760
        %4762 = vrot.lane.b32.xlu0 %v4676, 32
        %v4763 = vpop.permute.xlu0 %4762
        %4764 = vrot.lane.b32.xlu0 %v4677, 32
        %v4765 = vpop.permute.xlu0 %4764
        %4766 = vrot.lane.b32.xlu0 %v4678, 32
        %v4767 = vpop.permute.xlu0 %4766
        %4768 = vrot.lane.b32.xlu0 %v4679, 32
        %v4769 = vpop.permute.xlu0 %4768
        %4770 = vrot.lane.b32.xlu0 %v4680, 32
        %v4771 = vpop.permute.xlu0 %4770
        %4772 = vrot.lane.b32.xlu0 %v4681, 32
        %v4773 = vpop.permute.xlu0 %4772
        %4774 = vrot.lane.b32.xlu0 %v4682, 32
        %v4775 = vpop.permute.xlu0 %4774
        %4776 = vrot.lane.b32.xlu0 %v4683, 32
        %v4777 = vpop.permute.xlu0 %4776
        %4778 = vrot.lane.b32.xlu0 %v4684, 32
        %v4779 = vpop.permute.xlu0 %4778
        %4780 = vrot.lane.b32.xlu0 %v4685, 32
        %v4781 = vpop.permute.xlu0 %4780
        %v4814 = vmul.f32 %v4590, %v4719
        %v4815 = vmul.f32 %v4591, %v4721
        %v4816 = vmul.f32 %v4592, %v4723
        %v4817 = vmul.f32 %v4593, %v4725
        %v4818 = vmul.f32 %v4594, %v4727
        %v4819 = vmul.f32 %v4595, %v4729
        %v4820 = vmul.f32 %v4596, %v4731
        %v4821 = vmul.f32 %v4597, %v4733
        %v4822 = vmul.f32 %v4598, %v4735
        %v4823 = vmul.f32 %v4599, %v4737
        %v4824 = vmul.f32 %v4600, %v4739
        %v4825 = vmul.f32 %v4601, %v4741
        %v4826 = vmul.f32 %v4602, %v4743
        %v4827 = vmul.f32 %v4603, %v4745
        %v4828 = vmul.f32 %v4604, %v4747
        %v4829 = vmul.f32 %v4605, %v4749
        %v4830 = vmul.f32 %v4606, %v4751
        %v4831 = vmul.f32 %v4607, %v4753
        %v4832 = vmul.f32 %v4608, %v4755
        %v4833 = vmul.f32 %v4609, %v4757
        %v4834 = vmul.f32 %v4610, %v4759
        %v4835 = vmul.f32 %v4611, %v4761
        %v4836 = vmul.f32 %v4612, %v4763
        %v4837 = vmul.f32 %v4613, %v4765
        %v4838 = vmul.f32 %v4614, %v4767
        %v4839 = vmul.f32 %v4615, %v4769
        %v4840 = vmul.f32 %v4616, %v4771
        %v4841 = vmul.f32 %v4617, %v4773
        %v4842 = vmul.f32 %v4618, %v4775
        %v4843 = vmul.f32 %v4619, %v4777
        %v4844 = vmul.f32 %v4620, %v4779
        %v4845 = vmul.f32 %v4621, %v4781
        %4878 = vrot.lane.b32.xlu0 %v4622, 32
        %v4879 = vpop.permute.xlu0 %4878
        %4880 = vrot.lane.b32.xlu0 %v4623, 32
        %v4881 = vpop.permute.xlu0 %4880
        %4882 = vrot.lane.b32.xlu0 %v4624, 32
        %v4883 = vpop.permute.xlu0 %4882
        %4884 = vrot.lane.b32.xlu0 %v4625, 32
        %v4885 = vpop.permute.xlu0 %4884
        %4886 = vrot.lane.b32.xlu0 %v4626, 32
        %v4887 = vpop.permute.xlu0 %4886
        %4888 = vrot.lane.b32.xlu0 %v4627, 32
        %v4889 = vpop.permute.xlu0 %4888
        %4890 = vrot.lane.b32.xlu0 %v4628, 32
        %v4891 = vpop.permute.xlu0 %4890
        %4892 = vrot.lane.b32.xlu0 %v4629, 32
        %v4893 = vpop.permute.xlu0 %4892
        %4894 = vrot.lane.b32.xlu0 %v4630, 32
        %v4895 = vpop.permute.xlu0 %4894
        %4896 = vrot.lane.b32.xlu0 %v4631, 32
        %v4897 = vpop.permute.xlu0 %4896
        %4898 = vrot.lane.b32.xlu0 %v4632, 32
        %v4899 = vpop.permute.xlu0 %4898
        %4900 = vrot.lane.b32.xlu0 %v4633, 32
        %v4901 = vpop.permute.xlu0 %4900
        %4902 = vrot.lane.b32.xlu0 %v4634, 32
        %v4903 = vpop.permute.xlu0 %4902
        %4904 = vrot.lane.b32.xlu0 %v4635, 32
        %v4905 = vpop.permute.xlu0 %4904
        %4906 = vrot.lane.b32.xlu0 %v4636, 32
        %v4907 = vpop.permute.xlu0 %4906
        %4908 = vrot.lane.b32.xlu0 %v4637, 32
        %v4909 = vpop.permute.xlu0 %4908
        %4910 = vrot.lane.b32.xlu0 %v4638, 32
        %v4911 = vpop.permute.xlu0 %4910
        %4912 = vrot.lane.b32.xlu0 %v4639, 32
        %v4913 = vpop.permute.xlu0 %4912
        %4914 = vrot.lane.b32.xlu0 %v4640, 32
        %v4915 = vpop.permute.xlu0 %4914
        %4916 = vrot.lane.b32.xlu0 %v4641, 32
        %v4917 = vpop.permute.xlu0 %4916
        %4918 = vrot.lane.b32.xlu0 %v4642, 32
        %v4919 = vpop.permute.xlu0 %4918
        %4920 = vrot.lane.b32.xlu0 %v4643, 32
        %v4921 = vpop.permute.xlu0 %4920
        %4922 = vrot.lane.b32.xlu0 %v4644, 32
        %v4923 = vpop.permute.xlu0 %4922
        %4924 = vrot.lane.b32.xlu0 %v4645, 32
        %v4925 = vpop.permute.xlu0 %4924
        %4926 = vrot.lane.b32.xlu0 %v4646, 32
        %v4927 = vpop.permute.xlu0 %4926
        %4928 = vrot.lane.b32.xlu0 %v4647, 32
        %v4929 = vpop.permute.xlu0 %4928
        %4930 = vrot.lane.b32.xlu0 %v4648, 32
        %v4931 = vpop.permute.xlu0 %4930
        %4932 = vrot.lane.b32.xlu0 %v4649, 32
        %v4933 = vpop.permute.xlu0 %4932
        %4934 = vrot.lane.b32.xlu0 %v4650, 32
        %v4935 = vpop.permute.xlu0 %4934
        %4936 = vrot.lane.b32.xlu0 %v4651, 32
        %v4937 = vpop.permute.xlu0 %4936
        %4938 = vrot.lane.b32.xlu0 %v4652, 32
        %v4939 = vpop.permute.xlu0 %4938
        %4940 = vrot.lane.b32.xlu0 %v4653, 32
        %v4941 = vpop.permute.xlu0 %4940
        %v4974 = vmul.f32 %v4590, %v4879
        %v4975 = vmul.f32 %v4591, %v4881
        %v4976 = vmul.f32 %v4592, %v4883
        %v4977 = vmul.f32 %v4593, %v4885
        %v4978 = vmul.f32 %v4594, %v4887
        %v4979 = vmul.f32 %v4595, %v4889
        %v4980 = vmul.f32 %v4596, %v4891
        %v4981 = vmul.f32 %v4597, %v4893
        %v4982 = vmul.f32 %v4598, %v4895
        %v4983 = vmul.f32 %v4599, %v4897
        %v4984 = vmul.f32 %v4600, %v4899
        %v4985 = vmul.f32 %v4601, %v4901
        %v4986 = vmul.f32 %v4602, %v4903
        %v4987 = vmul.f32 %v4603, %v4905
        %v4988 = vmul.f32 %v4604, %v4907
        %v4989 = vmul.f32 %v4605, %v4909
        %v4990 = vmul.f32 %v4606, %v4911
        %v4991 = vmul.f32 %v4607, %v4913
        %v4992 = vmul.f32 %v4608, %v4915
        %v4993 = vmul.f32 %v4609, %v4917
        %v4994 = vmul.f32 %v4610, %v4919
        %v4995 = vmul.f32 %v4611, %v4921
        %v4996 = vmul.f32 %v4612, %v4923
        %v4997 = vmul.f32 %v4613, %v4925
        %v4998 = vmul.f32 %v4614, %v4927
        %v4999 = vmul.f32 %v4615, %v4929
        %v5000 = vmul.f32 %v4616, %v4931
        %v5001 = vmul.f32 %v4617, %v4933
        %v5002 = vmul.f32 %v4618, %v4935
        %v5003 = vmul.f32 %v4619, %v4937
        %v5004 = vmul.f32 %v4620, %v4939
        %v5005 = vmul.f32 %v4621, %v4941
        %5038 = vrot.lane.b32.xlu0 %v4974, 32
        %v5039 = vpop.permute.xlu0 %5038
        %5040 = vrot.lane.b32.xlu0 %v4975, 32
        %v5041 = vpop.permute.xlu0 %5040
        %5042 = vrot.lane.b32.xlu0 %v4976, 32
        %v5043 = vpop.permute.xlu0 %5042
        %5044 = vrot.lane.b32.xlu0 %v4977, 32
        %v5045 = vpop.permute.xlu0 %5044
        %5046 = vrot.lane.b32.xlu0 %v4978, 32
        %v5047 = vpop.permute.xlu0 %5046
        %5048 = vrot.lane.b32.xlu0 %v4979, 32
        %v5049 = vpop.permute.xlu0 %5048
        %5050 = vrot.lane.b32.xlu0 %v4980, 32
        %v5051 = vpop.permute.xlu0 %5050
        %5052 = vrot.lane.b32.xlu0 %v4981, 32
        %v5053 = vpop.permute.xlu0 %5052
        %5054 = vrot.lane.b32.xlu0 %v4982, 32
        %v5055 = vpop.permute.xlu0 %5054
        %5056 = vrot.lane.b32.xlu0 %v4983, 32
        %v5057 = vpop.permute.xlu0 %5056
        %5058 = vrot.lane.b32.xlu0 %v4984, 32
        %v5059 = vpop.permute.xlu0 %5058
        %5060 = vrot.lane.b32.xlu0 %v4985, 32
        %v5061 = vpop.permute.xlu0 %5060
        %5062 = vrot.lane.b32.xlu0 %v4986, 32
        %v5063 = vpop.permute.xlu0 %5062
        %5064 = vrot.lane.b32.xlu0 %v4987, 32
        %v5065 = vpop.permute.xlu0 %5064
        %5066 = vrot.lane.b32.xlu0 %v4988, 32
        %v5067 = vpop.permute.xlu0 %5066
        %5068 = vrot.lane.b32.xlu0 %v4989, 32
        %v5069 = vpop.permute.xlu0 %5068
        %5070 = vrot.lane.b32.xlu0 %v4990, 32
        %v5071 = vpop.permute.xlu0 %5070
        %5072 = vrot.lane.b32.xlu0 %v4991, 32
        %v5073 = vpop.permute.xlu0 %5072
        %5074 = vrot.lane.b32.xlu0 %v4992, 32
        %v5075 = vpop.permute.xlu0 %5074
        %5076 = vrot.lane.b32.xlu0 %v4993, 32
        %v5077 = vpop.permute.xlu0 %5076
        %5078 = vrot.lane.b32.xlu0 %v4994, 32
        %v5079 = vpop.permute.xlu0 %5078
        %5080 = vrot.lane.b32.xlu0 %v4995, 32
        %v5081 = vpop.permute.xlu0 %5080
        %5082 = vrot.lane.b32.xlu0 %v4996, 32
        %v5083 = vpop.permute.xlu0 %5082
        %5084 = vrot.lane.b32.xlu0 %v4997, 32
        %v5085 = vpop.permute.xlu0 %5084
        %5086 = vrot.lane.b32.xlu0 %v4998, 32
        %v5087 = vpop.permute.xlu0 %5086
        %5088 = vrot.lane.b32.xlu0 %v4999, 32
        %v5089 = vpop.permute.xlu0 %5088
        %5090 = vrot.lane.b32.xlu0 %v5000, 32
        %v5091 = vpop.permute.xlu0 %5090
        %5092 = vrot.lane.b32.xlu0 %v5001, 32
        %v5093 = vpop.permute.xlu0 %5092
        %5094 = vrot.lane.b32.xlu0 %v5002, 32
        %v5095 = vpop.permute.xlu0 %5094
        %5096 = vrot.lane.b32.xlu0 %v5003, 32
        %v5097 = vpop.permute.xlu0 %5096
        %5098 = vrot.lane.b32.xlu0 %v5004, 32
        %v5099 = vpop.permute.xlu0 %5098
        %5100 = vrot.lane.b32.xlu0 %v5005, 32
        %v5101 = vpop.permute.xlu0 %5100
        %v5134 = vadd.f32 %v4814, %v5039
        %v5135 = vadd.f32 %v4815, %v5041
        %v5136 = vadd.f32 %v4816, %v5043
        %v5137 = vadd.f32 %v4817, %v5045
        %v5138 = vadd.f32 %v4818, %v5047
        %v5139 = vadd.f32 %v4819, %v5049
        %v5140 = vadd.f32 %v4820, %v5051
        %v5141 = vadd.f32 %v4821, %v5053
        %v5142 = vadd.f32 %v4822, %v5055
        %v5143 = vadd.f32 %v4823, %v5057
        %v5144 = vadd.f32 %v4824, %v5059
        %v5145 = vadd.f32 %v4825, %v5061
        %v5146 = vadd.f32 %v4826, %v5063
        %v5147 = vadd.f32 %v4827, %v5065
        %v5148 = vadd.f32 %v4828, %v5067
        %v5149 = vadd.f32 %v4829, %v5069
        %v5150 = vadd.f32 %v4830, %v5071
        %v5151 = vadd.f32 %v4831, %v5073
        %v5152 = vadd.f32 %v4832, %v5075
        %v5153 = vadd.f32 %v4833, %v5077
        %v5154 = vadd.f32 %v4834, %v5079
        %v5155 = vadd.f32 %v4835, %v5081
        %v5156 = vadd.f32 %v4836, %v5083
        %v5157 = vadd.f32 %v4837, %v5085
        %v5158 = vadd.f32 %v4838, %v5087
        %v5159 = vadd.f32 %v4839, %v5089
        %v5160 = vadd.f32 %v4840, %v5091
        %v5161 = vadd.f32 %v4841, %v5093
        %v5162 = vadd.f32 %v4842, %v5095
        %v5163 = vadd.f32 %v4843, %v5097
        %v5164 = vadd.f32 %v4844, %v5099
        %v5165 = vadd.f32 %v4845, %v5101
        %v5166 = vtanh.pop %v5134
        %v5167 = vtanh.pop %v5135
        %v5168 = vtanh.pop %v5136
        %v5169 = vtanh.pop %v5137
        %v5170 = vtanh.pop %v5138
        %v5171 = vtanh.pop %v5139
        %v5172 = vtanh.pop %v5140
        %v5173 = vtanh.pop %v5141
        %v5174 = vtanh.pop %v5142
        %v5175 = vtanh.pop %v5143
        %v5176 = vtanh.pop %v5144
        %v5177 = vtanh.pop %v5145
        %v5178 = vtanh.pop %v5146
        %v5179 = vtanh.pop %v5147
        %v5180 = vtanh.pop %v5148
        %v5181 = vtanh.pop %v5149
        %v5182 = vtanh.pop %v5150
        %v5183 = vtanh.pop %v5151
        %v5184 = vtanh.pop %v5152
        %v5185 = vtanh.pop %v5153
        %v5186 = vtanh.pop %v5154
        %v5187 = vtanh.pop %v5155
        %v5188 = vtanh.pop %v5156
        %v5189 = vtanh.pop %v5157
        %v5190 = vtanh.pop %v5158
        %v5191 = vtanh.pop %v5159
        %v5192 = vtanh.pop %v5160
        %v5193 = vtanh.pop %v5161
        %v5194 = vtanh.pop %v5162
        %v5195 = vtanh.pop %v5163
        %v5196 = vtanh.pop %v5164
        %v5197 = vtanh.pop %v5165
        %5230 = vrot.lane.b32.xlu0 %v5166, 32
        %v5231 = vpop.permute.xlu0 %5230
        %5232 = vrot.lane.b32.xlu0 %v5167, 32
        %v5233 = vpop.permute.xlu0 %5232
        %5234 = vrot.lane.b32.xlu0 %v5168, 32
        %v5235 = vpop.permute.xlu0 %5234
        %5236 = vrot.lane.b32.xlu0 %v5169, 32
        %v5237 = vpop.permute.xlu0 %5236
        %5238 = vrot.lane.b32.xlu0 %v5170, 32
        %v5239 = vpop.permute.xlu0 %5238
        %5240 = vrot.lane.b32.xlu0 %v5171, 32
        %v5241 = vpop.permute.xlu0 %5240
        %5242 = vrot.lane.b32.xlu0 %v5172, 32
        %v5243 = vpop.permute.xlu0 %5242
        %5244 = vrot.lane.b32.xlu0 %v5173, 32
        %v5245 = vpop.permute.xlu0 %5244
        %5246 = vrot.lane.b32.xlu0 %v5174, 32
        %v5247 = vpop.permute.xlu0 %5246
        %5248 = vrot.lane.b32.xlu0 %v5175, 32
        %v5249 = vpop.permute.xlu0 %5248
        %5250 = vrot.lane.b32.xlu0 %v5176, 32
        %v5251 = vpop.permute.xlu0 %5250
        %5252 = vrot.lane.b32.xlu0 %v5177, 32
        %v5253 = vpop.permute.xlu0 %5252
        %5254 = vrot.lane.b32.xlu0 %v5178, 32
        %v5255 = vpop.permute.xlu0 %5254
        %5256 = vrot.lane.b32.xlu0 %v5179, 32
        %v5257 = vpop.permute.xlu0 %5256
        %5258 = vrot.lane.b32.xlu0 %v5180, 32
        %v5259 = vpop.permute.xlu0 %5258
        %5260 = vrot.lane.b32.xlu0 %v5181, 32
        %v5261 = vpop.permute.xlu0 %5260
        %5262 = vrot.lane.b32.xlu0 %v5182, 32
        %v5263 = vpop.permute.xlu0 %5262
        %5264 = vrot.lane.b32.xlu0 %v5183, 32
        %v5265 = vpop.permute.xlu0 %5264
        %5266 = vrot.lane.b32.xlu0 %v5184, 32
        %v5267 = vpop.permute.xlu0 %5266
        %5268 = vrot.lane.b32.xlu0 %v5185, 32
        %v5269 = vpop.permute.xlu0 %5268
        %5270 = vrot.lane.b32.xlu0 %v5186, 32
        %v5271 = vpop.permute.xlu0 %5270
        %5272 = vrot.lane.b32.xlu0 %v5187, 32
        %v5273 = vpop.permute.xlu0 %5272
        %5274 = vrot.lane.b32.xlu0 %v5188, 32
        %v5275 = vpop.permute.xlu0 %5274
        %5276 = vrot.lane.b32.xlu0 %v5189, 32
        %v5277 = vpop.permute.xlu0 %5276
        %5278 = vrot.lane.b32.xlu0 %v5190, 32
        %v5279 = vpop.permute.xlu0 %5278
        %5280 = vrot.lane.b32.xlu0 %v5191, 32
        %v5281 = vpop.permute.xlu0 %5280
        %5282 = vrot.lane.b32.xlu0 %v5192, 32
        %v5283 = vpop.permute.xlu0 %5282
        %5284 = vrot.lane.b32.xlu0 %v5193, 32
        %v5285 = vpop.permute.xlu0 %5284
        %5286 = vrot.lane.b32.xlu0 %v5194, 32
        %v5287 = vpop.permute.xlu0 %5286
        %5288 = vrot.lane.b32.xlu0 %v5195, 32
        %v5289 = vpop.permute.xlu0 %5288
        %5290 = vrot.lane.b32.xlu0 %v5196, 32
        %v5291 = vpop.permute.xlu0 %5290
        %5292 = vrot.lane.b32.xlu0 %v5197, 32
        %v5293 = vpop.permute.xlu0 %5292
        %v5326 = vmul.f32 %v4590, %v5231
        %v5327 = vmul.f32 %v4591, %v5233
        %v5328 = vmul.f32 %v4592, %v5235
        %v5329 = vmul.f32 %v4593, %v5237
        %v5330 = vmul.f32 %v4594, %v5239
        %v5331 = vmul.f32 %v4595, %v5241
        %v5332 = vmul.f32 %v4596, %v5243
        %v5333 = vmul.f32 %v4597, %v5245
        %v5334 = vmul.f32 %v4598, %v5247
        %v5335 = vmul.f32 %v4599, %v5249
        %v5336 = vmul.f32 %v4600, %v5251
        %v5337 = vmul.f32 %v4601, %v5253
        %v5338 = vmul.f32 %v4602, %v5255
        %v5339 = vmul.f32 %v4603, %v5257
        %v5340 = vmul.f32 %v4604, %v5259
        %v5341 = vmul.f32 %v4605, %v5261
        %v5342 = vmul.f32 %v4606, %v5263
        %v5343 = vmul.f32 %v4607, %v5265
        %v5344 = vmul.f32 %v4608, %v5267
        %v5345 = vmul.f32 %v4609, %v5269
        %v5346 = vmul.f32 %v4610, %v5271
        %v5347 = vmul.f32 %v4611, %v5273
        %v5348 = vmul.f32 %v4612, %v5275
        %v5349 = vmul.f32 %v4613, %v5277
        %v5350 = vmul.f32 %v4614, %v5279
        %v5351 = vmul.f32 %v4615, %v5281
        %v5352 = vmul.f32 %v4616, %v5283
        %v5353 = vmul.f32 %v4617, %v5285
        %v5354 = vmul.f32 %v4618, %v5287
        %v5355 = vmul.f32 %v4619, %v5289
        %v5356 = vmul.f32 %v4620, %v5291
        %v5357 = vmul.f32 %v4621, %v5293
        %5390 = vrot.lane.b32.xlu0 %v5326, 64
        %v5391 = vpop.permute.xlu0 %5390
        %5392 = vrot.lane.b32.xlu0 %v5327, 64
        %v5393 = vpop.permute.xlu0 %5392
        %5394 = vrot.lane.b32.xlu0 %v5328, 64
        %v5395 = vpop.permute.xlu0 %5394
        %5396 = vrot.lane.b32.xlu0 %v5329, 64
        %v5397 = vpop.permute.xlu0 %5396
        %5398 = vrot.lane.b32.xlu0 %v5330, 64
        %v5399 = vpop.permute.xlu0 %5398
        %5400 = vrot.lane.b32.xlu0 %v5331, 64
        %v5401 = vpop.permute.xlu0 %5400
        %5402 = vrot.lane.b32.xlu0 %v5332, 64
        %v5403 = vpop.permute.xlu0 %5402
        %5404 = vrot.lane.b32.xlu0 %v5333, 64
        %v5405 = vpop.permute.xlu0 %5404
        %5406 = vrot.lane.b32.xlu0 %v5334, 64
        %v5407 = vpop.permute.xlu0 %5406
        %5408 = vrot.lane.b32.xlu0 %v5335, 64
        %v5409 = vpop.permute.xlu0 %5408
        %5410 = vrot.lane.b32.xlu0 %v5336, 64
        %v5411 = vpop.permute.xlu0 %5410
        %5412 = vrot.lane.b32.xlu0 %v5337, 64
        %v5413 = vpop.permute.xlu0 %5412
        %5414 = vrot.lane.b32.xlu0 %v5338, 64
        %v5415 = vpop.permute.xlu0 %5414
        %5416 = vrot.lane.b32.xlu0 %v5339, 64
        %v5417 = vpop.permute.xlu0 %5416
        %5418 = vrot.lane.b32.xlu0 %v5340, 64
        %v5419 = vpop.permute.xlu0 %5418
        %5420 = vrot.lane.b32.xlu0 %v5341, 64
        %v5421 = vpop.permute.xlu0 %5420
        %5422 = vrot.lane.b32.xlu0 %v5342, 64
        %v5423 = vpop.permute.xlu0 %5422
        %5424 = vrot.lane.b32.xlu0 %v5343, 64
        %v5425 = vpop.permute.xlu0 %5424
        %5426 = vrot.lane.b32.xlu0 %v5344, 64
        %v5427 = vpop.permute.xlu0 %5426
        %5428 = vrot.lane.b32.xlu0 %v5345, 64
        %v5429 = vpop.permute.xlu0 %5428
        %5430 = vrot.lane.b32.xlu0 %v5346, 64
        %v5431 = vpop.permute.xlu0 %5430
        %5432 = vrot.lane.b32.xlu0 %v5347, 64
        %v5433 = vpop.permute.xlu0 %5432
        %5434 = vrot.lane.b32.xlu0 %v5348, 64
        %v5435 = vpop.permute.xlu0 %5434
        %5436 = vrot.lane.b32.xlu0 %v5349, 64
        %v5437 = vpop.permute.xlu0 %5436
        %5438 = vrot.lane.b32.xlu0 %v5350, 64
        %v5439 = vpop.permute.xlu0 %5438
        %5440 = vrot.lane.b32.xlu0 %v5351, 64
        %v5441 = vpop.permute.xlu0 %5440
        %5442 = vrot.lane.b32.xlu0 %v5352, 64
        %v5443 = vpop.permute.xlu0 %5442
        %5444 = vrot.lane.b32.xlu0 %v5353, 64
        %v5445 = vpop.permute.xlu0 %5444
        %5446 = vrot.lane.b32.xlu0 %v5354, 64
        %v5447 = vpop.permute.xlu0 %5446
        %5448 = vrot.lane.b32.xlu0 %v5355, 64
        %v5449 = vpop.permute.xlu0 %5448
        %5450 = vrot.lane.b32.xlu0 %v5356, 64
        %v5451 = vpop.permute.xlu0 %5450
        %5452 = vrot.lane.b32.xlu0 %v5357, 64
        %v5453 = vpop.permute.xlu0 %5452
        %vm5486 = vcmask 261120
        %5487 = vst.msk [vmem:[%s263] sm:$0xff] %vm5486, %v5391
        %5488 = vst.msk [vmem:[%s263 + $0x8] sm:$0xff] %vm5486, %v5393
        %5489 = vst.msk [vmem:[%s263 + $0x10] sm:$0xff] %vm5486, %v5395
        %5490 = vst.msk [vmem:[%s263 + $0x18] sm:$0xff] %vm5486, %v5397
        %5491 = vst.msk [vmem:[%s263 + $0x20] sm:$0xff] %vm5486, %v5399
        %5492 = vst.msk [vmem:[%s263 + $0x28] sm:$0xff] %vm5486, %v5401
        %5493 = vst.msk [vmem:[%s263 + $0x30] sm:$0xff] %vm5486, %v5403
        %5494 = vst.msk [vmem:[%s263 + $0x38] sm:$0xff] %vm5486, %v5405
        %5495 = vst.msk [vmem:[%s263 + $0x40] sm:$0xff] %vm5486, %v5407
        %5496 = vst.msk [vmem:[%s263 + $0x48] sm:$0xff] %vm5486, %v5409
        %5497 = vst.msk [vmem:[%s263 + $0x50] sm:$0xff] %vm5486, %v5411
        %5498 = vst.msk [vmem:[%s263 + $0x58] sm:$0xff] %vm5486, %v5413
        %5499 = vst.msk [vmem:[%s263 + $0x60] sm:$0xff] %vm5486, %v5415
        %5500 = vst.msk [vmem:[%s263 + $0x68] sm:$0xff] %vm5486, %v5417
        %5501 = vst.msk [vmem:[%s263 + $0x70] sm:$0xff] %vm5486, %v5419
        %5502 = vst.msk [vmem:[%s263 + $0x78] sm:$0xff] %vm5486, %v5421
        %5503 = vst.msk [vmem:[%s263 + $0x80] sm:$0xff] %vm5486, %v5423
        %5504 = vst.msk [vmem:[%s263 + $0x88] sm:$0xff] %vm5486, %v5425
        %5505 = vst.msk [vmem:[%s263 + $0x90] sm:$0xff] %vm5486, %v5427
        %5506 = vst.msk [vmem:[%s263 + $0x98] sm:$0xff] %vm5486, %v5429
        %5507 = vst.msk [vmem:[%s263 + $0xa0] sm:$0xff] %vm5486, %v5431
        %5508 = vst.msk [vmem:[%s263 + $0xa8] sm:$0xff] %vm5486, %v5433
        %5509 = vst.msk [vmem:[%s263 + $0xb0] sm:$0xff] %vm5486, %v5435
        %5510 = vst.msk [vmem:[%s263 + $0xb8] sm:$0xff] %vm5486, %v5437
        %5511 = vst.msk [vmem:[%s263 + $0xc0] sm:$0xff] %vm5486, %v5439
        %5512 = vst.msk [vmem:[%s263 + $0xc8] sm:$0xff] %vm5486, %v5441
        %5513 = vst.msk [vmem:[%s263 + $0xd0] sm:$0xff] %vm5486, %v5443
        %5514 = vst.msk [vmem:[%s263 + $0xd8] sm:$0xff] %vm5486, %v5445
        %5515 = vst.msk [vmem:[%s263 + $0xe0] sm:$0xff] %vm5486, %v5447
        %5516 = vst.msk [vmem:[%s263 + $0xe8] sm:$0xff] %vm5486, %v5449
        %5517 = vst.msk [vmem:[%s263 + $0xf0] sm:$0xff] %vm5486, %v5451
        %5518 = vst.msk [vmem:[%s263 + $0xf8] sm:$0xff] %vm5486, %v5453
        %5551 = vrot.lane.b32.xlu0 %v5134, 96
        %v5552 = vpop.permute.xlu0 %5551
        %5553 = vrot.lane.b32.xlu0 %v5135, 96
        %v5554 = vpop.permute.xlu0 %5553
        %5555 = vrot.lane.b32.xlu0 %v5136, 96
        %v5556 = vpop.permute.xlu0 %5555
        %5557 = vrot.lane.b32.xlu0 %v5137, 96
        %v5558 = vpop.permute.xlu0 %5557
        %5559 = vrot.lane.b32.xlu0 %v5138, 96
        %v5560 = vpop.permute.xlu0 %5559
        %5561 = vrot.lane.b32.xlu0 %v5139, 96
        %v5562 = vpop.permute.xlu0 %5561
        %5563 = vrot.lane.b32.xlu0 %v5140, 96
        %v5564 = vpop.permute.xlu0 %5563
        %5565 = vrot.lane.b32.xlu0 %v5141, 96
        %v5566 = vpop.permute.xlu0 %5565
        %5567 = vrot.lane.b32.xlu0 %v5142, 96
        %v5568 = vpop.permute.xlu0 %5567
        %5569 = vrot.lane.b32.xlu0 %v5143, 96
        %v5570 = vpop.permute.xlu0 %5569
        %5571 = vrot.lane.b32.xlu0 %v5144, 96
        %v5572 = vpop.permute.xlu0 %5571
        %5573 = vrot.lane.b32.xlu0 %v5145, 96
        %v5574 = vpop.permute.xlu0 %5573
        %5575 = vrot.lane.b32.xlu0 %v5146, 96
        %v5576 = vpop.permute.xlu0 %5575
        %5577 = vrot.lane.b32.xlu0 %v5147, 96
        %v5578 = vpop.permute.xlu0 %5577
        %5579 = vrot.lane.b32.xlu0 %v5148, 96
        %v5580 = vpop.permute.xlu0 %5579
        %5581 = vrot.lane.b32.xlu0 %v5149, 96
        %v5582 = vpop.permute.xlu0 %5581
        %5583 = vrot.lane.b32.xlu0 %v5150, 96
        %v5584 = vpop.permute.xlu0 %5583
        %5585 = vrot.lane.b32.xlu0 %v5151, 96
        %v5586 = vpop.permute.xlu0 %5585
        %5587 = vrot.lane.b32.xlu0 %v5152, 96
        %v5588 = vpop.permute.xlu0 %5587
        %5589 = vrot.lane.b32.xlu0 %v5153, 96
        %v5590 = vpop.permute.xlu0 %5589
        %5591 = vrot.lane.b32.xlu0 %v5154, 96
        %v5592 = vpop.permute.xlu0 %5591
        %5593 = vrot.lane.b32.xlu0 %v5155, 96
        %v5594 = vpop.permute.xlu0 %5593
        %5595 = vrot.lane.b32.xlu0 %v5156, 96
        %v5596 = vpop.permute.xlu0 %5595
        %5597 = vrot.lane.b32.xlu0 %v5157, 96
        %v5598 = vpop.permute.xlu0 %5597
        %5599 = vrot.lane.b32.xlu0 %v5158, 96
        %v5600 = vpop.permute.xlu0 %5599
        %5601 = vrot.lane.b32.xlu0 %v5159, 96
        %v5602 = vpop.permute.xlu0 %5601
        %5603 = vrot.lane.b32.xlu0 %v5160, 96
        %v5604 = vpop.permute.xlu0 %5603
        %5605 = vrot.lane.b32.xlu0 %v5161, 96
        %v5606 = vpop.permute.xlu0 %5605
        %5607 = vrot.lane.b32.xlu0 %v5162, 96
        %v5608 = vpop.permute.xlu0 %5607
        %5609 = vrot.lane.b32.xlu0 %v5163, 96
        %v5610 = vpop.permute.xlu0 %5609
        %5611 = vrot.lane.b32.xlu0 %v5164, 96
        %v5612 = vpop.permute.xlu0 %5611
        %5613 = vrot.lane.b32.xlu0 %v5165, 96
        %v5614 = vpop.permute.xlu0 %5613
        %5647 = vst.msk [vmem:[%s270] sm:$0xff] %vm5486, %v5552
        %5648 = vst.msk [vmem:[%s270 + $0x8] sm:$0xff] %vm5486, %v5554
        %5649 = vst.msk [vmem:[%s270 + $0x10] sm:$0xff] %vm5486, %v5556
        %5650 = vst.msk [vmem:[%s270 + $0x18] sm:$0xff] %vm5486, %v5558
        %5651 = vst.msk [vmem:[%s270 + $0x20] sm:$0xff] %vm5486, %v5560
        %5652 = vst.msk [vmem:[%s270 + $0x28] sm:$0xff] %vm5486, %v5562
        %5653 = vst.msk [vmem:[%s270 + $0x30] sm:$0xff] %vm5486, %v5564
        %5654 = vst.msk [vmem:[%s270 + $0x38] sm:$0xff] %vm5486, %v5566
        %5655 = vst.msk [vmem:[%s270 + $0x40] sm:$0xff] %vm5486, %v5568
        %5656 = vst.msk [vmem:[%s270 + $0x48] sm:$0xff] %vm5486, %v5570
        %5657 = vst.msk [vmem:[%s270 + $0x50] sm:$0xff] %vm5486, %v5572
        %5658 = vst.msk [vmem:[%s270 + $0x58] sm:$0xff] %vm5486, %v5574
        %5659 = vst.msk [vmem:[%s270 + $0x60] sm:$0xff] %vm5486, %v5576
        %5660 = vst.msk [vmem:[%s270 + $0x68] sm:$0xff] %vm5486, %v5578
        %5661 = vst.msk [vmem:[%s270 + $0x70] sm:$0xff] %vm5486, %v5580
        %5662 = vst.msk [vmem:[%s270 + $0x78] sm:$0xff] %vm5486, %v5582
        %5663 = vst.msk [vmem:[%s270 + $0x80] sm:$0xff] %vm5486, %v5584
        %5664 = vst.msk [vmem:[%s270 + $0x88] sm:$0xff] %vm5486, %v5586
        %5665 = vst.msk [vmem:[%s270 + $0x90] sm:$0xff] %vm5486, %v5588
        %5666 = vst.msk [vmem:[%s270 + $0x98] sm:$0xff] %vm5486, %v5590
        %5667 = vst.msk [vmem:[%s270 + $0xa0] sm:$0xff] %vm5486, %v5592
        %5668 = vst.msk [vmem:[%s270 + $0xa8] sm:$0xff] %vm5486, %v5594
        %5669 = vst.msk [vmem:[%s270 + $0xb0] sm:$0xff] %vm5486, %v5596
        %5670 = vst.msk [vmem:[%s270 + $0xb8] sm:$0xff] %vm5486, %v5598
        %5671 = vst.msk [vmem:[%s270 + $0xc0] sm:$0xff] %vm5486, %v5600
        %5672 = vst.msk [vmem:[%s270 + $0xc8] sm:$0xff] %vm5486, %v5602
        %5673 = vst.msk [vmem:[%s270 + $0xd0] sm:$0xff] %vm5486, %v5604
        %5674 = vst.msk [vmem:[%s270 + $0xd8] sm:$0xff] %vm5486, %v5606
        %5675 = vst.msk [vmem:[%s270 + $0xe0] sm:$0xff] %vm5486, %v5608
        %5676 = vst.msk [vmem:[%s270 + $0xe8] sm:$0xff] %vm5486, %v5610
        %5677 = vst.msk [vmem:[%s270 + $0xf0] sm:$0xff] %vm5486, %v5612
        %5678 = vst.msk [vmem:[%s270 + $0xf8] sm:$0xff] %vm5486, %v5614
        %s5679 = sand.u32 %s147, 1
        %s5680 = scalar_lea.sflag [#allocation4], %s5679
        %s5681 = sand.u32 %s147, 1
        %s5682 = smul.addr %s5681, 256
        %s5683 = scalar_lea.vmem [#allocation3], %s5682
        %s5684 = sand.u32 %s173, 1
        %s5685 = scalar_lea.sflag [#allocation6], %s5684
        %s5686 = sand.u32 %s173, 1
        %s5687 = smul.addr %s5686, 256
        %s5688 = scalar_lea.vmem [#allocation5], %s5687
        // Predicated region
        $region41: #{conv_lstm_cell.1} parent=39 // pred_check
          %p5689 = pneg %p157
        $region42: #{conv_lstm_cell.1} parent=39 // pred_check_branch
          %5691 = sbr.rel (%p5689) target = $region44
        $region43: #{conv_lstm_cell.1} parent=39 // pred_region
          %s5693 = ssub.s32 4096, 4096
          %5694 = vsyncadd %s5680, %s5693
          %s5695 = smul.addr %s24, 32
          %s5696 = smul.addr %s5695, 128
          %s5697 = scalar_lea.hbm %s5, %s5696
          %s5698 = sshll.u32 %s5683, 4
          %s5699 = int_to_ptr.vmem [resolvable:$true] %s5698
          %5704 = dma.vmem_to_hbm [thread:$0]  %s5699, 4096, %s5697, %s5680, 128, 128, 8
        $region44: #{conv_lstm_cell.1} parent=39 // pred_fallthru
          _
        // Predicated region
        $region45: #{conv_lstm_cell.1} parent=39 // pred_check
          %p5705 = pneg %p183
        $region46: #{conv_lstm_cell.1} parent=39 // pred_check_branch
          %5707 = sbr.rel (%p5705) target = $region48
        $region47: #{conv_lstm_cell.1} parent=39 // pred_region
          %s5709 = ssub.s32 4096, 4096
          %5710 = vsyncadd %s5685, %s5709
          %s5711 = smul.addr %s24, 32
          %s5712 = smul.addr %s5711, 128
          %s5713 = scalar_lea.hbm %s6, %s5712
          %s5714 = sshll.u32 %s5688, 4
          %s5715 = int_to_ptr.vmem [resolvable:$true] %s5714
          %5720 = dma.vmem_to_hbm [thread:$0]  %s5715, 4096, %s5713, %s5685, 128, 128, 8
        $region48: #{conv_lstm_cell.1} parent=39 // pred_fallthru
          _
      $region40: #{conv_lstm_cell.1} parent=5 // pred_fallthru
        _
      %p5721 = scmp.le.s32.totalorder 2, %s19
      // Predicated region
      $region49: #{conv_lstm_cell.1} parent=5 // pred_check
        %p5722 = pneg %p5721
      $region50: #{conv_lstm_cell.1} parent=5 // pred_check_branch
        %5724 = sbr.rel (%p5722) target = $region52
      $region51: #{conv_lstm_cell.1} parent=5 // pred_region
        %s5725 = ssub.s32 %s19, 2
        // Predicated region
        $region53: #{conv_lstm_cell.1} parent=51 // pred_check
          %p5726 = pneg %p163
        $region54: #{conv_lstm_cell.1} parent=51 // pred_check_branch
          %5728 = sbr.rel (%p5726) target = $region56
        $region55: #{conv_lstm_cell.1} parent=51 // pred_region
          %s5729 = sand.u32 %s148, 1
          %s5730 = scalar_lea.sflag [#allocation4], %s5729
          %s5731 = sand.u32 %s148, 1
          %s5732 = smul.addr %s5731, 256
          %s5733 = scalar_lea.vmem [#allocation3], %s5732
          %5734 = dma.done %s5730, 4096
        $region56: #{conv_lstm_cell.1} parent=51 // pred_fallthru
          _
        // Predicated region
        $region57: #{conv_lstm_cell.1} parent=51 // pred_check
          %p5735 = pneg %p189
        $region58: #{conv_lstm_cell.1} parent=51 // pred_check_branch
          %5737 = sbr.rel (%p5735) target = $region60
        $region59: #{conv_lstm_cell.1} parent=51 // pred_region
          %s5738 = sand.u32 %s174, 1
          %s5739 = scalar_lea.sflag [#allocation6], %s5738
          %s5740 = sand.u32 %s174, 1
          %s5741 = smul.addr %s5740, 256
          %s5742 = scalar_lea.vmem [#allocation5], %s5741
          %5743 = dma.done %s5739, 4096
        $region60: #{conv_lstm_cell.1} parent=51 // pred_fallthru
          _
      $region52: #{conv_lstm_cell.1} parent=5 // pred_fallthru
        _
    $region6: #{conv_lstm_cell.1} parent=1 // loop_footer
      %s23 = sadd.s32 1, %s19
    $region7: #{conv_lstm_cell.1} parent=1 // loop_footer_branch
      %18 = sbr.rel target = $region3
    $region8: #{conv_lstm_cell.1} parent=1 // loop_exit
      _
    %5744 = vsyncpa [#allocation4], 1
    %s5745 = scalar_lea.sflag [#allocation4], 1
    %5746 = vsyncpa %s5745, 1
    %5747 = vsyncpa [#allocation6], 1
    %s5748 = scalar_lea.sflag [#allocation6], 1
    %5749 = vsyncpa %s5748, 1

</llo_original>
